<compile_context>
chip_gen: v7x
topology: tpu7x:2x2x1
jax: 0.10.0
libtpu: 0.0.40
codegen_flags: <defaults>
</compile_context>

<pallas_src>
import functools

import jax
import jax.numpy as jnp
from jax.experimental import pallas as pl
from jax.experimental.pallas import tpu as pltpu


def _round_up(x, m):
    return (x + m - 1) // m * m


# ----------------------------------------------------------------------------
# Fused kernel: span mean pooling (candidates + trigger) + cand_mlp, per batch
# tile of Bt elements.
# ----------------------------------------------------------------------------
def _pool_mlp_kernel(start_ref, end_ref, h_ref, w1c_ref, w1t_ref, b1_ref,
                     w2_ref, b2_ref, o_ref, *, c_pad):
    """Fused span-mean-pool + cand_mlp for one tile of Bt batch elements.

    start_ref/end_ref : (Bt, Cp, 1) int32  [start, end) per pooling row; rows
                        [0, C) candidates, row c_pad the trigger, rest padding.
    h_ref   : (Bt, S, H)   bf16   encoder hidden states.
    w1c_ref : (H, 4H)      bf16   rows [0, H)  of cand_mlp Linear-1 weight.
    w1t_ref : (H, 4H)      bf16   rows [H, 2H) of cand_mlp Linear-1 weight.
    b1_ref  : (1, 4H)      f32
    w2_ref  : (4H, H)      bf16
    b2_ref  : (1, H)       f32
    o_ref   : (Bt, c_pad, H) f32
    """
    bt, cp, _ = start_ref.shape
    seq = h_ref.shape[1]
    hdim = h_ref.shape[2]
    h4 = w1c_ref.shape[1]
    n_trig = cp - c_pad              # 8 trigger/padding rows (sublane aligned)

    start = start_ref[...]           # (Bt, Cp, 1) int32
    end = end_ref[...]

    # Span masks on the VPU (hidden under the MXU).  bool -> bf16 keeps the
    # select/pack path short (v5e has no bf16 VALU); 0/1 is exact in bf16, so
    # pool with a mask matmul (f32 accumulator) and rescale by 1/len in f32.
    s_idx = jax.lax.broadcasted_iota(jnp.int32, (bt, cp, seq), 2)
    mask = ((s_idx >= start) & (s_idx < end)).astype(jnp.bfloat16)      # (Bt,Cp,S)
    inv_len = 1.0 / jnp.maximum(end - start, 1).astype(jnp.float32)     # (Bt,Cp,1)

    pooled = jnp.einsum("bcs,bsh->bch", mask, h_ref[...],
                        preferred_element_type=jnp.float32) * inv_len   # (Bt,Cp,H)

    # Precision note: PyTorch runs cand_mlp in f32; bf16 operands + f32
    # accumulation give ~1e-2 relative error — acceptable for eval.
    cand = pooled[:, :c_pad, :].astype(jnp.bfloat16)   # (Bt, Cpad, H), 8-aligned
    trig = pooled[:, c_pad:, :].astype(jnp.bfloat16)   # (Bt, 8, H), trigger = row 0

    # concat([cand, trig_bcast], -1) @ w1 == cand @ w1[:H] + trig @ w1[H:].
    # Candidate rows of all Bt batch elements are stacked into ONE large-M
    # matmul so each (H,4H)/(4H,H) weight stream is reused across Bt batches.
    h1 = jnp.dot(cand.reshape(bt * c_pad, hdim), w1c_ref[...],
                 preferred_element_type=jnp.float32).reshape(bt, c_pad, h4)
    t1 = jnp.dot(trig.reshape(bt * n_trig, hdim), w1t_ref[...],
                 preferred_element_type=jnp.float32).reshape(bt, n_trig, h4)
    h1 = h1 + t1[:, 0:1, :] + b1_ref[...]   # broadcast trigger term over C rows
    h1 = jnp.maximum(h1, 0.0)               # ReLU; Dropout(p=0.4) == Id in eval
    # TODO(synk): training-mode Dropout(0.4) is not implemented (eval only).

    out = jnp.dot(h1.reshape(bt * c_pad, h4).astype(jnp.bfloat16), w2_ref[...],
                  preferred_element_type=jnp.float32).reshape(bt, c_pad, hdim)
    o_ref[...] = (out + b2_ref[...]).astype(o_ref.dtype)


def _vmem_limit_bytes():
    """Explicit scoped-VMEM budget.

    The per-kernel scoped default (16/32/32 MiB on v5e/v6e/v7x) is smaller than
    the resident bf16 MLP weights at real BART/T5 widths, so size the limit
    from the chip's physical VMEM (per TensorCore) with headroom: ~96 MiB on
    v5e/v6e (128 MiB physical), ~48 MiB on v7x (64 MiB physical per core).
    """
    try:
        phys = pltpu.get_tpu_info().vmem_capacity_bytes
    except Exception:
        phys = 64 * 1024 * 1024          # conservative default, fits v7x too
    return int(min(phys * 3 // 4, 100 * 1024 * 1024))


def fused_pool_cand_mlp(hidden_bf16, starts, ends, c_pad, bt,
                        w1c, w1t, b1, w2, b2):
    """hidden_bf16 (Bp,S,H) bf16, starts/ends (Bp,Cp,1) int32 -> (Bp,c_pad,H) f32."""
    Bp, S, H = hidden_bf16.shape
    Cp = starts.shape[1]
    H4 = w1c.shape[1]
    assert Bp % bt == 0
    grid = (Bp // bt,)
    kernel = functools.partial(_pool_mlp_kernel, c_pad=c_pad)
    out_shape = jax.ShapeDtypeStruct((Bp, c_pad, H), jnp.float32)

    def build_and_call(single_buffer_weights):
        def resident(shape):
            # Constant index_map => the weight stays VMEM-resident across the
            # grid; pl.Buffered(1) drops the useless second buffer (~24 MiB
            # saved at H=1024 bf16 — required to fit v7x's 64 MiB VMEM).
            nd = len(shape)
            kwargs = ({"pipeline_mode": pl.Buffered(1)}
                      if single_buffer_weights else {})
            return pl.BlockSpec(shape, lambda i: (0,) * nd, **kwargs)

        # TODO(synk): for very long sequences add an "arbitrary" S grid axis and
        # accumulate pooling into a (Bt,Cp,H) f32 scratch; for H >= 1024 on v7x
        # tile the 4H dim of w1/w2 instead of keeping them fully resident.
        return pl.pallas_call(
            kernel,
            out_shape=out_shape,
            grid=grid,
            in_specs=[
                pl.BlockSpec((bt, Cp, 1), lambda i: (i, 0, 0)),
                pl.BlockSpec((bt, Cp, 1), lambda i: (i, 0, 0)),
                pl.BlockSpec((bt, S, H), lambda i: (i, 0, 0)),
                resident((H, H4)),
                resident((H, H4)),
                resident((1, H4)),
                resident((H4, H)),
                resident((1, H)),
            ],
            out_specs=pl.BlockSpec((bt, c_pad, H), lambda i: (i, 0, 0)),
            compiler_params=pltpu.CompilerParams(
                dimension_semantics=("parallel",),
                vmem_limit_bytes=_vmem_limit_bytes()),
        )(starts, ends, hidden_bf16, w1c, w1t, b1, w2, b2)

    try:
        return build_and_call(True)
    except Exception:
        # Guard: if this Pallas build rejects BlockSpec(pipeline_mode=...),
        # fall back to default (double-buffered) resident weights.
        return build_and_call(False)


# ----------------------------------------------------------------------------
# Module-level wrappers (glue in plain JAX)
# ----------------------------------------------------------------------------
def text_encoder_forward(inputs, hidden_states):
    """TextEncoder.forward: model(**inputs) -> Identity projection."""
    # TODO(synk): the pretrained BART/T5 encoder (self.model) is an external
    # checkpoint with no Pallas equivalent here; its last_hidden_state is
    # supplied directly.  self.projection is nn.Identity -> pass-through.
    return {"hidden_states": hidden_states,
            "attention_mask": inputs["attention_mask"]}


def embed_candidates(inputs, hidden_states, cand_spans, trigger_spans, params):
    """TextEncoder.embed_candidates hot path.

    hidden_states : (B, S, H) f32   encoder output (last_hidden_state)
    cand_spans    : (B, C, 2) int32 [start, end) per candidate
    trigger_spans : (B, 1, 2) int32 [start, end) per trigger
    returns (context_embeddings dict, cand_embeddings (B, C, H) f32)
    """
    B, S, H = hidden_states.shape
    C = cand_spans.shape[1]

    context_embeddings = text_encoder_forward(inputs, hidden_states)

    # bf16 activations: halves HBM/VMEM traffic; the MXU is a bf16 engine.
    feats = context_embeddings["hidden_states"].astype(jnp.bfloat16)

    # Pooling-row layout: rows [0,C) candidates, [C,c_pad) padding, row c_pad
    # the trigger, (c_pad, cp) padding -> both the candidate block and the
    # trigger block are 8-row (sublane) aligned slices inside the kernel.
    c_pad = _round_up(max(C, 1), 8)
    cp = c_pad + 8
    spans = jnp.zeros((B, cp, 2), jnp.int32)
    spans = spans.at[:, :C, :].set(cand_spans.astype(jnp.int32))
    spans = spans.at[:, c_pad:c_pad + 1, :].set(trigger_spans.astype(jnp.int32))
    starts = spans[:, :, 0:1]    # (B, Cp, 1): pre-split -> no in-kernel lane slice
    ends = spans[:, :, 1:2]

    # Batch tile Bt: stack Bt*c_pad MLP rows per step (target M ~ 256 for the
    # v6e/v7x MXU, >= 128 on v5e), keep >= 2 grid steps so the "parallel" axis
    # feeds both v7x TensorCores, and cap the per-step h block at ~8 MiB.
    bt = max(1, pl.cdiv(256, c_pad))
    bt = min(bt, max(1, (8 * 1024 * 1024) // (S * H * 2)))
    if B >= 2:
        bt = min(bt, B // 2)
    bt = max(1, min(bt, B))

    b_pad = _round_up(B, bt)
    if b_pad != B:
        pad = ((0, b_pad - B), (0, 0), (0, 0))
        feats = jnp.pad(feats, pad)
        starts = jnp.pad(starts, pad)
        ends = jnp.pad(ends, pad)

    out = fused_pool_cand_mlp(feats, starts, ends, c_pad, bt,
                              params["w1c"], params["w1t"], params["b1"],
                              params["w2"], params["b2"])
    cand_embeddings = out[:B, :C, :]
    return context_embeddings, cand_embeddings


def init_params(key, hidden_size):
    """cand_mlp = Linear(2H, 4H) -> ReLU -> Dropout -> Linear(4H, H).

    w1 is stored pre-split along its input dim: rows [0, H) multiply the
    candidate embedding, rows [H, 2H) multiply the trigger embedding.
    Matmul weights are stored in bf16; biases stay f32.
    """
    in_dim, mid_dim, out_dim = 2 * hidden_size, 4 * hidden_size, hidden_size
    k1, k2, k3, k4 = jax.random.split(key, 4)
    w1 = jax.random.normal(k1, (in_dim, mid_dim), jnp.float32) * (1.0 / in_dim ** 0.5)
    w2 = jax.random.normal(k2, (mid_dim, out_dim), jnp.float32) * (1.0 / mid_dim ** 0.5)
    b1 = jax.random.normal(k3, (1, mid_dim), jnp.float32) * 0.02
    b2 = jax.random.normal(k4, (1, out_dim), jnp.float32) * 0.02
    return {
        "w1c": w1[:hidden_size].astype(jnp.bfloat16),
        "w1t": w1[hidden_size:].astype(jnp.bfloat16),
        "b1": b1,
        "w2": w2.astype(jnp.bfloat16),
        "b2": b2,
    }


# ----------------------------------------------------------------------------
# Pure-JAX reference (mirrors the PyTorch module) for a correctness check.
# ----------------------------------------------------------------------------
def _reference_embed_candidates(hidden_states, cand_spans, trigger_spans, params):
    B, S, H = hidden_states.shape
    feats = hidden_states.astype(jnp.bfloat16).astype(jnp.float32)

    def pool(spans):
        s_idx = jnp.arange(S, dtype=jnp.int32)[None, None, :]
        start, end = spans[..., 0:1], spans[..., 1:2]
        inside = (s_idx >= start) & (s_idx < end)
        w = inside.astype(jnp.float32) / jnp.maximum(end - start, 1).astype(jnp.float32)
        return jnp.einsum("bcs,bsh->bch", w, feats)

    cand = pool(cand_spans)                                   # (B, C, H)
    trig = jnp.broadcast_to(pool(trigger_spans), cand.shape)  # repeat(1, C, 1)
    x = jnp.concatenate([cand, trig], axis=-1)                # (B, C, 2H)
    w1 = jnp.concatenate([params["w1c"], params["w1t"]], axis=0).astype(jnp.float32)
    h1 = jnp.maximum(x @ w1 + params["b1"], 0.0)
    return h1 @ params["w2"].astype(jnp.float32) + params["b2"]


if __name__ == "__main__":
    # Small shapes that still exercise the new paths: B=4 -> batch tile Bt=2
    # (2 grid steps), C=13 -> non-multiple-of-8 candidate padding, S=H=128.
    B, S, H, C = 4, 128, 128, 13

    key = jax.random.PRNGKey(0)
    k_hidden, k_params, k_start, k_len, k_trig = jax.random.split(key, 5)

    # Synthetic encoder output (stands in for BART/T5 last_hidden_state).
    hidden_states = jax.random.normal(k_hidden, (B, S, H), jnp.float32)
    attention_mask = jnp.ones((B, S), jnp.int32)
    inputs = {"attention_mask": attention_mask}

    # Deterministic candidate / trigger spans [start, end).
    starts = jax.random.randint(k_start, (B, C), 0, S - 4)
    lengths = jax.random.randint(k_len, (B, C), 1, 4)
    cand_spans = jnp.stack([starts, jnp.minimum(starts + lengths, S)], axis=-1)
    t_starts = jax.random.randint(k_trig, (B, 1), 0, S - 1)
    trigger_spans = jnp.stack([t_starts, t_starts + 1], axis=-1)

    params = init_params(k_params, H)

    ctx_emb, cand_emb = embed_candidates(
        inputs, hidden_states, cand_spans, trigger_spans, params)
    jax.block_until_ready(cand_emb)
    jax.block_until_ready(ctx_emb["hidden_states"])

    assert ctx_emb["hidden_states"].shape == (B, S, H)
    assert ctx_emb["attention_mask"].shape == (B, S)
    assert cand_emb.shape == (B, C, H)

    ref = _reference_embed_candidates(hidden_states, cand_spans, trigger_spans, params)
    max_err = float(jnp.max(jnp.abs(cand_emb - ref)))
    assert jnp.allclose(cand_emb, ref, rtol=5e-2, atol=5e-2), max_err

    print("KERNEL_OK")
</pallas_src>

<mosaic_0001>
module attributes {stable_mosaic.version = 11 : i64} {
  func.func @_pool_mlp_kernel(%arg0: i32, %arg1: memref<2x24x1xi32, #tpu.memory_space<vmem>>, %arg2: memref<2x24x1xi32, #tpu.memory_space<vmem>>, %arg3: memref<2x128x128xbf16, #tpu.memory_space<vmem>>, %arg4: memref<128x512xbf16, #tpu.memory_space<vmem>>, %arg5: memref<128x512xbf16, #tpu.memory_space<vmem>>, %arg6: memref<1x512xf32, #tpu.memory_space<vmem>>, %arg7: memref<512x128xbf16, #tpu.memory_space<vmem>>, %arg8: memref<1x128xf32, #tpu.memory_space<vmem>>, %arg9: memref<2x16x128xf32, #tpu.memory_space<vmem>>) attributes {dimension_semantics = [#tpu.dimension_semantics<parallel>], iteration_bounds = array<i64: 2>, scalar_prefetch = 0 : i64, scratch_operands = 0 : i64, tpu.core_type = #tpu.core_type<tc>, window_params = [{transform_indices = @transform_0, window_bounds = array<i64: 2, 24, 1>}, {transform_indices = @transform_1, window_bounds = array<i64: 2, 24, 1>}, {transform_indices = @transform_2, window_bounds = array<i64: 2, 128, 128>}, {pipeline_mode = #tpu.pipeline_mode<synchronous>, transform_indices = @transform_3, window_bounds = array<i64: 128, 512>}, {pipeline_mode = #tpu.pipeline_mode<synchronous>, transform_indices = @transform_4, window_bounds = array<i64: 128, 512>}, {pipeline_mode = #tpu.pipeline_mode<synchronous>, transform_indices = @transform_5, window_bounds = array<i64: 1, 512>}, {pipeline_mode = #tpu.pipeline_mode<synchronous>, transform_indices = @transform_6, window_bounds = array<i64: 512, 128>}, {pipeline_mode = #tpu.pipeline_mode<synchronous>, transform_indices = @transform_7, window_bounds = array<i64: 1, 128>}, {transform_indices = @transform_8, window_bounds = array<i64: 2, 16, 128>}]} {
    %c0 = arith.constant 0 : index
    %c0_0 = arith.constant 0 : index
    %c0_1 = arith.constant 0 : index
    %0 = vector.load %arg1[%c0, %c0_0, %c0_1] : memref<2x24x1xi32, #tpu.memory_space<vmem>>, vector<2x24x1xi32>
    %c0_2 = arith.constant 0 : index
    %c0_3 = arith.constant 0 : index
    %c0_4 = arith.constant 0 : index
    %1 = vector.load %arg2[%c0_2, %c0_3, %c0_4] : memref<2x24x1xi32, #tpu.memory_space<vmem>>, vector<2x24x1xi32>
    %2 = tpu.iota {dimensions = array<i32: 2>} : vector<2x24x128xi32>
    %3 = vector.broadcast %0 : vector<2x24x1xi32> to vector<2x24x128xi32>
    %4 = arith.cmpi sge, %2, %3 : vector<2x24x128xi32>
    %5 = vector.broadcast %1 : vector<2x24x1xi32> to vector<2x24x128xi32>
    %6 = arith.cmpi slt, %2, %5 : vector<2x24x128xi32>
    %7 = arith.andi %4, %6 : vector<2x24x128xi1>
    %8 = arith.extui %7 : vector<2x24x128xi1> to vector<2x24x128xi32>
    %9 = arith.sitofp %8 : vector<2x24x128xi32> to vector<2x24x128xf32>
    %10 = arith.truncf %9 : vector<2x24x128xf32> to vector<2x24x128xbf16>
    %11 = arith.subi %1, %0 : vector<2x24x1xi32>
    %c1_i32 = arith.constant 1 : i32
    %12 = vector.broadcast %c1_i32 : i32 to vector<2x24x1xi32>
    %13 = arith.maxsi %11, %12 : vector<2x24x1xi32>
    %14 = arith.sitofp %13 : vector<2x24x1xi32> to vector<2x24x1xf32>
    %cst = arith.constant 1.000000e+00 : f32
    %15 = vector.broadcast %cst : f32 to vector<2x24x1xf32>
    %16 = arith.divf %15, %14 : vector<2x24x1xf32>
    %c0_5 = arith.constant 0 : index
    %c0_6 = arith.constant 0 : index
    %c0_7 = arith.constant 0 : index
    %17 = vector.load %arg3[%c0_5, %c0_6, %c0_7] : memref<2x128x128xbf16, #tpu.memory_space<vmem>>, vector<2x128x128xbf16>
    "tpu.trace_start"() <{level = 10 : i32, message = "bcs,bsh->bch"}> : () -> ()
    %cst_8 = arith.constant dense<0.000000e+00> : vector<2x24x128xf32>
    %18 = tpu.matmul %10, %17, %cst_8 {dimension_numbers = #tpu.dot_dimension_numbers<[2], [1], [1], [2], [0, 0, 0, 1, 1, 2], [0], [0]>} : vector<2x24x128xbf16>, vector<2x128x128xbf16>, vector<2x24x128xf32> -> vector<2x24x128xf32>
    "tpu.trace_stop"() : () -> ()
    %19 = vector.broadcast %16 : vector<2x24x1xf32> to vector<2x24x128xf32>
    %20 = arith.mulf %18, %19 : vector<2x24x128xf32>
    %21 = vector.extract_strided_slice %20 {offsets = [0, 0, 0], sizes = [2, 16, 128], strides = [1, 1, 1]} : vector<2x24x128xf32> to vector<2x16x128xf32>
    %22 = arith.truncf %21 : vector<2x16x128xf32> to vector<2x16x128xbf16>
    %23 = vector.extract_strided_slice %20 {offsets = [0, 16, 0], sizes = [2, 8, 128], strides = [1, 1, 1]} : vector<2x24x128xf32> to vector<2x8x128xf32>
    %24 = arith.truncf %23 : vector<2x8x128xf32> to vector<2x8x128xbf16>
    %25 = vector.shape_cast %22 : vector<2x16x128xbf16> to vector<32x128xbf16>
    %c0_9 = arith.constant 0 : index
    %c0_10 = arith.constant 0 : index
    %26 = vector.load %arg4[%c0_9, %c0_10] : memref<128x512xbf16, #tpu.memory_space<vmem>>, vector<128x512xbf16>
    %cst_11 = arith.constant dense<0.000000e+00> : vector<32x512xf32>
    %27 = tpu.matmul %25, %26, %cst_11 {dimension_numbers = #tpu.dot_dimension_numbers<[1], [0], [0], [1], [0, 0, 1, 1], [], []>} : vector<32x128xbf16>, vector<128x512xbf16>, vector<32x512xf32> -> vector<32x512xf32>
    %28 = vector.shape_cast %27 : vector<32x512xf32> to vector<2x16x512xf32>
    %29 = vector.shape_cast %24 : vector<2x8x128xbf16> to vector<16x128xbf16>
    %c0_12 = arith.constant 0 : index
    %c0_13 = arith.constant 0 : index
    %30 = vector.load %arg5[%c0_12, %c0_13] : memref<128x512xbf16, #tpu.memory_space<vmem>>, vector<128x512xbf16>
    %cst_14 = arith.constant dense<0.000000e+00> : vector<16x512xf32>
    %31 = tpu.matmul %29, %30, %cst_14 {dimension_numbers = #tpu.dot_dimension_numbers<[1], [0], [0], [1], [0, 0, 1, 1], [], []>} : vector<16x128xbf16>, vector<128x512xbf16>, vector<16x512xf32> -> vector<16x512xf32>
    %32 = vector.shape_cast %31 : vector<16x512xf32> to vector<2x8x512xf32>
    %33 = vector.extract_strided_slice %32 {offsets = [0, 0, 0], sizes = [2, 1, 512], strides = [1, 1, 1]} : vector<2x8x512xf32> to vector<2x1x512xf32>
    %34 = vector.broadcast %33 : vector<2x1x512xf32> to vector<2x16x512xf32>
    %35 = arith.addf %28, %34 : vector<2x16x512xf32>
    %c0_15 = arith.constant 0 : index
    %c0_16 = arith.constant 0 : index
    %36 = vector.load %arg6[%c0_15, %c0_16] : memref<1x512xf32, #tpu.memory_space<vmem>>, vector<1x512xf32>
    %37 = vector.shape_cast %36 : vector<1x512xf32> to vector<1x1x512xf32>
    %38 = vector.broadcast %37 : vector<1x1x512xf32> to vector<2x16x512xf32>
    %39 = arith.addf %35, %38 : vector<2x16x512xf32>
    %cst_17 = arith.constant 0.000000e+00 : f32
    %40 = vector.broadcast %cst_17 : f32 to vector<2x16x512xf32>
    %41 = arith.maximumf %39, %40 : vector<2x16x512xf32>
    %42 = vector.shape_cast %41 : vector<2x16x512xf32> to vector<32x512xf32>
    %43 = arith.truncf %42 : vector<32x512xf32> to vector<32x512xbf16>
    %c0_18 = arith.constant 0 : index
    %c0_19 = arith.constant 0 : index
    %44 = vector.load %arg7[%c0_18, %c0_19] : memref<512x128xbf16, #tpu.memory_space<vmem>>, vector<512x128xbf16>
    %cst_20 = arith.constant dense<0.000000e+00> : vector<32x128xf32>
    %45 = tpu.matmul %43, %44, %cst_20 {dimension_numbers = #tpu.dot_dimension_numbers<[1], [0], [0], [1], [0, 0, 1, 1], [], []>} : vector<32x512xbf16>, vector<512x128xbf16>, vector<32x128xf32> -> vector<32x128xf32>
    %46 = vector.shape_cast %45 : vector<32x128xf32> to vector<2x16x128xf32>
    %c0_21 = arith.constant 0 : index
    %c0_22 = arith.constant 0 : index
    %47 = vector.load %arg8[%c0_21, %c0_22] : memref<1x128xf32, #tpu.memory_space<vmem>>, vector<1x128xf32>
    %48 = vector.shape_cast %47 : vector<1x128xf32> to vector<1x1x128xf32>
    %49 = vector.broadcast %48 : vector<1x1x128xf32> to vector<2x16x128xf32>
    %50 = arith.addf %46, %49 : vector<2x16x128xf32>
    %c0_23 = arith.constant 0 : index
    %c0_24 = arith.constant 0 : index
    %c0_25 = arith.constant 0 : index
    %51 = vector.load %arg9[%c0_23, %c0_24, %c0_25] : memref<2x16x128xf32, #tpu.memory_space<vmem>>, vector<2x16x128xf32>
    tpu.vector_store %arg9[%c0_23, %c0_24, %c0_25], %50 {strides = array<i32>} : memref<2x16x128xf32, #tpu.memory_space<vmem>>, vector<2x16x128xf32>,
    return
  }
  func.func @transform_0(%arg0: i32) -> (i32, i32, i32) {
    %c0_i32 = arith.constant 0 : i32
    %c0_i32_0 = arith.constant 0 : i32
    %c0_i32_1 = arith.constant 0 : i32
    return %arg0, %c0_i32, %c0_i32_0 : i32, i32, i32
  }
  func.func @transform_1(%arg0: i32) -> (i32, i32, i32) {
    %c0_i32 = arith.constant 0 : i32
    %c0_i32_0 = arith.constant 0 : i32
    %c0_i32_1 = arith.constant 0 : i32
    return %arg0, %c0_i32, %c0_i32_0 : i32, i32, i32
  }
  func.func @transform_2(%arg0: i32) -> (i32, i32, i32) {
    %c0_i32 = arith.constant 0 : i32
    %c0_i32_0 = arith.constant 0 : i32
    %c0_i32_1 = arith.constant 0 : i32
    return %arg0, %c0_i32, %c0_i32_0 : i32, i32, i32
  }
  func.func @transform_3(%arg0: i32) -> (i32, i32) {
    %c0_i32 = arith.constant 0 : i32
    %c0_i32_0 = arith.constant 0 : i32
    %c0_i32_1 = arith.constant 0 : i32
    return %c0_i32, %c0_i32_0 : i32, i32
  }
  func.func @transform_4(%arg0: i32) -> (i32, i32) {
    %c0_i32 = arith.constant 0 : i32
    %c0_i32_0 = arith.constant 0 : i32
    %c0_i32_1 = arith.constant 0 : i32
    return %c0_i32, %c0_i32_0 : i32, i32
  }
  func.func @transform_5(%arg0: i32) -> (i32, i32) {
    %c0_i32 = arith.constant 0 : i32
    %c0_i32_0 = arith.constant 0 : i32
    %c0_i32_1 = arith.constant 0 : i32
    return %c0_i32, %c0_i32_0 : i32, i32
  }
  func.func @transform_6(%arg0: i32) -> (i32, i32) {
    %c0_i32 = arith.constant 0 : i32
    %c0_i32_0 = arith.constant 0 : i32
    %c0_i32_1 = arith.constant 0 : i32
    return %c0_i32, %c0_i32_0 : i32, i32
  }
  func.func @transform_7(%arg0: i32) -> (i32, i32) {
    %c0_i32 = arith.constant 0 : i32
    %c0_i32_0 = arith.constant 0 : i32
    %c0_i32_1 = arith.constant 0 : i32
    return %c0_i32, %c0_i32_0 : i32, i32
  }
  func.func @transform_8(%arg0: i32) -> (i32, i32, i32) {
    %c0_i32 = arith.constant 0 : i32
    %c0_i32_0 = arith.constant 0 : i32
    %c0_i32_1 = arith.constant 0 : i32
    return %arg0, %c0_i32, %c0_i32_0 : i32, i32, i32
  }
}

module attributes {stable_mosaic.version = 11 : i64} {
  func.func @_pool_mlp_kernel(%arg0: i32, %arg1: memref<2x24x1xi32, #tpu.memory_space<vmem>>, %arg2: memref<2x24x1xi32, #tpu.memory_space<vmem>>, %arg3: memref<2x128x128xbf16, #tpu.memory_space<vmem>>, %arg4: memref<128x512xbf16, #tpu.memory_space<vmem>>, %arg5: memref<128x512xbf16, #tpu.memory_space<vmem>>, %arg6: memref<1x512xf32, #tpu.memory_space<vmem>>, %arg7: memref<512x128xbf16, #tpu.memory_space<vmem>>, %arg8: memref<1x128xf32, #tpu.memory_space<vmem>>, %arg9: memref<2x16x128xf32, #tpu.memory_space<vmem>>) attributes {dimension_semantics = [#tpu.dimension_semantics<parallel>], iteration_bounds = array<i64: 2>, scalar_prefetch = 0 : i64, scratch_operands = 0 : i64, tpu.core_type = #tpu.core_type<tc>, window_params = [{transform_indices = @transform_0, window_bounds = array<i64: 2, 24, 1>}, {transform_indices = @transform_1, window_bounds = array<i64: 2, 24, 1>}, {transform_indices = @transform_2, window_bounds = array<i64: 2, 128, 128>}, {pipeline_mode = #tpu.pipeline_mode<synchronous>, transform_indices = @transform_3, window_bounds = array<i64: 128, 512>}, {pipeline_mode = #tpu.pipeline_mode<synchronous>, transform_indices = @transform_4, window_bounds = array<i64: 128, 512>}, {pipeline_mode = #tpu.pipeline_mode<synchronous>, transform_indices = @transform_5, window_bounds = array<i64: 1, 512>}, {pipeline_mode = #tpu.pipeline_mode<synchronous>, transform_indices = @transform_6, window_bounds = array<i64: 512, 128>}, {pipeline_mode = #tpu.pipeline_mode<synchronous>, transform_indices = @transform_7, window_bounds = array<i64: 1, 128>}, {transform_indices = @transform_8, window_bounds = array<i64: 2, 16, 128>}]} {
    %c0 = arith.constant 0 : index
    %c0_0 = arith.constant 0 : index
    %c0_1 = arith.constant 0 : index
    %0 = vector.load %arg1[%c0, %c0_0, %c0_1] : memref<2x24x1xi32, #tpu.memory_space<vmem>>, vector<2x24x1xi32>
    %c0_2 = arith.constant 0 : index
    %c0_3 = arith.constant 0 : index
    %c0_4 = arith.constant 0 : index
    %1 = vector.load %arg2[%c0_2, %c0_3, %c0_4] : memref<2x24x1xi32, #tpu.memory_space<vmem>>, vector<2x24x1xi32>
    %2 = tpu.iota {dimensions = array<i32: 2>} : vector<2x24x128xi32>
    %3 = vector.broadcast %0 : vector<2x24x1xi32> to vector<2x24x128xi32>
    %4 = arith.cmpi sge, %2, %3 : vector<2x24x128xi32>
    %5 = vector.broadcast %1 : vector<2x24x1xi32> to vector<2x24x128xi32>
    %6 = arith.cmpi slt, %2, %5 : vector<2x24x128xi32>
    %7 = arith.andi %4, %6 : vector<2x24x128xi1>
    %8 = arith.extui %7 : vector<2x24x128xi1> to vector<2x24x128xi32>
    %9 = arith.sitofp %8 : vector<2x24x128xi32> to vector<2x24x128xf32>
    %10 = arith.truncf %9 : vector<2x24x128xf32> to vector<2x24x128xbf16>
    %11 = arith.subi %1, %0 : vector<2x24x1xi32>
    %c1_i32 = arith.constant 1 : i32
    %12 = vector.broadcast %c1_i32 : i32 to vector<2x24x1xi32>
    %13 = arith.maxsi %11, %12 : vector<2x24x1xi32>
    %14 = arith.sitofp %13 : vector<2x24x1xi32> to vector<2x24x1xf32>
    %cst = arith.constant 1.000000e+00 : f32
    %15 = vector.broadcast %cst : f32 to vector<2x24x1xf32>
    %16 = arith.divf %15, %14 : vector<2x24x1xf32>
    %c0_5 = arith.constant 0 : index
    %c0_6 = arith.constant 0 : index
    %c0_7 = arith.constant 0 : index
    %17 = vector.load %arg3[%c0_5, %c0_6, %c0_7] : memref<2x128x128xbf16, #tpu.memory_space<vmem>>, vector<2x128x128xbf16>
    "tpu.trace_start"() <{level = 10 : i32, message = "bcs,bsh->bch"}> : () -> ()
    %cst_8 = arith.constant dense<0.000000e+00> : vector<2x24x128xf32>
    %18 = tpu.matmul %10, %17, %cst_8 {dimension_numbers = #tpu.dot_dimension_numbers<[2], [1], [1], [2], [0, 0, 0, 1, 1, 2], [0], [0]>} : vector<2x24x128xbf16>, vector<2x128x128xbf16>, vector<2x24x128xf32> -> vector<2x24x128xf32>
    "tpu.trace_stop"() : () -> ()
    %19 = vector.broadcast %16 : vector<2x24x1xf32> to vector<2x24x128xf32>
    %20 = arith.mulf %18, %19 : vector<2x24x128xf32>
    %21 = vector.extract_strided_slice %20 {offsets = [0, 0, 0], sizes = [2, 16, 128], strides = [1, 1, 1]} : vector<2x24x128xf32> to vector<2x16x128xf32>
    %22 = arith.truncf %21 : vector<2x16x128xf32> to vector<2x16x128xbf16>
    %23 = vector.extract_strided_slice %20 {offsets = [0, 16, 0], sizes = [2, 8, 128], strides = [1, 1, 1]} : vector<2x24x128xf32> to vector<2x8x128xf32>
    %24 = arith.truncf %23 : vector<2x8x128xf32> to vector<2x8x128xbf16>
    %25 = vector.shape_cast %22 : vector<2x16x128xbf16> to vector<32x128xbf16>
    %c0_9 = arith.constant 0 : index
    %c0_10 = arith.constant 0 : index
    %26 = vector.load %arg4[%c0_9, %c0_10] : memref<128x512xbf16, #tpu.memory_space<vmem>>, vector<128x512xbf16>
    %cst_11 = arith.constant dense<0.000000e+00> : vector<32x512xf32>
    %27 = tpu.matmul %25, %26, %cst_11 {dimension_numbers = #tpu.dot_dimension_numbers<[1], [0], [0], [1], [0, 0, 1, 1], [], []>} : vector<32x128xbf16>, vector<128x512xbf16>, vector<32x512xf32> -> vector<32x512xf32>
    %28 = vector.shape_cast %27 : vector<32x512xf32> to vector<2x16x512xf32>
    %29 = vector.shape_cast %24 : vector<2x8x128xbf16> to vector<16x128xbf16>
    %c0_12 = arith.constant 0 : index
    %c0_13 = arith.constant 0 : index
    %30 = vector.load %arg5[%c0_12, %c0_13] : memref<128x512xbf16, #tpu.memory_space<vmem>>, vector<128x512xbf16>
    %cst_14 = arith.constant dense<0.000000e+00> : vector<16x512xf32>
    %31 = tpu.matmul %29, %30, %cst_14 {dimension_numbers = #tpu.dot_dimension_numbers<[1], [0], [0], [1], [0, 0, 1, 1], [], []>} : vector<16x128xbf16>, vector<128x512xbf16>, vector<16x512xf32> -> vector<16x512xf32>
    %32 = vector.shape_cast %31 : vector<16x512xf32> to vector<2x8x512xf32>
    %33 = vector.extract_strided_slice %32 {offsets = [0, 0, 0], sizes = [2, 1, 512], strides = [1, 1, 1]} : vector<2x8x512xf32> to vector<2x1x512xf32>
    %34 = vector.broadcast %33 : vector<2x1x512xf32> to vector<2x16x512xf32>
    %35 = arith.addf %28, %34 : vector<2x16x512xf32>
    %c0_15 = arith.constant 0 : index
    %c0_16 = arith.constant 0 : index
    %36 = vector.load %arg6[%c0_15, %c0_16] : memref<1x512xf32, #tpu.memory_space<vmem>>, vector<1x512xf32>
    %37 = vector.shape_cast %36 : vector<1x512xf32> to vector<1x1x512xf32>
    %38 = vector.broadcast %37 : vector<1x1x512xf32> to vector<2x16x512xf32>
    %39 = arith.addf %35, %38 : vector<2x16x512xf32>
    %cst_17 = arith.constant 0.000000e+00 : f32
    %40 = vector.broadcast %cst_17 : f32 to vector<2x16x512xf32>
    %41 = arith.maximumf %39, %40 : vector<2x16x512xf32>
    %42 = vector.shape_cast %41 : vector<2x16x512xf32> to vector<32x512xf32>
    %43 = arith.truncf %42 : vector<32x512xf32> to vector<32x512xbf16>
    %c0_18 = arith.constant 0 : index
    %c0_19 = arith.constant 0 : index
    %44 = vector.load %arg7[%c0_18, %c0_19] : memref<512x128xbf16, #tpu.memory_space<vmem>>, vector<512x128xbf16>
    %cst_20 = arith.constant dense<0.000000e+00> : vector<32x128xf32>
    %45 = tpu.matmul %43, %44, %cst_20 {dimension_numbers = #tpu.dot_dimension_numbers<[1], [0], [0], [1], [0, 0, 1, 1], [], []>} : vector<32x512xbf16>, vector<512x128xbf16>, vector<32x128xf32> -> vector<32x128xf32>
    %46 = vector.shape_cast %45 : vector<32x128xf32> to vector<2x16x128xf32>
    %c0_21 = arith.constant 0 : index
    %c0_22 = arith.constant 0 : index
    %47 = vector.load %arg8[%c0_21, %c0_22] : memref<1x128xf32, #tpu.memory_space<vmem>>, vector<1x128xf32>
    %48 = vector.shape_cast %47 : vector<1x128xf32> to vector<1x1x128xf32>
    %49 = vector.broadcast %48 : vector<1x1x128xf32> to vector<2x16x128xf32>
    %50 = arith.addf %46, %49 : vector<2x16x128xf32>
    %c0_23 = arith.constant 0 : index
    %c0_24 = arith.constant 0 : index
    %c0_25 = arith.constant 0 : index
    %51 = vector.load %arg9[%c0_23, %c0_24, %c0_25] : memref<2x16x128xf32, #tpu.memory_space<vmem>>, vector<2x16x128xf32>
    tpu.vector_store %arg9[%c0_23, %c0_24, %c0_25], %50 {strides = array<i32>} : memref<2x16x128xf32, #tpu.memory_space<vmem>>, vector<2x16x128xf32>,
    return
  }
  func.func @transform_0(%arg0: i32) -> (i32, i32, i32) {
    %c0_i32 = arith.constant 0 : i32
    %c0_i32_0 = arith.constant 0 : i32
    %c0_i32_1 = arith.constant 0 : i32
    return %arg0, %c0_i32, %c0_i32_0 : i32, i32, i32
  }
  func.func @transform_1(%arg0: i32) -> (i32, i32, i32) {
    %c0_i32 = arith.constant 0 : i32
    %c0_i32_0 = arith.constant 0 : i32
    %c0_i32_1 = arith.constant 0 : i32
    return %arg0, %c0_i32, %c0_i32_0 : i32, i32, i32
  }
  func.func @transform_2(%arg0: i32) -> (i32, i32, i32) {
    %c0_i32 = arith.constant 0 : i32
    %c0_i32_0 = arith.constant 0 : i32
    %c0_i32_1 = arith.constant 0 : i32
    return %arg0, %c0_i32, %c0_i32_0 : i32, i32, i32
  }
  func.func @transform_3(%arg0: i32) -> (i32, i32) {
    %c0_i32 = arith.constant 0 : i32
    %c0_i32_0 = arith.constant 0 : i32
    %c0_i32_1 = arith.constant 0 : i32
    return %c0_i32, %c0_i32_0 : i32, i32
  }
  func.func @transform_4(%arg0: i32) -> (i32, i32) {
    %c0_i32 = arith.constant 0 : i32
    %c0_i32_0 = arith.constant 0 : i32
    %c0_i32_1 = arith.constant 0 : i32
    return %c0_i32, %c0_i32_0 : i32, i32
  }
  func.func @transform_5(%arg0: i32) -> (i32, i32) {
    %c0_i32 = arith.constant 0 : i32
    %c0_i32_0 = arith.constant 0 : i32
    %c0_i32_1 = arith.constant 0 : i32
    return %c0_i32, %c0_i32_0 : i32, i32
  }
  func.func @transform_6(%arg0: i32) -> (i32, i32) {
    %c0_i32 = arith.constant 0 : i32
    %c0_i32_0 = arith.constant 0 : i32
    %c0_i32_1 = arith.constant 0 : i32
    return %c0_i32, %c0_i32_0 : i32, i32
  }
  func.func @transform_7(%arg0: i32) -> (i32, i32) {
    %c0_i32 = arith.constant 0 : i32
    %c0_i32_0 = arith.constant 0 : i32
    %c0_i32_1 = arith.constant 0 : i32
    return %c0_i32, %c0_i32_0 : i32, i32
  }
  func.func @transform_8(%arg0: i32) -> (i32, i32, i32) {
    %c0_i32 = arith.constant 0 : i32
    %c0_i32_0 = arith.constant 0 : i32
    %c0_i32_1 = arith.constant 0 : i32
    return %arg0, %c0_i32, %c0_i32_0 : i32, i32, i32
  }
}

</mosaic_0001>

<llo_original>
// kernel: tpu_custom_call.1
$region0: #{tpu_custom_call.1}
  #allocation0 [shape = 'u32[]', space=smem, size = 0x4, offset = 0x4, fixed_abs, tag = 'smem constant byte address 0x4 - core index']
  #allocation1 [shape = 'u32[144,128]{1,0:T(1,128)}', space=vmem, size = 0x12000, scoped, tag = 'internal scratch']
  %s0 = inlined_call_operand.vmem [shape: s32[4,24,1], index: 0, kind: input, shape index: {}]
  %s1 = inlined_call_operand.vmem [shape: s32[4,24,1], index: 1, kind: input, shape index: {}]
  %s2 = inlined_call_operand.hbm [shape: bf16[4,128,128], index: 2, kind: input, shape index: {}]
  %s3 = inlined_call_operand.hbm [shape: bf16[128,512], index: 3, kind: input, shape index: {}]
  %s4 = inlined_call_operand.hbm [shape: bf16[128,512], index: 4, kind: input, shape index: {}]
  %s5 = inlined_call_operand.vmem [shape: f32[1,512], index: 5, kind: input, shape index: {}]
  %s6 = inlined_call_operand.hbm [shape: bf16[512,128], index: 6, kind: input, shape index: {}]
  %s7 = inlined_call_operand.vmem [shape: f32[1,128], index: 7, kind: input, shape index: {}]
  %s8 = inlined_call_operand.hbm [shape: f32[4,16,128], index: 8, kind: output, shape index: {}]
  %s9 = sld [smem:[#allocation0]]
  $region81: #{tpu_custom_call.1} parent=0
    _
  %s11 = ssub.s32 1, %s9
  %s12 = scalar_select 0, %s11, %s9
  $region1: #{tpu_custom_call.1} parent=0
    #allocation2 [shape = 'u8[131072]{0}', space=vmem, size = 0x20000, scoped, tag = 'input window, operand 2']
    #allocation3 [shape = 's32[2]{0}', space=sflag, size = 0x8, scoped, tag = 'scoped memory for tpu_custom_call.1']
    #allocation4 [shape = 's32[2]{0}', space=sflag, size = 0x8, scoped, tag = 'scoped memory for tpu_custom_call.1']
    #allocation5 [shape = 'u8[131072]{0}', space=vmem, size = 0x20000, scoped, tag = 'input window, operand 3, single buffered']
    #allocation6 [shape = 's32[1]{0}', space=sflag, size = 0x4, scoped, tag = 'scoped memory for tpu_custom_call.1']
    #allocation7 [shape = 'u8[131072]{0}', space=vmem, size = 0x20000, scoped, tag = 'input window, operand 4, single buffered']
    #allocation8 [shape = 'u8[131072]{0}', space=vmem, size = 0x20000, scoped, tag = 'input window, operand 6, single buffered']
    #allocation9 [shape = 's32[1]{0}', space=sflag, size = 0x4, scoped, tag = 'scoped memory for tpu_custom_call.1']
    #allocation10 [shape = 'u8[32768]{0}', space=vmem, size = 0x8000, scoped, tag = 'output window, operand 0']
    %13 = vsyncpa [#allocation3], 0
    %s14 = scalar_lea.sflag [#allocation3], 1
    %15 = vsyncpa %s14, 0
    %16 = vsyncpa [#allocation6], 0
    %17 = vsyncpa [#allocation9], 0
    %18 = vsyncpa [#allocation4], 0
    %s19 = scalar_lea.sflag [#allocation4], 1
    %20 = vsyncpa %s19, 0
    loop: start=0, step=1, limit=4
    $region2: #{tpu_custom_call.1} parent=1 // loop_pre_header
      _
    $region3: #{tpu_custom_call.1} parent=1 // loop_header
      %s22 = sphi 0, %s26
      %p23 = scmp.ge.s32.totalorder %s22, 4
      %s32 = sphi 0, %s34
      %s35 = sphi 0, %s32
      %s36 = sphi 0, %s35
      %s52 = sphi 0, %s36
      %s58 = sphi 0, %s60
      %s61 = sphi 0, %s58
      %s62 = sphi 0, %s61
      %s78 = sphi 0, %s62
      %s84 = sphi 0, %s86
      %s87 = sphi 0, %s84
      %s88 = sphi 0, %s87
      %s104 = sphi 0, %s88
      %s108 = sphi 0, %s108
      %s110 = sphi 0, %s108
      %s111 = sphi 0, %s110
      %s125 = sphi 0, %s111
      %s129 = sphi 0, %s129
      %s131 = sphi 0, %s129
      %s132 = sphi 0, %s131
      %s146 = sphi 0, %s132
      %s150 = sphi 0, %s150
      %s152 = sphi 0, %s150
      %s153 = sphi 0, %s152
      %s167 = sphi 0, %s153
      %s171 = sphi 0, %s171
      %s173 = sphi 0, %s171
      %s174 = sphi 0, %s173
      %s188 = sphi 0, %s174
      %s192 = sphi 0, %s192
      %s194 = sphi 0, %s192
      %s195 = sphi 0, %s194
      %s209 = sphi 0, %s195
      %s215 = sphi 0, %s217
      %s218 = sphi 0, %s215
      %s219 = sphi 0, %s218
      %s235 = sphi 0, %s219
    $region4: #{tpu_custom_call.1} parent=1 // loop_header_branch
      %25 = sbr.rel (%p23) target = $region8
    $region5: #{tpu_custom_call.1} parent=1 // loop_body
      %s27 = ssub.s32 %s22, 1
      %s28 = ssub.s32 %s22, 2
      %s29 = sadd.s32 %s22, 1
      %s30 = ssub.s32 %s22, %s29
      %p31 = scmp.eq.s32.totalorder %s30, 0
      %s33 = sadd.s32 %s32, 1
      %s34 = scalar_select %p31, %s32, %s33
      %p37 = pneg %p31
      %p38 = scmp.eq.s32.totalorder %s22, 1
      %p39 = por %p37, %p38
      %p40 = scmp.ne.s32.totalorder %s32, %s35
      %p41 = scmp.eq.s32.totalorder %s22, 0
      %p42 = por %p40, %p41
      %p43 = scmp.ne.s32.totalorder %s32, %s35
      %p44 = scmp.eq.s32.totalorder %s27, 1
      %p45 = por %p43, %p44
      %p46 = scmp.ne.s32.totalorder %s35, %s36
      %p47 = scmp.eq.s32.totalorder %s27, 0
      %p48 = por %p46, %p47
      %p49 = scmp.ne.s32.totalorder %s35, %s36
      %p50 = scmp.eq.s32.totalorder %s28, 1
      %p51 = por %p49, %p50
      %p53 = scmp.ne.s32.totalorder %s36, %s52
      %p54 = scmp.eq.s32.totalorder %s28, 0
      %p55 = por %p53, %p54
      %s56 = ssub.s32 %s22, %s29
      %p57 = scmp.eq.s32.totalorder %s56, 0
      %s59 = sadd.s32 %s58, 1
      %s60 = scalar_select %p57, %s58, %s59
      %p63 = pneg %p57
      %p64 = scmp.eq.s32.totalorder %s22, 1
      %p65 = por %p63, %p64
      %p66 = scmp.ne.s32.totalorder %s58, %s61
      %p67 = scmp.eq.s32.totalorder %s22, 0
      %p68 = por %p66, %p67
      %p69 = scmp.ne.s32.totalorder %s58, %s61
      %p70 = scmp.eq.s32.totalorder %s27, 1
      %p71 = por %p69, %p70
      %p72 = scmp.ne.s32.totalorder %s61, %s62
      %p73 = scmp.eq.s32.totalorder %s27, 0
      %p74 = por %p72, %p73
      %p75 = scmp.ne.s32.totalorder %s61, %s62
      %p76 = scmp.eq.s32.totalorder %s28, 1
      %p77 = por %p75, %p76
      %p79 = scmp.ne.s32.totalorder %s62, %s78
      %p80 = scmp.eq.s32.totalorder %s28, 0
      %p81 = por %p79, %p80
      %s82 = ssub.s32 %s22, %s29
      %p83 = scmp.eq.s32.totalorder %s82, 0
      %s85 = sadd.s32 %s84, 1
      %s86 = scalar_select %p83, %s84, %s85
      %p89 = pneg %p83
      %p90 = scmp.eq.s32.totalorder %s22, 1
      %p91 = por %p89, %p90
      %p92 = scmp.ne.s32.totalorder %s84, %s87
      %p93 = scmp.eq.s32.totalorder %s22, 0
      %p94 = por %p92, %p93
      %p95 = scmp.ne.s32.totalorder %s84, %s87
      %p96 = scmp.eq.s32.totalorder %s27, 1
      %p97 = por %p95, %p96
      %p98 = scmp.ne.s32.totalorder %s87, %s88
      %p99 = scmp.eq.s32.totalorder %s27, 0
      %p100 = por %p98, %p99
      %p101 = scmp.ne.s32.totalorder %s87, %s88
      %p102 = scmp.eq.s32.totalorder %s28, 1
      %p103 = por %p101, %p102
      %p105 = scmp.ne.s32.totalorder %s88, %s104
      %p106 = scmp.eq.s32.totalorder %s28, 0
      %p107 = por %p105, %p106
      %s109 = sadd.s32 %s108, 1
      %p112 = scmp.eq.s32.totalorder %s22, 1
      %p113 = scmp.ne.s32.totalorder %s108, %s110
      %p114 = scmp.eq.s32.totalorder %s22, 0
      %p115 = por %p113, %p114
      %p116 = scmp.ne.s32.totalorder %s108, %s110
      %p117 = scmp.eq.s32.totalorder %s27, 1
      %p118 = por %p116, %p117
      %p119 = scmp.ne.s32.totalorder %s110, %s111
      %p120 = scmp.eq.s32.totalorder %s27, 0
      %p121 = por %p119, %p120
      %p122 = scmp.ne.s32.totalorder %s110, %s111
      %p123 = scmp.eq.s32.totalorder %s28, 1
      %p124 = por %p122, %p123
      %p126 = scmp.ne.s32.totalorder %s111, %s125
      %p127 = scmp.eq.s32.totalorder %s28, 0
      %p128 = por %p126, %p127
      %s130 = sadd.s32 %s129, 1
      %p133 = scmp.eq.s32.totalorder %s22, 1
      %p134 = scmp.ne.s32.totalorder %s129, %s131
      %p135 = scmp.eq.s32.totalorder %s22, 0
      %p136 = por %p134, %p135
      %p137 = scmp.ne.s32.totalorder %s129, %s131
      %p138 = scmp.eq.s32.totalorder %s27, 1
      %p139 = por %p137, %p138
      %p140 = scmp.ne.s32.totalorder %s131, %s132
      %p141 = scmp.eq.s32.totalorder %s27, 0
      %p142 = por %p140, %p141
      %p143 = scmp.ne.s32.totalorder %s131, %s132
      %p144 = scmp.eq.s32.totalorder %s28, 1
      %p145 = por %p143, %p144
      %p147 = scmp.ne.s32.totalorder %s132, %s146
      %p148 = scmp.eq.s32.totalorder %s28, 0
      %p149 = por %p147, %p148
      %s151 = sadd.s32 %s150, 1
      %p154 = scmp.eq.s32.totalorder %s22, 1
      %p155 = scmp.ne.s32.totalorder %s150, %s152
      %p156 = scmp.eq.s32.totalorder %s22, 0
      %p157 = por %p155, %p156
      %p158 = scmp.ne.s32.totalorder %s150, %s152
      %p159 = scmp.eq.s32.totalorder %s27, 1
      %p160 = por %p158, %p159
      %p161 = scmp.ne.s32.totalorder %s152, %s153
      %p162 = scmp.eq.s32.totalorder %s27, 0
      %p163 = por %p161, %p162
      %p164 = scmp.ne.s32.totalorder %s152, %s153
      %p165 = scmp.eq.s32.totalorder %s28, 1
      %p166 = por %p164, %p165
      %p168 = scmp.ne.s32.totalorder %s153, %s167
      %p169 = scmp.eq.s32.totalorder %s28, 0
      %p170 = por %p168, %p169
      %s172 = sadd.s32 %s171, 1
      %p175 = scmp.eq.s32.totalorder %s22, 1
      %p176 = scmp.ne.s32.totalorder %s171, %s173
      %p177 = scmp.eq.s32.totalorder %s22, 0
      %p178 = por %p176, %p177
      %p179 = scmp.ne.s32.totalorder %s171, %s173
      %p180 = scmp.eq.s32.totalorder %s27, 1
      %p181 = por %p179, %p180
      %p182 = scmp.ne.s32.totalorder %s173, %s174
      %p183 = scmp.eq.s32.totalorder %s27, 0
      %p184 = por %p182, %p183
      %p185 = scmp.ne.s32.totalorder %s173, %s174
      %p186 = scmp.eq.s32.totalorder %s28, 1
      %p187 = por %p185, %p186
      %p189 = scmp.ne.s32.totalorder %s174, %s188
      %p190 = scmp.eq.s32.totalorder %s28, 0
      %p191 = por %p189, %p190
      %s193 = sadd.s32 %s192, 1
      %p196 = scmp.eq.s32.totalorder %s22, 1
      %p197 = scmp.ne.s32.totalorder %s192, %s194
      %p198 = scmp.eq.s32.totalorder %s22, 0
      %p199 = por %p197, %p198
      %p200 = scmp.ne.s32.totalorder %s192, %s194
      %p201 = scmp.eq.s32.totalorder %s27, 1
      %p202 = por %p200, %p201
      %p203 = scmp.ne.s32.totalorder %s194, %s195
      %p204 = scmp.eq.s32.totalorder %s27, 0
      %p205 = por %p203, %p204
      %p206 = scmp.ne.s32.totalorder %s194, %s195
      %p207 = scmp.eq.s32.totalorder %s28, 1
      %p208 = por %p206, %p207
      %p210 = scmp.ne.s32.totalorder %s195, %s209
      %p211 = scmp.eq.s32.totalorder %s28, 0
      %p212 = por %p210, %p211
      %s213 = ssub.s32 %s22, %s29
      %p214 = scmp.eq.s32.totalorder %s213, 0
      %s216 = sadd.s32 %s215, 1
      %s217 = scalar_select %p214, %s215, %s216
      %p220 = pneg %p214
      %p221 = scmp.eq.s32.totalorder %s22, 1
      %p222 = por %p220, %p221
      %p223 = scmp.ne.s32.totalorder %s215, %s218
      %p224 = scmp.eq.s32.totalorder %s22, 0
      %p225 = por %p223, %p224
      %p226 = scmp.ne.s32.totalorder %s215, %s218
      %p227 = scmp.eq.s32.totalorder %s27, 1
      %p228 = por %p226, %p227
      %p229 = scmp.ne.s32.totalorder %s218, %s219
      %p230 = scmp.eq.s32.totalorder %s27, 0
      %p231 = por %p229, %p230
      %p232 = scmp.ne.s32.totalorder %s218, %s219
      %p233 = scmp.eq.s32.totalorder %s28, 1
      %p234 = por %p232, %p233
      %p236 = scmp.ne.s32.totalorder %s219, %s235
      %p237 = scmp.eq.s32.totalorder %s28, 0
      %p238 = por %p236, %p237
      %p239 = scmp.le.s32.totalorder 1, %s22
      %p240 = scmp.lt.s32.totalorder %s22, 3
      %p241 = pnand %p239, %p240
      %p242 = pneg %p241
      // Predicated region
      $region9: #{tpu_custom_call.1} parent=5 // pred_check
        _
      $region10: #{tpu_custom_call.1} parent=5 // pred_check_branch
        %244 = sbr.rel (%p241) target = $region12
      $region11: #{tpu_custom_call.1} parent=5 // pred_region
        %s245 = ssub.s32 %s22, 1
        // Predicated region
        $region13: #{tpu_custom_call.1} parent=11 // pred_check
          %p246 = pneg %p121
        $region14: #{tpu_custom_call.1} parent=11 // pred_check_branch
          %248 = sbr.rel (%p246) target = $region16
        $region15: #{tpu_custom_call.1} parent=11 // pred_region
          %s250 = ssub.s32 4096, 4096
          %251 = vsyncadd [#allocation6], %s250
          %s252 = sshll.u32 [#allocation5], 4
          %s253 = int_to_ptr.vmem [resolvable:$true] %s252
          %258 = dma.hbm_to_vmem [thread:$0]  %s3, 4096, %s253, [#allocation6], 256, 256, 16
        $region16: #{tpu_custom_call.1} parent=11 // pred_fallthru
          _
        // Predicated region
        $region17: #{tpu_custom_call.1} parent=11 // pred_check
          %p259 = pneg %p142
        $region18: #{tpu_custom_call.1} parent=11 // pred_check_branch
          %261 = sbr.rel (%p259) target = $region20
        $region19: #{tpu_custom_call.1} parent=11 // pred_region
          %s263 = ssub.s32 4096, 4096
          %264 = vsyncadd [#allocation6], %s263
          %s265 = sshll.u32 [#allocation7], 4
          %s266 = int_to_ptr.vmem [resolvable:$true] %s265
          %271 = dma.hbm_to_vmem [thread:$0]  %s4, 4096, %s266, [#allocation6], 256, 256, 16
        $region20: #{tpu_custom_call.1} parent=11 // pred_fallthru
          _
        // Predicated region
        $region21: #{tpu_custom_call.1} parent=11 // pred_check
          %p272 = pneg %p163
        $region22: #{tpu_custom_call.1} parent=11 // pred_check_branch
          %274 = sbr.rel (%p272) target = $region24
        $region23: #{tpu_custom_call.1} parent=11 // pred_region
          _
        $region24: #{tpu_custom_call.1} parent=11 // pred_fallthru
          _
        // Predicated region
        $region25: #{tpu_custom_call.1} parent=11 // pred_check
          %p275 = pneg %p184
        $region26: #{tpu_custom_call.1} parent=11 // pred_check_branch
          %277 = sbr.rel (%p275) target = $region28
        $region27: #{tpu_custom_call.1} parent=11 // pred_region
          %s279 = ssub.s32 4096, 4096
          %280 = vsyncadd [#allocation9], %s279
          %s281 = sshll.u32 [#allocation8], 4
          %s282 = int_to_ptr.vmem [resolvable:$true] %s281
          %287 = dma.hbm_to_vmem [thread:$0]  %s6, 4096, %s282, [#allocation9], 64, 64, 4
        $region28: #{tpu_custom_call.1} parent=11 // pred_fallthru
          _
        // Predicated region
        $region29: #{tpu_custom_call.1} parent=11 // pred_check
          %p288 = pneg %p205
        $region30: #{tpu_custom_call.1} parent=11 // pred_check_branch
          %290 = sbr.rel (%p288) target = $region32
        $region31: #{tpu_custom_call.1} parent=11 // pred_region
          _
        $region32: #{tpu_custom_call.1} parent=11 // pred_fallthru
          _
      $region12: #{tpu_custom_call.1} parent=5 // pred_fallthru
        _
      %p291 = scmp.lt.s32.totalorder %s22, 2
      // Predicated region
      $region33: #{tpu_custom_call.1} parent=5 // pred_check
        %p292 = pneg %p291
      $region34: #{tpu_custom_call.1} parent=5 // pred_check_branch
        %294 = sbr.rel (%p292) target = $region36
      $region35: #{tpu_custom_call.1} parent=5 // pred_region
        // Predicated region
        $region37: #{tpu_custom_call.1} parent=35 // pred_check
          %p295 = pneg %p42
        $region38: #{tpu_custom_call.1} parent=35 // pred_check_branch
          %297 = sbr.rel (%p295) target = $region40
        $region39: #{tpu_custom_call.1} parent=35 // pred_region
          %s298 = smul.u32 2, %s22
          %p299 = scmp.lt.s32.totalorder %s298, 3
          %s300 = scalar_select %p299, %s298, 3
          %s301 = smul.addr %s300, 3
          %s302 = smul.addr %s301, 8
          %s303 = scalar_lea.vmem %s0, %s302
          %s304 = smul.u32 2, %s22
        $region40: #{tpu_custom_call.1} parent=35 // pred_fallthru
          _
        // Predicated region
        $region41: #{tpu_custom_call.1} parent=35 // pred_check
          %p305 = pneg %p68
        $region42: #{tpu_custom_call.1} parent=35 // pred_check_branch
          %307 = sbr.rel (%p305) target = $region44
        $region43: #{tpu_custom_call.1} parent=35 // pred_region
          %s308 = smul.u32 2, %s22
          %p309 = scmp.lt.s32.totalorder %s308, 3
          %s310 = scalar_select %p309, %s308, 3
          %s311 = smul.addr %s310, 3
          %s312 = smul.addr %s311, 8
          %s313 = scalar_lea.vmem %s1, %s312
          %s314 = smul.u32 2, %s22
        $region44: #{tpu_custom_call.1} parent=35 // pred_fallthru
          _
        // Predicated region
        $region45: #{tpu_custom_call.1} parent=35 // pred_check
          %p315 = pneg %p94
        $region46: #{tpu_custom_call.1} parent=35 // pred_check_branch
          %317 = sbr.rel (%p315) target = $region48
        $region47: #{tpu_custom_call.1} parent=35 // pred_region
          %s318 = sand.u32 %s84, 1
          %s319 = scalar_lea.sflag [#allocation3], %s318
          %s320 = sand.u32 %s84, 1
          %s321 = smul.addr %s320, 128
          %s322 = scalar_lea.vmem [#allocation2], %s321
          %s323 = smul.u32 2, %s22
          %s325 = ssub.s32 2048, 2048
          %326 = vsyncadd %s319, %s325
          %s327 = smul.addr %s323, 16
          %s328 = smul.addr %s327, 64
          %s329 = scalar_lea.hbm %s2, %s328
          %s330 = sshll.u32 %s322, 4
          %s331 = int_to_ptr.vmem [resolvable:$true] %s330
          %336 = dma.hbm_to_vmem [thread:$0]  %s329, 2048, %s331, %s319, 64, 64, 4
        $region48: #{tpu_custom_call.1} parent=35 // pred_fallthru
          _
      $region36: #{tpu_custom_call.1} parent=5 // pred_fallthru
        _
      %p337 = scmp.le.s32.totalorder 1, %s22
      %p338 = scmp.lt.s32.totalorder %s22, 3
      %p339 = pnand %p337, %p338
      %p340 = pneg %p339
      // Predicated region
      $region49: #{tpu_custom_call.1} parent=5 // pred_check
        _
      $region50: #{tpu_custom_call.1} parent=5 // pred_check_branch
        %342 = sbr.rel (%p339) target = $region52
      $region51: #{tpu_custom_call.1} parent=5 // pred_region
        %s343 = ssub.s32 %s22, 1
        %s344 = sand.u32 %s87, 1
        %s345 = scalar_lea.sflag [#allocation3], %s344
        %s346 = sand.u32 %s87, 1
        %s347 = smul.addr %s346, 128
        %s348 = scalar_lea.vmem [#allocation2], %s347
        // Predicated region
        $region53: #{tpu_custom_call.1} parent=51 // pred_check
          %p349 = pneg %p100
        $region54: #{tpu_custom_call.1} parent=51 // pred_check_branch
          %351 = sbr.rel (%p349) target = $region56
        $region55: #{tpu_custom_call.1} parent=51 // pred_region
          %352 = dma.done %s345, 2048
        $region56: #{tpu_custom_call.1} parent=51 // pred_fallthru
          _
        // Predicated region
        $region57: #{tpu_custom_call.1} parent=51 // pred_check
          %p353 = pneg %p121
        $region58: #{tpu_custom_call.1} parent=51 // pred_check_branch
          %355 = sbr.rel (%p353) target = $region60
        $region59: #{tpu_custom_call.1} parent=51 // pred_region
          %356 = dma.done [#allocation6], 4096
        $region60: #{tpu_custom_call.1} parent=51 // pred_fallthru
          _
        // Predicated region
        $region61: #{tpu_custom_call.1} parent=51 // pred_check
          %p357 = pneg %p142
        $region62: #{tpu_custom_call.1} parent=51 // pred_check_branch
          %359 = sbr.rel (%p357) target = $region64
        $region63: #{tpu_custom_call.1} parent=51 // pred_region
          %360 = dma.done [#allocation6], 4096
        $region64: #{tpu_custom_call.1} parent=51 // pred_fallthru
          _
        // Predicated region
        $region65: #{tpu_custom_call.1} parent=51 // pred_check
          %p361 = pneg %p184
        $region66: #{tpu_custom_call.1} parent=51 // pred_check_branch
          %363 = sbr.rel (%p361) target = $region68
        $region67: #{tpu_custom_call.1} parent=51 // pred_region
          %364 = dma.done [#allocation9], 4096
        $region68: #{tpu_custom_call.1} parent=51 // pred_fallthru
          _
        %s365 = smul.u32 2, %s27
        %p366 = scmp.lt.s32.totalorder %s365, 3
        %s367 = scalar_select %p366, %s365, 3
        %s368 = smul.addr %s367, 3
        %s369 = smul.addr %s368, 8
        %s370 = scalar_lea.vmem %s0, %s369
        %p371 = pneg %p48
        %p372 = pneg %p45
        %s373 = smul.u32 2, %s27
        %p374 = scmp.lt.s32.totalorder %s373, 3
        %s375 = scalar_select %p374, %s373, 3
        %s376 = smul.addr %s375, 3
        %s377 = smul.addr %s376, 8
        %s378 = scalar_lea.vmem %s1, %s377
        %p379 = pneg %p74
        %p380 = pneg %p71
        %s381 = sand.u32 %s87, 1
        %s382 = scalar_lea.sflag [#allocation3], %s381
        %s383 = sand.u32 %s87, 1
        %s384 = smul.addr %s383, 128
        %s385 = scalar_lea.vmem [#allocation2], %s384
        %p386 = pneg %p100
        %p387 = pneg %p97
        %p388 = pneg %p121
        %p389 = pneg %p118
        %p390 = pneg %p142
        %p391 = pneg %p139
        %p392 = pneg %p163
        %p393 = pneg %p160
        %p394 = pneg %p184
        %p395 = pneg %p181
        %p396 = pneg %p205
        %p397 = pneg %p202
        %p398 = pneg %p231
        %p399 = pneg %p228
        %s400 = sand.u32 %s218, 1
        %s401 = scalar_lea.sflag [#allocation4], %s400
        %s402 = sand.u32 %s218, 1
        %s403 = smul.addr %s402, 32
        %s404 = scalar_lea.vmem [#allocation10], %s403
        %s405 = smul.u32 2, %s27
        %p406 = scmp.lt.s32.totalorder %s405, 3
        %s407 = scalar_select %p406, %s405, 3
        %s408 = smul.addr %s407, 3
        %s409 = smul.addr %s408, 8
        %s410 = scalar_lea.vmem %s0, %s409
        %s411 = smul.u32 2, %s27
        %s412 = smul.u32 2, %s27
        %p413 = scmp.lt.s32.totalorder %s412, 3
        %s414 = scalar_select %p413, %s412, 3
        %s415 = smul.addr %s414, 3
        %s416 = smul.addr %s415, 8
        %s417 = scalar_lea.vmem %s1, %s416
        %s418 = smul.u32 2, %s27
        %s419 = smul.u32 2, %s27
        %s420 = smul.u32 2, %s27
        %v422 = vld [vmem:[%s410] sm:$0xff]
        %v423 = vld [vmem:[%s410 + $0x8] sm:$0xff]
        %v424 = vld [vmem:[%s410 + $0x10] sm:$0xff]
        %v425 = vld [vmem:[%s410 + $0x18] sm:$0xff]
        %v426 = vld [vmem:[%s410 + $0x20] sm:$0xff]
        %v427 = vld [vmem:[%s410 + $0x28] sm:$0xff]
        %v428 = vld [vmem:[%s417] sm:$0xff]
        %v429 = vld [vmem:[%s417 + $0x8] sm:$0xff]
        %v430 = vld [vmem:[%s417 + $0x10] sm:$0xff]
        %v431 = vld [vmem:[%s417 + $0x18] sm:$0xff]
        %v432 = vld [vmem:[%s417 + $0x20] sm:$0xff]
        %v433 = vld [vmem:[%s417 + $0x28] sm:$0xff]
        %v434 = vlaneseq
        %v435 = vand.u32 %v434, 127
        %436 = vset.pattern.permute.xlu0 0
        %437 = vperm.xlu0 %436, %v422
        %v438 = vpop.permute.xlu0 %437
        %439 = vset.pattern.permute.xlu0 0
        %440 = vperm.xlu0 %439, %v423
        %v441 = vpop.permute.xlu0 %440
        %442 = vset.pattern.permute.xlu0 0
        %443 = vperm.xlu0 %442, %v424
        %v444 = vpop.permute.xlu0 %443
        %445 = vset.pattern.permute.xlu0 0
        %446 = vperm.xlu0 %445, %v425
        %v447 = vpop.permute.xlu0 %446
        %448 = vset.pattern.permute.xlu0 0
        %449 = vperm.xlu0 %448, %v426
        %v450 = vpop.permute.xlu0 %449
        %451 = vset.pattern.permute.xlu0 0
        %452 = vperm.xlu0 %451, %v427
        %v453 = vpop.permute.xlu0 %452
        %vm454 = vcmp.ge.s32.totalorder %v435, %v438
        %vm455 = vcmp.ge.s32.totalorder %v435, %v441
        %vm456 = vcmp.ge.s32.totalorder %v435, %v444
        %vm457 = vcmp.ge.s32.totalorder %v435, %v447
        %vm458 = vcmp.ge.s32.totalorder %v435, %v450
        %vm459 = vcmp.ge.s32.totalorder %v435, %v453
        %460 = vset.pattern.permute.xlu0 0
        %461 = vperm.xlu0 %460, %v428
        %v462 = vpop.permute.xlu0 %461
        %463 = vset.pattern.permute.xlu0 0
        %464 = vperm.xlu0 %463, %v429
        %v465 = vpop.permute.xlu0 %464
        %466 = vset.pattern.permute.xlu0 0
        %467 = vperm.xlu0 %466, %v430
        %v468 = vpop.permute.xlu0 %467
        %469 = vset.pattern.permute.xlu0 0
        %470 = vperm.xlu0 %469, %v431
        %v471 = vpop.permute.xlu0 %470
        %472 = vset.pattern.permute.xlu0 0
        %473 = vperm.xlu0 %472, %v432
        %v474 = vpop.permute.xlu0 %473
        %475 = vset.pattern.permute.xlu0 0
        %476 = vperm.xlu0 %475, %v433
        %v477 = vpop.permute.xlu0 %476
        %vm478 = vcmp.lt.s32.totalorder %v435, %v462
        %vm479 = vcmp.lt.s32.totalorder %v435, %v465
        %vm480 = vcmp.lt.s32.totalorder %v435, %v468
        %vm481 = vcmp.lt.s32.totalorder %v435, %v471
        %vm482 = vcmp.lt.s32.totalorder %v435, %v474
        %vm483 = vcmp.lt.s32.totalorder %v435, %v477
        %vm484 = vmand %vm454, %vm478
        %vm485 = vmand %vm455, %vm479
        %vm486 = vmand %vm456, %vm480
        %vm487 = vmand %vm457, %vm481
        %vm488 = vmand %vm458, %vm482
        %vm489 = vmand %vm459, %vm483
        %v490 = vsel %vm484, 1, 0
        %v491 = vsel %vm485, 1, 0
        %v492 = vsel %vm486, 1, 0
        %v493 = vsel %vm487, 1, 0
        %v494 = vsel %vm488, 1, 0
        %v495 = vsel %vm489, 1, 0
        %v496 = vcvt.s32.f32 %v490
        %v497 = vcvt.s32.f32 %v491
        %v498 = vcvt.s32.f32 %v492
        %v499 = vcvt.s32.f32 %v493
        %v500 = vcvt.s32.f32 %v494
        %v501 = vcvt.s32.f32 %v495
        %v502 = vpack.c.bf16 %v497, %v496
        %v503 = vpack.c.bf16 %v498, %v498
        %v504 = vpack.c.bf16 %v500, %v499
        %v505 = vpack.c.bf16 %v501, %v501
        %v506 = vsub.s32 %v428, %v422
        %v507 = vsub.s32 %v429, %v423
        %v508 = vsub.s32 %v430, %v424
        %v509 = vsub.s32 %v431, %v425
        %v510 = vsub.s32 %v432, %v426
        %v511 = vsub.s32 %v433, %v427
        %vm512 = vcmp.gt.s32.totalorder %v506, 1
        %v513 = vsel %vm512, %v506, 1
        %vm514 = vcmp.gt.s32.totalorder %v507, 1
        %v515 = vsel %vm514, %v507, 1
        %vm516 = vcmp.gt.s32.totalorder %v508, 1
        %v517 = vsel %vm516, %v508, 1
        %vm518 = vcmp.gt.s32.totalorder %v509, 1
        %v519 = vsel %vm518, %v509, 1
        %vm520 = vcmp.gt.s32.totalorder %v510, 1
        %v521 = vsel %vm520, %v510, 1
        %vm522 = vcmp.gt.s32.totalorder %v511, 1
        %v523 = vsel %vm522, %v511, 1
        %v524 = vcvt.s32.f32 %v513
        %v525 = vcvt.s32.f32 %v515
        %v526 = vcvt.s32.f32 %v517
        %v527 = vcvt.s32.f32 %v519
        %v528 = vcvt.s32.f32 %v521
        %v529 = vcvt.s32.f32 %v523
        %v530 = vrcp.pop %v524
        %v531 = vmul.f32 1.0, %v530
        %v532 = vrcp.pop %v525
        %v533 = vmul.f32 1.0, %v532
        %v534 = vrcp.pop %v526
        %v535 = vmul.f32 1.0, %v534
        %v536 = vrcp.pop %v527
        %v537 = vmul.f32 1.0, %v536
        %v538 = vrcp.pop %v528
        %v539 = vmul.f32 1.0, %v538
        %v540 = vrcp.pop %v529
        %v541 = vmul.f32 1.0, %v540
        %v542 = vld [vmem:[%s348] sm:$0xf]
        %v543 = vld [vmem:[%s348 + $0x4] sm:$0xf]
        %v544 = vld [vmem:[%s348 + $0x8] sm:$0xf]
        %v545 = vld [vmem:[%s348 + $0xc] sm:$0xf]
        %v546 = vld [vmem:[%s348 + $0x10] sm:$0xf]
        %v547 = vld [vmem:[%s348 + $0x14] sm:$0xf]
        %v548 = vld [vmem:[%s348 + $0x18] sm:$0xf]
        %v549 = vld [vmem:[%s348 + $0x1c] sm:$0xf]
        %v550 = vld [vmem:[%s348 + $0x20] sm:$0xf]
        %v551 = vld [vmem:[%s348 + $0x24] sm:$0xf]
        %v552 = vld [vmem:[%s348 + $0x28] sm:$0xf]
        %v553 = vld [vmem:[%s348 + $0x2c] sm:$0xf]
        %v554 = vld [vmem:[%s348 + $0x30] sm:$0xf]
        %v555 = vld [vmem:[%s348 + $0x34] sm:$0xf]
        %v556 = vld [vmem:[%s348 + $0x38] sm:$0xf]
        %v557 = vld [vmem:[%s348 + $0x3c] sm:$0xf]
        %v558 = vld [vmem:[%s348 + $0x40] sm:$0xf]
        %v559 = vld [vmem:[%s348 + $0x44] sm:$0xf]
        %v560 = vld [vmem:[%s348 + $0x48] sm:$0xf]
        %v561 = vld [vmem:[%s348 + $0x4c] sm:$0xf]
        %v562 = vld [vmem:[%s348 + $0x50] sm:$0xf]
        %v563 = vld [vmem:[%s348 + $0x54] sm:$0xf]
        %v564 = vld [vmem:[%s348 + $0x58] sm:$0xf]
        %v565 = vld [vmem:[%s348 + $0x5c] sm:$0xf]
        %v566 = vld [vmem:[%s348 + $0x60] sm:$0xf]
        %v567 = vld [vmem:[%s348 + $0x64] sm:$0xf]
        %v568 = vld [vmem:[%s348 + $0x68] sm:$0xf]
        %v569 = vld [vmem:[%s348 + $0x6c] sm:$0xf]
        %v570 = vld [vmem:[%s348 + $0x70] sm:$0xf]
        %v571 = vld [vmem:[%s348 + $0x74] sm:$0xf]
        %v572 = vld [vmem:[%s348 + $0x78] sm:$0xf]
        %v573 = vld [vmem:[%s348 + $0x7c] sm:$0xf]
        %v590 = vunpack.c.l.b16 %v542
        %v591 = vunpack.c.l.b16 %v543
        %v592 = vunpack.c.l.b16 %v544
        %v593 = vunpack.c.l.b16 %v545
        %v594 = vunpack.c.l.b16 %v546
        %v595 = vunpack.c.l.b16 %v547
        %v596 = vunpack.c.l.b16 %v548
        %v597 = vunpack.c.l.b16 %v549
        %v598 = vunpack.c.l.b16 %v550
        %v599 = vunpack.c.l.b16 %v551
        %v600 = vunpack.c.l.b16 %v552
        %v601 = vunpack.c.l.b16 %v553
        %v602 = vunpack.c.l.b16 %v554
        %v603 = vunpack.c.l.b16 %v555
        %v604 = vunpack.c.l.b16 %v556
        %v605 = vunpack.c.l.b16 %v557
        %v606 = vpack.c.b16 %v591, %v590
        %v607 = vpack.c.b16 %v593, %v592
        %v608 = vpack.c.b16 %v595, %v594
        %v609 = vpack.c.b16 %v597, %v596
        %v610 = vpack.c.b16 %v599, %v598
        %v611 = vpack.c.b16 %v601, %v600
        %v612 = vpack.c.b16 %v603, %v602
        %v613 = vpack.c.b16 %v605, %v604
        %622 = vmatprep.subr.bf16.mxu0 0
        %623 = vmatpush1.bf16.msra.mxu0 %v606
        %624 = vmatprep.subr.bf16.mxu0 0
        %625 = vmatpush1.bf16.msra.mxu0 %v607
        %626 = vmatprep.subr.bf16.mxu0 0
        %627 = vmatpush1.bf16.msra.mxu0 %v608
        %628 = vmatprep.subr.bf16.mxu0 0
        %629 = vmatpush1.bf16.msra.mxu0 %v609
        %630 = vmatprep.subr.bf16.mxu0 0
        %631 = vmatpush1.bf16.msra.mxu0 %v610
        %632 = vmatprep.subr.bf16.mxu0 0
        %633 = vmatpush1.bf16.msra.mxu0 %v611
        %634 = vmatprep.subr.bf16.mxu0 0
        %635 = vmatpush1.bf16.msra.mxu0 %v612
        %636 = vmatprep.subr.bf16.mxu0 0
        %637 = vmatpush1.bf16.msra.mxu0 %v613
        %638 = vmatprep.subr.bf16.mxu0 0
        %639 = vmatpush1.bf16.msra.mxu0 0
        %640 = vmatprep.subr.bf16.mxu0 0
        %641 = vmatpush1.bf16.msra.mxu0 0
        %642 = vmatprep.subr.bf16.mxu0 0
        %643 = vmatpush1.bf16.msra.mxu0 0
        %644 = vmatprep.subr.bf16.mxu0 0
        %645 = vmatpush1.bf16.msra.mxu0 0
        %646 = vmatprep.subr.bf16.mxu0 0
        %647 = vmatpush1.bf16.msra.mxu0 0
        %648 = vmatprep.subr.bf16.mxu0 0
        %649 = vmatpush1.bf16.msra.mxu0 0
        %650 = vmatprep.subr.bf16.mxu0 0
        %651 = vmatpush1.bf16.msra.mxu0 0
        %652 = vmatprep.subr.bf16.mxu0 0
        %653 = vmatpush1.bf16.msra.mxu0 0
        %654 = vmatprep.mubr.bf16.mxu0 0
        %655 = vmatmul.mubr.bf16.gmra.mrb[0].mxu0 %v502
        %v656 = vpop.f32.mrb[0].mxu0
        %v657 = vadd.f32 0.0, %v656
        %v658 = vpop.f32.mrb[0].mxu0
        %v659 = vpop.f32.mrb[0].mxu0
        %v660 = vadd.f32 0.0, %v659
        %v661 = vpop.f32.mrb[0].mxu0
        %662 = vmatprep.mubr.bf16.mxu0 0
        %663 = vmatmul.mubr.bf16.gmra.mrb[0].mxu0 %v503
        %v664 = vpop.f32.mrb[0].mxu0
        %v665 = vadd.f32 0.0, %v664
        %v666 = vpop.f32.mrb[0].mxu0
        %v667 = vpop.f32.mrb[0].mxu0
        %v668 = vpop.f32.mrb[0].mxu0
        %669 = vdwg.mxu0
        %v686 = vunpack.c.l.b16 %v558
        %v687 = vunpack.c.l.b16 %v559
        %v688 = vunpack.c.l.b16 %v560
        %v689 = vunpack.c.l.b16 %v561
        %v690 = vunpack.c.l.b16 %v562
        %v691 = vunpack.c.l.b16 %v563
        %v692 = vunpack.c.l.b16 %v564
        %v693 = vunpack.c.l.b16 %v565
        %v694 = vunpack.c.l.b16 %v566
        %v695 = vunpack.c.l.b16 %v567
        %v696 = vunpack.c.l.b16 %v568
        %v697 = vunpack.c.l.b16 %v569
        %v698 = vunpack.c.l.b16 %v570
        %v699 = vunpack.c.l.b16 %v571
        %v700 = vunpack.c.l.b16 %v572
        %v701 = vunpack.c.l.b16 %v573
        %v702 = vpack.c.b16 %v687, %v686
        %v703 = vpack.c.b16 %v689, %v688
        %v704 = vpack.c.b16 %v691, %v690
        %v705 = vpack.c.b16 %v693, %v692
        %v706 = vpack.c.b16 %v695, %v694
        %v707 = vpack.c.b16 %v697, %v696
        %v708 = vpack.c.b16 %v699, %v698
        %v709 = vpack.c.b16 %v701, %v700
        %718 = vmatprep.subr.bf16.mxu0 0
        %719 = vmatpush1.bf16.msra.mxu0 %v702
        %720 = vmatprep.subr.bf16.mxu0 0
        %721 = vmatpush1.bf16.msra.mxu0 %v703
        %722 = vmatprep.subr.bf16.mxu0 0
        %723 = vmatpush1.bf16.msra.mxu0 %v704
        %724 = vmatprep.subr.bf16.mxu0 0
        %725 = vmatpush1.bf16.msra.mxu0 %v705
        %726 = vmatprep.subr.bf16.mxu0 0
        %727 = vmatpush1.bf16.msra.mxu0 %v706
        %728 = vmatprep.subr.bf16.mxu0 0
        %729 = vmatpush1.bf16.msra.mxu0 %v707
        %730 = vmatprep.subr.bf16.mxu0 0
        %731 = vmatpush1.bf16.msra.mxu0 %v708
        %732 = vmatprep.subr.bf16.mxu0 0
        %733 = vmatpush1.bf16.msra.mxu0 %v709
        %734 = vmatprep.subr.bf16.mxu0 0
        %735 = vmatpush1.bf16.msra.mxu0 0
        %736 = vmatprep.subr.bf16.mxu0 0
        %737 = vmatpush1.bf16.msra.mxu0 0
        %738 = vmatprep.subr.bf16.mxu0 0
        %739 = vmatpush1.bf16.msra.mxu0 0
        %740 = vmatprep.subr.bf16.mxu0 0
        %741 = vmatpush1.bf16.msra.mxu0 0
        %742 = vmatprep.subr.bf16.mxu0 0
        %743 = vmatpush1.bf16.msra.mxu0 0
        %744 = vmatprep.subr.bf16.mxu0 0
        %745 = vmatpush1.bf16.msra.mxu0 0
        %746 = vmatprep.subr.bf16.mxu0 0
        %747 = vmatpush1.bf16.msra.mxu0 0
        %748 = vmatprep.subr.bf16.mxu0 0
        %749 = vmatpush1.bf16.msra.mxu0 0
        %750 = vmatprep.mubr.bf16.mxu0 0
        %751 = vmatmul.mubr.bf16.gmra.mrb[0].mxu0 %v504
        %v752 = vpop.f32.mrb[0].mxu0
        %v753 = vadd.f32 0.0, %v752
        %v754 = vpop.f32.mrb[0].mxu0
        %v755 = vpop.f32.mrb[0].mxu0
        %v756 = vadd.f32 0.0, %v755
        %v757 = vpop.f32.mrb[0].mxu0
        %758 = vmatprep.mubr.bf16.mxu0 0
        %759 = vmatmul.mubr.bf16.gmra.mrb[0].mxu0 %v505
        %v760 = vpop.f32.mrb[0].mxu0
        %v761 = vadd.f32 0.0, %v760
        %v762 = vpop.f32.mrb[0].mxu0
        %v763 = vpop.f32.mrb[0].mxu0
        %v764 = vpop.f32.mrb[0].mxu0
        %765 = vdwg.mxu0
        %767 = vset.pattern.permute.xlu0 0
        %768 = vperm.xlu0 %767, %v531
        %v769 = vpop.permute.xlu0 %768
        %772 = vset.pattern.permute.xlu0 0
        %773 = vperm.xlu0 %772, %v533
        %v774 = vpop.permute.xlu0 %773
        %777 = vset.pattern.permute.xlu0 0
        %778 = vperm.xlu0 %777, %v535
        %v779 = vpop.permute.xlu0 %778
        %782 = vset.pattern.permute.xlu0 0
        %783 = vperm.xlu0 %782, %v537
        %v784 = vpop.permute.xlu0 %783
        %787 = vset.pattern.permute.xlu0 0
        %788 = vperm.xlu0 %787, %v539
        %v789 = vpop.permute.xlu0 %788
        %792 = vset.pattern.permute.xlu0 0
        %793 = vperm.xlu0 %792, %v541
        %v794 = vpop.permute.xlu0 %793
        %v796 = vmul.f32 %v657, %v769
        %v797 = vmul.f32 %v660, %v774
        %v798 = vmul.f32 %v665, %v779
        %v799 = vmul.f32 %v753, %v784
        %v800 = vmul.f32 %v756, %v789
        %v801 = vmul.f32 %v761, %v794
        %v802 = vpack.c.bf16 %v797, %v796
        %v803 = vpack.c.bf16 %v800, %v799
        %v804 = vpack.c.bf16 %v798, %v798
        %v805 = vpack.c.bf16 %v801, %v801
        %v806 = vld [vmem:[#allocation5] sm:$0xff]
        %v807 = vld [vmem:[#allocation5 + $0x8] sm:$0xff]
        %v808 = vld [vmem:[#allocation5 + $0x10] sm:$0xff]
        %v809 = vld [vmem:[#allocation5 + $0x18] sm:$0xff]
        %v810 = vld [vmem:[#allocation5 + $0x20] sm:$0xff]
        %v811 = vld [vmem:[#allocation5 + $0x28] sm:$0xff]
        %v812 = vld [vmem:[#allocation5 + $0x30] sm:$0xff]
        %v813 = vld [vmem:[#allocation5 + $0x38] sm:$0xff]
        %v814 = vld [vmem:[#allocation5 + $0x40] sm:$0xff]
        %v815 = vld [vmem:[#allocation5 + $0x48] sm:$0xff]
        %v816 = vld [vmem:[#allocation5 + $0x50] sm:$0xff]
        %v817 = vld [vmem:[#allocation5 + $0x58] sm:$0xff]
        %v818 = vld [vmem:[#allocation5 + $0x60] sm:$0xff]
        %v819 = vld [vmem:[#allocation5 + $0x68] sm:$0xff]
        %v820 = vld [vmem:[#allocation5 + $0x70] sm:$0xff]
        %v821 = vld [vmem:[#allocation5 + $0x78] sm:$0xff]
        %v822 = vld [vmem:[#allocation5 + $0x80] sm:$0xff]
        %v823 = vld [vmem:[#allocation5 + $0x88] sm:$0xff]
        %v824 = vld [vmem:[#allocation5 + $0x90] sm:$0xff]
        %v825 = vld [vmem:[#allocation5 + $0x98] sm:$0xff]
        %v826 = vld [vmem:[#allocation5 + $0xa0] sm:$0xff]
        %v827 = vld [vmem:[#allocation5 + $0xa8] sm:$0xff]
        %v828 = vld [vmem:[#allocation5 + $0xb0] sm:$0xff]
        %v829 = vld [vmem:[#allocation5 + $0xb8] sm:$0xff]
        %v830 = vld [vmem:[#allocation5 + $0xc0] sm:$0xff]
        %v831 = vld [vmem:[#allocation5 + $0xc8] sm:$0xff]
        %v832 = vld [vmem:[#allocation5 + $0xd0] sm:$0xff]
        %v833 = vld [vmem:[#allocation5 + $0xd8] sm:$0xff]
        %v834 = vld [vmem:[#allocation5 + $0xe0] sm:$0xff]
        %v835 = vld [vmem:[#allocation5 + $0xe8] sm:$0xff]
        %v836 = vld [vmem:[#allocation5 + $0xf0] sm:$0xff]
        %v837 = vld [vmem:[#allocation5 + $0xf8] sm:$0xff]
        %v870 = vunpack.c.l.b16 %v806
        %v871 = vunpack.c.h.b16 %v806
        %v872 = vunpack.c.l.b16 %v807
        %v873 = vunpack.c.h.b16 %v807
        %v874 = vunpack.c.l.b16 %v808
        %v875 = vunpack.c.h.b16 %v808
        %v876 = vunpack.c.l.b16 %v809
        %v877 = vunpack.c.h.b16 %v809
        %v878 = vunpack.c.l.b16 %v810
        %v879 = vunpack.c.h.b16 %v810
        %v880 = vunpack.c.l.b16 %v811
        %v881 = vunpack.c.h.b16 %v811
        %v882 = vunpack.c.l.b16 %v812
        %v883 = vunpack.c.h.b16 %v812
        %v884 = vunpack.c.l.b16 %v813
        %v885 = vunpack.c.h.b16 %v813
        %v886 = vunpack.c.l.b16 %v814
        %v887 = vunpack.c.h.b16 %v814
        %v888 = vunpack.c.l.b16 %v815
        %v889 = vunpack.c.h.b16 %v815
        %v890 = vunpack.c.l.b16 %v816
        %v891 = vunpack.c.h.b16 %v816
        %v892 = vunpack.c.l.b16 %v817
        %v893 = vunpack.c.h.b16 %v817
        %v894 = vunpack.c.l.b16 %v818
        %v895 = vunpack.c.h.b16 %v818
        %v896 = vunpack.c.l.b16 %v819
        %v897 = vunpack.c.h.b16 %v819
        %v898 = vunpack.c.l.b16 %v820
        %v899 = vunpack.c.h.b16 %v820
        %v900 = vunpack.c.l.b16 %v821
        %v901 = vunpack.c.h.b16 %v821
        %v902 = vunpack.c.l.b16 %v822
        %v903 = vunpack.c.h.b16 %v822
        %v904 = vunpack.c.l.b16 %v823
        %v905 = vunpack.c.h.b16 %v823
        %v906 = vunpack.c.l.b16 %v824
        %v907 = vunpack.c.h.b16 %v824
        %v908 = vunpack.c.l.b16 %v825
        %v909 = vunpack.c.h.b16 %v825
        %v910 = vunpack.c.l.b16 %v826
        %v911 = vunpack.c.h.b16 %v826
        %v912 = vunpack.c.l.b16 %v827
        %v913 = vunpack.c.h.b16 %v827
        %v914 = vunpack.c.l.b16 %v828
        %v915 = vunpack.c.h.b16 %v828
        %v916 = vunpack.c.l.b16 %v829
        %v917 = vunpack.c.h.b16 %v829
        %v918 = vunpack.c.l.b16 %v830
        %v919 = vunpack.c.h.b16 %v830
        %v920 = vunpack.c.l.b16 %v831
        %v921 = vunpack.c.h.b16 %v831
        %v922 = vunpack.c.l.b16 %v832
        %v923 = vunpack.c.h.b16 %v832
        %v924 = vunpack.c.l.b16 %v833
        %v925 = vunpack.c.h.b16 %v833
        %v926 = vunpack.c.l.b16 %v834
        %v927 = vunpack.c.h.b16 %v834
        %v928 = vunpack.c.l.b16 %v835
        %v929 = vunpack.c.h.b16 %v835
        %v930 = vunpack.c.l.b16 %v836
        %v931 = vunpack.c.h.b16 %v836
        %v932 = vunpack.c.l.b16 %v837
        %v933 = vunpack.c.h.b16 %v837
        %v934 = vpack.c.b16 %v874, %v870
        %v935 = vpack.c.b16 %v875, %v871
        %v936 = vpack.c.b16 %v876, %v872
        %v937 = vpack.c.b16 %v877, %v873
        %v938 = vpack.c.b16 %v882, %v878
        %v939 = vpack.c.b16 %v883, %v879
        %v940 = vpack.c.b16 %v884, %v880
        %v941 = vpack.c.b16 %v885, %v881
        %v942 = vpack.c.b16 %v890, %v886
        %v943 = vpack.c.b16 %v891, %v887
        %v944 = vpack.c.b16 %v892, %v888
        %v945 = vpack.c.b16 %v893, %v889
        %v946 = vpack.c.b16 %v898, %v894
        %v947 = vpack.c.b16 %v899, %v895
        %v948 = vpack.c.b16 %v900, %v896
        %v949 = vpack.c.b16 %v901, %v897
        %v950 = vpack.c.b16 %v906, %v902
        %v951 = vpack.c.b16 %v907, %v903
        %v952 = vpack.c.b16 %v908, %v904
        %v953 = vpack.c.b16 %v909, %v905
        %v954 = vpack.c.b16 %v914, %v910
        %v955 = vpack.c.b16 %v915, %v911
        %v956 = vpack.c.b16 %v916, %v912
        %v957 = vpack.c.b16 %v917, %v913
        %v958 = vpack.c.b16 %v922, %v918
        %v959 = vpack.c.b16 %v923, %v919
        %v960 = vpack.c.b16 %v924, %v920
        %v961 = vpack.c.b16 %v925, %v921
        %v962 = vpack.c.b16 %v930, %v926
        %v963 = vpack.c.b16 %v931, %v927
        %v964 = vpack.c.b16 %v932, %v928
        %v965 = vpack.c.b16 %v933, %v929
        %998 = vmatprep.subr.bf16.mxu0 %v935
        %999 = vmatpush1.bf16.msra.mxu0 %v934
        %1000 = vmatprep.subr.bf16.mxu0 %v939
        %1001 = vmatpush1.bf16.msra.mxu0 %v938
        %1002 = vmatprep.subr.bf16.mxu0 %v943
        %1003 = vmatpush1.bf16.msra.mxu0 %v942
        %1004 = vmatprep.subr.bf16.mxu0 %v947
        %1005 = vmatpush1.bf16.msra.mxu0 %v946
        %1006 = vmatprep.subr.bf16.mxu0 %v951
        %1007 = vmatpush1.bf16.msra.mxu0 %v950
        %1008 = vmatprep.subr.bf16.mxu0 %v955
        %1009 = vmatpush1.bf16.msra.mxu0 %v954
        %1010 = vmatprep.subr.bf16.mxu0 %v959
        %1011 = vmatpush1.bf16.msra.mxu0 %v958
        %1012 = vmatprep.subr.bf16.mxu0 %v963
        %1013 = vmatpush1.bf16.msra.mxu0 %v962
        %1014 = vmatprep.subr.bf16.mxu0 0
        %1015 = vmatpush1.bf16.msra.mxu0 0
        %1016 = vmatprep.subr.bf16.mxu0 0
        %1017 = vmatpush1.bf16.msra.mxu0 0
        %1018 = vmatprep.subr.bf16.mxu0 0
        %1019 = vmatpush1.bf16.msra.mxu0 0
        %1020 = vmatprep.subr.bf16.mxu0 0
        %1021 = vmatpush1.bf16.msra.mxu0 0
        %1022 = vmatprep.subr.bf16.mxu0 0
        %1023 = vmatpush1.bf16.msra.mxu0 0
        %1024 = vmatprep.subr.bf16.mxu0 0
        %1025 = vmatpush1.bf16.msra.mxu0 0
        %1026 = vmatprep.subr.bf16.mxu0 0
        %1027 = vmatpush1.bf16.msra.mxu0 0
        %1028 = vmatprep.subr.bf16.mxu0 0
        %1029 = vmatpush1.bf16.msra.mxu0 0
        %1030 = vmatprep.mubr.bf16.mxu0 0
        %1031 = vmatmul.mubr.bf16.gmra.mrb[0].mxu0 %v802
        %v1032 = vpop.f32.mrb[0].mxu0
        %v1033 = vadd.f32 0.0, %v1032
        %v1034 = vpop.f32.mrb[0].mxu0
        %v1035 = vadd.f32 0.0, %v1034
        %v1036 = vpop.f32.mrb[0].mxu0
        %v1037 = vadd.f32 0.0, %v1036
        %v1038 = vpop.f32.mrb[0].mxu0
        %v1039 = vadd.f32 0.0, %v1038
        %1040 = vmatprep.mubr.bf16.mxu0 0
        %1041 = vmatmul.mubr.bf16.gmra.mrb[0].mxu0 %v803
        %v1042 = vpop.f32.mrb[0].mxu0
        %v1043 = vadd.f32 0.0, %v1042
        %v1044 = vpop.f32.mrb[0].mxu0
        %v1045 = vadd.f32 0.0, %v1044
        %v1046 = vpop.f32.mrb[0].mxu0
        %v1047 = vadd.f32 0.0, %v1046
        %v1048 = vpop.f32.mrb[0].mxu0
        %v1049 = vadd.f32 0.0, %v1048
        %1050 = vdwg.mxu0
        %1051 = vmatprep.subr.bf16.mxu0 %v937
        %1052 = vmatpush1.bf16.msra.mxu0 %v936
        %1053 = vmatprep.subr.bf16.mxu0 %v941
        %1054 = vmatpush1.bf16.msra.mxu0 %v940
        %1055 = vmatprep.subr.bf16.mxu0 %v945
        %1056 = vmatpush1.bf16.msra.mxu0 %v944
        %1057 = vmatprep.subr.bf16.mxu0 %v949
        %1058 = vmatpush1.bf16.msra.mxu0 %v948
        %1059 = vmatprep.subr.bf16.mxu0 %v953
        %1060 = vmatpush1.bf16.msra.mxu0 %v952
        %1061 = vmatprep.subr.bf16.mxu0 %v957
        %1062 = vmatpush1.bf16.msra.mxu0 %v956
        %1063 = vmatprep.subr.bf16.mxu0 %v961
        %1064 = vmatpush1.bf16.msra.mxu0 %v960
        %1065 = vmatprep.subr.bf16.mxu0 %v965
        %1066 = vmatpush1.bf16.msra.mxu0 %v964
        %1067 = vmatprep.subr.bf16.mxu0 0
        %1068 = vmatpush1.bf16.msra.mxu0 0
        %1069 = vmatprep.subr.bf16.mxu0 0
        %1070 = vmatpush1.bf16.msra.mxu0 0
        %1071 = vmatprep.subr.bf16.mxu0 0
        %1072 = vmatpush1.bf16.msra.mxu0 0
        %1073 = vmatprep.subr.bf16.mxu0 0
        %1074 = vmatpush1.bf16.msra.mxu0 0
        %1075 = vmatprep.subr.bf16.mxu0 0
        %1076 = vmatpush1.bf16.msra.mxu0 0
        %1077 = vmatprep.subr.bf16.mxu0 0
        %1078 = vmatpush1.bf16.msra.mxu0 0
        %1079 = vmatprep.subr.bf16.mxu0 0
        %1080 = vmatpush1.bf16.msra.mxu0 0
        %1081 = vmatprep.subr.bf16.mxu0 0
        %1082 = vmatpush1.bf16.msra.mxu0 0
        %1083 = vmatprep.mubr.bf16.mxu0 0
        %1084 = vmatmul.mubr.bf16.gmra.mrb[0].mxu0 %v802
        %v1085 = vpop.f32.mrb[0].mxu0
        %v1086 = vadd.f32 0.0, %v1085
        %v1087 = vpop.f32.mrb[0].mxu0
        %v1088 = vadd.f32 0.0, %v1087
        %v1089 = vpop.f32.mrb[0].mxu0
        %v1090 = vadd.f32 0.0, %v1089
        %v1091 = vpop.f32.mrb[0].mxu0
        %v1092 = vadd.f32 0.0, %v1091
        %1093 = vmatprep.mubr.bf16.mxu0 0
        %1094 = vmatmul.mubr.bf16.gmra.mrb[0].mxu0 %v803
        %v1095 = vpop.f32.mrb[0].mxu0
        %v1096 = vadd.f32 0.0, %v1095
        %v1097 = vpop.f32.mrb[0].mxu0
        %v1098 = vadd.f32 0.0, %v1097
        %v1099 = vpop.f32.mrb[0].mxu0
        %v1100 = vadd.f32 0.0, %v1099
        %v1101 = vpop.f32.mrb[0].mxu0
        %v1102 = vadd.f32 0.0, %v1101
        %1103 = vdwg.mxu0
        %v1104 = vld [vmem:[#allocation7] sm:$0xff]
        %v1105 = vld [vmem:[#allocation7 + $0x8] sm:$0xff]
        %v1106 = vld [vmem:[#allocation7 + $0x10] sm:$0xff]
        %v1107 = vld [vmem:[#allocation7 + $0x18] sm:$0xff]
        %v1108 = vld [vmem:[#allocation7 + $0x20] sm:$0xff]
        %v1109 = vld [vmem:[#allocation7 + $0x28] sm:$0xff]
        %v1110 = vld [vmem:[#allocation7 + $0x30] sm:$0xff]
        %v1111 = vld [vmem:[#allocation7 + $0x38] sm:$0xff]
        %v1112 = vld [vmem:[#allocation7 + $0x40] sm:$0xff]
        %v1113 = vld [vmem:[#allocation7 + $0x48] sm:$0xff]
        %v1114 = vld [vmem:[#allocation7 + $0x50] sm:$0xff]
        %v1115 = vld [vmem:[#allocation7 + $0x58] sm:$0xff]
        %v1116 = vld [vmem:[#allocation7 + $0x60] sm:$0xff]
        %v1117 = vld [vmem:[#allocation7 + $0x68] sm:$0xff]
        %v1118 = vld [vmem:[#allocation7 + $0x70] sm:$0xff]
        %v1119 = vld [vmem:[#allocation7 + $0x78] sm:$0xff]
        %v1120 = vld [vmem:[#allocation7 + $0x80] sm:$0xff]
        %v1121 = vld [vmem:[#allocation7 + $0x88] sm:$0xff]
        %v1122 = vld [vmem:[#allocation7 + $0x90] sm:$0xff]
        %v1123 = vld [vmem:[#allocation7 + $0x98] sm:$0xff]
        %v1124 = vld [vmem:[#allocation7 + $0xa0] sm:$0xff]
        %v1125 = vld [vmem:[#allocation7 + $0xa8] sm:$0xff]
        %v1126 = vld [vmem:[#allocation7 + $0xb0] sm:$0xff]
        %v1127 = vld [vmem:[#allocation7 + $0xb8] sm:$0xff]
        %v1128 = vld [vmem:[#allocation7 + $0xc0] sm:$0xff]
        %v1129 = vld [vmem:[#allocation7 + $0xc8] sm:$0xff]
        %v1130 = vld [vmem:[#allocation7 + $0xd0] sm:$0xff]
        %v1131 = vld [vmem:[#allocation7 + $0xd8] sm:$0xff]
        %v1132 = vld [vmem:[#allocation7 + $0xe0] sm:$0xff]
        %v1133 = vld [vmem:[#allocation7 + $0xe8] sm:$0xff]
        %v1134 = vld [vmem:[#allocation7 + $0xf0] sm:$0xff]
        %v1135 = vld [vmem:[#allocation7 + $0xf8] sm:$0xff]
        %v1138 = vunpack.c.l.b16 %v804
        %v1139 = vunpack.c.l.b16 %v805
        %v1140 = vpack.c.b16 %v1139, %v1138
        %v1174 = vunpack.c.l.b16 %v1104
        %v1175 = vunpack.c.h.b16 %v1104
        %v1176 = vunpack.c.l.b16 %v1105
        %v1177 = vunpack.c.h.b16 %v1105
        %v1178 = vunpack.c.l.b16 %v1106
        %v1179 = vunpack.c.h.b16 %v1106
        %v1180 = vunpack.c.l.b16 %v1107
        %v1181 = vunpack.c.h.b16 %v1107
        %v1182 = vunpack.c.l.b16 %v1108
        %v1183 = vunpack.c.h.b16 %v1108
        %v1184 = vunpack.c.l.b16 %v1109
        %v1185 = vunpack.c.h.b16 %v1109
        %v1186 = vunpack.c.l.b16 %v1110
        %v1187 = vunpack.c.h.b16 %v1110
        %v1188 = vunpack.c.l.b16 %v1111
        %v1189 = vunpack.c.h.b16 %v1111
        %v1190 = vunpack.c.l.b16 %v1112
        %v1191 = vunpack.c.h.b16 %v1112
        %v1192 = vunpack.c.l.b16 %v1113
        %v1193 = vunpack.c.h.b16 %v1113
        %v1194 = vunpack.c.l.b16 %v1114
        %v1195 = vunpack.c.h.b16 %v1114
        %v1196 = vunpack.c.l.b16 %v1115
        %v1197 = vunpack.c.h.b16 %v1115
        %v1198 = vunpack.c.l.b16 %v1116
        %v1199 = vunpack.c.h.b16 %v1116
        %v1200 = vunpack.c.l.b16 %v1117
        %v1201 = vunpack.c.h.b16 %v1117
        %v1202 = vunpack.c.l.b16 %v1118
        %v1203 = vunpack.c.h.b16 %v1118
        %v1204 = vunpack.c.l.b16 %v1119
        %v1205 = vunpack.c.h.b16 %v1119
        %v1206 = vunpack.c.l.b16 %v1120
        %v1207 = vunpack.c.h.b16 %v1120
        %v1208 = vunpack.c.l.b16 %v1121
        %v1209 = vunpack.c.h.b16 %v1121
        %v1210 = vunpack.c.l.b16 %v1122
        %v1211 = vunpack.c.h.b16 %v1122
        %v1212 = vunpack.c.l.b16 %v1123
        %v1213 = vunpack.c.h.b16 %v1123
        %v1214 = vunpack.c.l.b16 %v1124
        %v1215 = vunpack.c.h.b16 %v1124
        %v1216 = vunpack.c.l.b16 %v1125
        %v1217 = vunpack.c.h.b16 %v1125
        %v1218 = vunpack.c.l.b16 %v1126
        %v1219 = vunpack.c.h.b16 %v1126
        %v1220 = vunpack.c.l.b16 %v1127
        %v1221 = vunpack.c.h.b16 %v1127
        %v1222 = vunpack.c.l.b16 %v1128
        %v1223 = vunpack.c.h.b16 %v1128
        %v1224 = vunpack.c.l.b16 %v1129
        %v1225 = vunpack.c.h.b16 %v1129
        %v1226 = vunpack.c.l.b16 %v1130
        %v1227 = vunpack.c.h.b16 %v1130
        %v1228 = vunpack.c.l.b16 %v1131
        %v1229 = vunpack.c.h.b16 %v1131
        %v1230 = vunpack.c.l.b16 %v1132
        %v1231 = vunpack.c.h.b16 %v1132
        %v1232 = vunpack.c.l.b16 %v1133
        %v1233 = vunpack.c.h.b16 %v1133
        %v1234 = vunpack.c.l.b16 %v1134
        %v1235 = vunpack.c.h.b16 %v1134
        %v1236 = vunpack.c.l.b16 %v1135
        %v1237 = vunpack.c.h.b16 %v1135
        %v1238 = vpack.c.b16 %v1178, %v1174
        %v1239 = vpack.c.b16 %v1179, %v1175
        %v1240 = vpack.c.b16 %v1180, %v1176
        %v1241 = vpack.c.b16 %v1181, %v1177
        %v1242 = vpack.c.b16 %v1186, %v1182
        %v1243 = vpack.c.b16 %v1187, %v1183
        %v1244 = vpack.c.b16 %v1188, %v1184
        %v1245 = vpack.c.b16 %v1189, %v1185
        %v1246 = vpack.c.b16 %v1194, %v1190
        %v1247 = vpack.c.b16 %v1195, %v1191
        %v1248 = vpack.c.b16 %v1196, %v1192
        %v1249 = vpack.c.b16 %v1197, %v1193
        %v1250 = vpack.c.b16 %v1202, %v1198
        %v1251 = vpack.c.b16 %v1203, %v1199
        %v1252 = vpack.c.b16 %v1204, %v1200
        %v1253 = vpack.c.b16 %v1205, %v1201
        %v1254 = vpack.c.b16 %v1210, %v1206
        %v1255 = vpack.c.b16 %v1211, %v1207
        %v1256 = vpack.c.b16 %v1212, %v1208
        %v1257 = vpack.c.b16 %v1213, %v1209
        %v1258 = vpack.c.b16 %v1218, %v1214
        %v1259 = vpack.c.b16 %v1219, %v1215
        %v1260 = vpack.c.b16 %v1220, %v1216
        %v1261 = vpack.c.b16 %v1221, %v1217
        %v1262 = vpack.c.b16 %v1226, %v1222
        %v1263 = vpack.c.b16 %v1227, %v1223
        %v1264 = vpack.c.b16 %v1228, %v1224
        %v1265 = vpack.c.b16 %v1229, %v1225
        %v1266 = vpack.c.b16 %v1234, %v1230
        %v1267 = vpack.c.b16 %v1235, %v1231
        %v1268 = vpack.c.b16 %v1236, %v1232
        %v1269 = vpack.c.b16 %v1237, %v1233
        %1302 = vmatprep.subr.bf16.mxu0 %v1239
        %1303 = vmatpush1.bf16.msra.mxu0 %v1238
        %1304 = vmatprep.subr.bf16.mxu0 %v1243
        %1305 = vmatpush1.bf16.msra.mxu0 %v1242
        %1306 = vmatprep.subr.bf16.mxu0 %v1247
        %1307 = vmatpush1.bf16.msra.mxu0 %v1246
        %1308 = vmatprep.subr.bf16.mxu0 %v1251
        %1309 = vmatpush1.bf16.msra.mxu0 %v1250
        %1310 = vmatprep.subr.bf16.mxu0 %v1255
        %1311 = vmatpush1.bf16.msra.mxu0 %v1254
        %1312 = vmatprep.subr.bf16.mxu0 %v1259
        %1313 = vmatpush1.bf16.msra.mxu0 %v1258
        %1314 = vmatprep.subr.bf16.mxu0 %v1263
        %1315 = vmatpush1.bf16.msra.mxu0 %v1262
        %1316 = vmatprep.subr.bf16.mxu0 %v1267
        %1317 = vmatpush1.bf16.msra.mxu0 %v1266
        %1318 = vmatprep.subr.bf16.mxu0 0
        %1319 = vmatpush1.bf16.msra.mxu0 0
        %1320 = vmatprep.subr.bf16.mxu0 0
        %1321 = vmatpush1.bf16.msra.mxu0 0
        %1322 = vmatprep.subr.bf16.mxu0 0
        %1323 = vmatpush1.bf16.msra.mxu0 0
        %1324 = vmatprep.subr.bf16.mxu0 0
        %1325 = vmatpush1.bf16.msra.mxu0 0
        %1326 = vmatprep.subr.bf16.mxu0 0
        %1327 = vmatpush1.bf16.msra.mxu0 0
        %1328 = vmatprep.subr.bf16.mxu0 0
        %1329 = vmatpush1.bf16.msra.mxu0 0
        %1330 = vmatprep.subr.bf16.mxu0 0
        %1331 = vmatpush1.bf16.msra.mxu0 0
        %1332 = vmatprep.subr.bf16.mxu0 0
        %1333 = vmatpush1.bf16.msra.mxu0 0
        %1334 = vmatprep.mubr.bf16.mxu0 0
        %1335 = vmatmul.mubr.bf16.gmra.mrb[0].mxu0 %v1140
        %v1336 = vpop.f32.mrb[0].mxu0
        %v1337 = vadd.f32 0.0, %v1336
        %v1338 = vpop.f32.mrb[0].mxu0
        %v1339 = vadd.f32 0.0, %v1338
        %v1340 = vpop.f32.mrb[0].mxu0
        %v1341 = vadd.f32 0.0, %v1340
        %v1342 = vpop.f32.mrb[0].mxu0
        %v1343 = vadd.f32 0.0, %v1342
        %1344 = vdwg.mxu0
        %1345 = vmatprep.subr.bf16.mxu0 %v1241
        %1346 = vmatpush1.bf16.msra.mxu0 %v1240
        %1347 = vmatprep.subr.bf16.mxu0 %v1245
        %1348 = vmatpush1.bf16.msra.mxu0 %v1244
        %1349 = vmatprep.subr.bf16.mxu0 %v1249
        %1350 = vmatpush1.bf16.msra.mxu0 %v1248
        %1351 = vmatprep.subr.bf16.mxu0 %v1253
        %1352 = vmatpush1.bf16.msra.mxu0 %v1252
        %1353 = vmatprep.subr.bf16.mxu0 %v1257
        %1354 = vmatpush1.bf16.msra.mxu0 %v1256
        %1355 = vmatprep.subr.bf16.mxu0 %v1261
        %1356 = vmatpush1.bf16.msra.mxu0 %v1260
        %1357 = vmatprep.subr.bf16.mxu0 %v1265
        %1358 = vmatpush1.bf16.msra.mxu0 %v1264
        %1359 = vmatprep.subr.bf16.mxu0 %v1269
        %1360 = vmatpush1.bf16.msra.mxu0 %v1268
        %1361 = vmatprep.subr.bf16.mxu0 0
        %1362 = vmatpush1.bf16.msra.mxu0 0
        %1363 = vmatprep.subr.bf16.mxu0 0
        %1364 = vmatpush1.bf16.msra.mxu0 0
        %1365 = vmatprep.subr.bf16.mxu0 0
        %1366 = vmatpush1.bf16.msra.mxu0 0
        %1367 = vmatprep.subr.bf16.mxu0 0
        %1368 = vmatpush1.bf16.msra.mxu0 0
        %1369 = vmatprep.subr.bf16.mxu0 0
        %1370 = vmatpush1.bf16.msra.mxu0 0
        %1371 = vmatprep.subr.bf16.mxu0 0
        %1372 = vmatpush1.bf16.msra.mxu0 0
        %1373 = vmatprep.subr.bf16.mxu0 0
        %1374 = vmatpush1.bf16.msra.mxu0 0
        %1375 = vmatprep.subr.bf16.mxu0 0
        %1376 = vmatpush1.bf16.msra.mxu0 0
        %1377 = vmatprep.mubr.bf16.mxu0 0
        %1378 = vmatmul.mubr.bf16.gmra.mrb[0].mxu0 %v1140
        %v1379 = vpop.f32.mrb[0].mxu0
        %v1380 = vadd.f32 0.0, %v1379
        %v1381 = vpop.f32.mrb[0].mxu0
        %v1382 = vadd.f32 0.0, %v1381
        %v1383 = vpop.f32.mrb[0].mxu0
        %v1384 = vadd.f32 0.0, %v1383
        %v1385 = vpop.f32.mrb[0].mxu0
        %v1386 = vadd.f32 0.0, %v1385
        %1387 = vdwg.mxu0
        %v1388 = vlaneseq
        %v1389 = vshrl.u32 %v1388, 7
        %v1390 = vsub.s32 0, %v1389
        %v1391 = vrot.slane %v1337, %v1390
        %v1392 = vlaneseq
        %v1393 = vshrl.u32 %v1392, 7
        %v1394 = vsub.s32 0, %v1393
        %v1395 = vrot.slane %v1339, %v1394
        %v1396 = vlaneseq
        %v1397 = vshrl.u32 %v1396, 7
        %v1398 = vsub.s32 0, %v1397
        %v1399 = vrot.slane %v1380, %v1398
        %v1400 = vlaneseq
        %v1401 = vshrl.u32 %v1400, 7
        %v1402 = vsub.s32 0, %v1401
        %v1403 = vrot.slane %v1382, %v1402
        %v1404 = vlaneseq
        %v1405 = vshrl.u32 %v1404, 7
        %v1406 = vsub.s32 0, %v1405
        %v1407 = vrot.slane %v1341, %v1406
        %v1408 = vlaneseq
        %v1409 = vshrl.u32 %v1408, 7
        %v1410 = vsub.s32 0, %v1409
        %v1411 = vrot.slane %v1343, %v1410
        %v1412 = vlaneseq
        %v1413 = vshrl.u32 %v1412, 7
        %v1414 = vsub.s32 0, %v1413
        %v1415 = vrot.slane %v1384, %v1414
        %v1416 = vlaneseq
        %v1417 = vshrl.u32 %v1416, 7
        %v1418 = vsub.s32 0, %v1417
        %v1419 = vrot.slane %v1386, %v1418
        %v1420 = vadd.f32 %v1033, %v1391
        %v1421 = vadd.f32 %v1035, %v1395
        %v1422 = vadd.f32 %v1086, %v1399
        %v1423 = vadd.f32 %v1088, %v1403
        %v1424 = vadd.f32 %v1037, %v1391
        %v1425 = vadd.f32 %v1039, %v1395
        %v1426 = vadd.f32 %v1090, %v1399
        %v1427 = vadd.f32 %v1092, %v1403
        %v1428 = vadd.f32 %v1043, %v1407
        %v1429 = vadd.f32 %v1045, %v1411
        %v1430 = vadd.f32 %v1096, %v1415
        %v1431 = vadd.f32 %v1098, %v1419
        %v1432 = vadd.f32 %v1047, %v1407
        %v1433 = vadd.f32 %v1049, %v1411
        %v1434 = vadd.f32 %v1100, %v1415
        %v1435 = vadd.f32 %v1102, %v1419
        %v1436 = vld [vmem:[%s5] sm:$0xf]
        %v1438 = vlaneseq
        %v1439 = vshrl.u32 %v1438, 7
        %v1440 = vsub.s32 0, %v1439
        %v1441 = vrot.slane %v1436, %v1440
        %v1442 = vlaneseq
        %v1443 = vshrl.u32 %v1442, 7
        %v1444 = vsub.s32 1, %v1443
        %v1445 = vrot.slane %v1436, %v1444
        %v1446 = vlaneseq
        %v1447 = vshrl.u32 %v1446, 7
        %v1448 = vsub.s32 2, %v1447
        %v1449 = vrot.slane %v1436, %v1448
        %v1450 = vlaneseq
        %v1451 = vshrl.u32 %v1450, 7
        %v1452 = vsub.s32 3, %v1451
        %v1453 = vrot.slane %v1436, %v1452
        %v1458 = vadd.f32 %v1420, %v1441
        %v1459 = vadd.f32 %v1421, %v1445
        %v1460 = vadd.f32 %v1422, %v1449
        %v1461 = vadd.f32 %v1423, %v1453
        %v1462 = vadd.f32 %v1424, %v1441
        %v1463 = vadd.f32 %v1425, %v1445
        %v1464 = vadd.f32 %v1426, %v1449
        %v1465 = vadd.f32 %v1427, %v1453
        %v1466 = vadd.f32 %v1428, %v1441
        %v1467 = vadd.f32 %v1429, %v1445
        %v1468 = vadd.f32 %v1430, %v1449
        %v1469 = vadd.f32 %v1431, %v1453
        %v1470 = vadd.f32 %v1432, %v1441
        %v1471 = vadd.f32 %v1433, %v1445
        %v1472 = vadd.f32 %v1434, %v1449
        %v1473 = vadd.f32 %v1435, %v1453
        %v1474 = vmax.f32 %v1458, 0.0
        %v1475 = vmax.f32 %v1459, 0.0
        %v1476 = vmax.f32 %v1460, 0.0
        %v1477 = vmax.f32 %v1461, 0.0
        %v1478 = vmax.f32 %v1462, 0.0
        %v1479 = vmax.f32 %v1463, 0.0
        %v1480 = vmax.f32 %v1464, 0.0
        %v1481 = vmax.f32 %v1465, 0.0
        %v1482 = vmax.f32 %v1466, 0.0
        %v1483 = vmax.f32 %v1467, 0.0
        %v1484 = vmax.f32 %v1468, 0.0
        %v1485 = vmax.f32 %v1469, 0.0
        %v1486 = vmax.f32 %v1470, 0.0
        %v1487 = vmax.f32 %v1471, 0.0
        %v1488 = vmax.f32 %v1472, 0.0
        %v1489 = vmax.f32 %v1473, 0.0
        %v1490 = vpack.c.bf16 %v1478, %v1474
        %v1491 = vpack.c.bf16 %v1479, %v1475
        %v1492 = vpack.c.bf16 %v1480, %v1476
        %v1493 = vpack.c.bf16 %v1481, %v1477
        %v1494 = vpack.c.bf16 %v1486, %v1482
        %v1495 = vpack.c.bf16 %v1487, %v1483
        %v1496 = vpack.c.bf16 %v1488, %v1484
        %v1497 = vpack.c.bf16 %v1489, %v1485
        %v1498 = vld [vmem:[#allocation8] sm:$0xf]
        %v1499 = vld [vmem:[#allocation8 + $0x4] sm:$0xf]
        %v1500 = vld [vmem:[#allocation8 + $0x8] sm:$0xf]
        %v1501 = vld [vmem:[#allocation8 + $0xc] sm:$0xf]
        %v1502 = vld [vmem:[#allocation8 + $0x10] sm:$0xf]
        %v1503 = vld [vmem:[#allocation8 + $0x14] sm:$0xf]
        %v1504 = vld [vmem:[#allocation8 + $0x18] sm:$0xf]
        %v1505 = vld [vmem:[#allocation8 + $0x1c] sm:$0xf]
        %v1506 = vld [vmem:[#allocation8 + $0x20] sm:$0xf]
        %v1507 = vld [vmem:[#allocation8 + $0x24] sm:$0xf]
        %v1508 = vld [vmem:[#allocation8 + $0x28] sm:$0xf]
        %v1509 = vld [vmem:[#allocation8 + $0x2c] sm:$0xf]
        %v1510 = vld [vmem:[#allocation8 + $0x30] sm:$0xf]
        %v1511 = vld [vmem:[#allocation8 + $0x34] sm:$0xf]
        %v1512 = vld [vmem:[#allocation8 + $0x38] sm:$0xf]
        %v1513 = vld [vmem:[#allocation8 + $0x3c] sm:$0xf]
        %v1514 = vld [vmem:[#allocation8 + $0x40] sm:$0xf]
        %v1515 = vld [vmem:[#allocation8 + $0x44] sm:$0xf]
        %v1516 = vld [vmem:[#allocation8 + $0x48] sm:$0xf]
        %v1517 = vld [vmem:[#allocation8 + $0x4c] sm:$0xf]
        %v1518 = vld [vmem:[#allocation8 + $0x50] sm:$0xf]
        %v1519 = vld [vmem:[#allocation8 + $0x54] sm:$0xf]
        %v1520 = vld [vmem:[#allocation8 + $0x58] sm:$0xf]
        %v1521 = vld [vmem:[#allocation8 + $0x5c] sm:$0xf]
        %v1522 = vld [vmem:[#allocation8 + $0x60] sm:$0xf]
        %v1523 = vld [vmem:[#allocation8 + $0x64] sm:$0xf]
        %v1524 = vld [vmem:[#allocation8 + $0x68] sm:$0xf]
        %v1525 = vld [vmem:[#allocation8 + $0x6c] sm:$0xf]
        %v1526 = vld [vmem:[#allocation8 + $0x70] sm:$0xf]
        %v1527 = vld [vmem:[#allocation8 + $0x74] sm:$0xf]
        %v1528 = vld [vmem:[#allocation8 + $0x78] sm:$0xf]
        %v1529 = vld [vmem:[#allocation8 + $0x7c] sm:$0xf]
        %v1530 = vld [vmem:[#allocation8 + $0x80] sm:$0xf]
        %v1531 = vld [vmem:[#allocation8 + $0x84] sm:$0xf]
        %v1532 = vld [vmem:[#allocation8 + $0x88] sm:$0xf]
        %v1533 = vld [vmem:[#allocation8 + $0x8c] sm:$0xf]
        %v1534 = vld [vmem:[#allocation8 + $0x90] sm:$0xf]
        %v1535 = vld [vmem:[#allocation8 + $0x94] sm:$0xf]
        %v1536 = vld [vmem:[#allocation8 + $0x98] sm:$0xf]
        %v1537 = vld [vmem:[#allocation8 + $0x9c] sm:$0xf]
        %v1538 = vld [vmem:[#allocation8 + $0xa0] sm:$0xf]
        %v1539 = vld [vmem:[#allocation8 + $0xa4] sm:$0xf]
        %v1540 = vld [vmem:[#allocation8 + $0xa8] sm:$0xf]
        %v1541 = vld [vmem:[#allocation8 + $0xac] sm:$0xf]
        %v1542 = vld [vmem:[#allocation8 + $0xb0] sm:$0xf]
        %v1543 = vld [vmem:[#allocation8 + $0xb4] sm:$0xf]
        %v1544 = vld [vmem:[#allocation8 + $0xb8] sm:$0xf]
        %v1545 = vld [vmem:[#allocation8 + $0xbc] sm:$0xf]
        %v1546 = vld [vmem:[#allocation8 + $0xc0] sm:$0xf]
        %v1547 = vld [vmem:[#allocation8 + $0xc4] sm:$0xf]
        %v1548 = vld [vmem:[#allocation8 + $0xc8] sm:$0xf]
        %v1549 = vld [vmem:[#allocation8 + $0xcc] sm:$0xf]
        %v1550 = vld [vmem:[#allocation8 + $0xd0] sm:$0xf]
        %v1551 = vld [vmem:[#allocation8 + $0xd4] sm:$0xf]
        %v1552 = vld [vmem:[#allocation8 + $0xd8] sm:$0xf]
        %v1553 = vld [vmem:[#allocation8 + $0xdc] sm:$0xf]
        %v1554 = vld [vmem:[#allocation8 + $0xe0] sm:$0xf]
        %v1555 = vld [vmem:[#allocation8 + $0xe4] sm:$0xf]
        %v1556 = vld [vmem:[#allocation8 + $0xe8] sm:$0xf]
        %v1557 = vld [vmem:[#allocation8 + $0xec] sm:$0xf]
        %v1558 = vld [vmem:[#allocation8 + $0xf0] sm:$0xf]
        %v1559 = vld [vmem:[#allocation8 + $0xf4] sm:$0xf]
        %v1560 = vld [vmem:[#allocation8 + $0xf8] sm:$0xf]
        %v1561 = vld [vmem:[#allocation8 + $0xfc] sm:$0xf]
        %v1626 = vunpack.c.l.b16 %v1498
        %v1627 = vunpack.c.l.b16 %v1499
        %v1628 = vunpack.c.l.b16 %v1500
        %v1629 = vunpack.c.l.b16 %v1501
        %v1630 = vunpack.c.l.b16 %v1502
        %v1631 = vunpack.c.l.b16 %v1503
        %v1632 = vunpack.c.l.b16 %v1504
        %v1633 = vunpack.c.l.b16 %v1505
        %v1634 = vunpack.c.l.b16 %v1506
        %v1635 = vunpack.c.l.b16 %v1507
        %v1636 = vunpack.c.l.b16 %v1508
        %v1637 = vunpack.c.l.b16 %v1509
        %v1638 = vunpack.c.l.b16 %v1510
        %v1639 = vunpack.c.l.b16 %v1511
        %v1640 = vunpack.c.l.b16 %v1512
        %v1641 = vunpack.c.l.b16 %v1513
        %v1642 = vunpack.c.l.b16 %v1514
        %v1643 = vunpack.c.l.b16 %v1515
        %v1644 = vunpack.c.l.b16 %v1516
        %v1645 = vunpack.c.l.b16 %v1517
        %v1646 = vunpack.c.l.b16 %v1518
        %v1647 = vunpack.c.l.b16 %v1519
        %v1648 = vunpack.c.l.b16 %v1520
        %v1649 = vunpack.c.l.b16 %v1521
        %v1650 = vunpack.c.l.b16 %v1522
        %v1651 = vunpack.c.l.b16 %v1523
        %v1652 = vunpack.c.l.b16 %v1524
        %v1653 = vunpack.c.l.b16 %v1525
        %v1654 = vunpack.c.l.b16 %v1526
        %v1655 = vunpack.c.l.b16 %v1527
        %v1656 = vunpack.c.l.b16 %v1528
        %v1657 = vunpack.c.l.b16 %v1529
        %v1658 = vunpack.c.l.b16 %v1530
        %v1659 = vunpack.c.l.b16 %v1531
        %v1660 = vunpack.c.l.b16 %v1532
        %v1661 = vunpack.c.l.b16 %v1533
        %v1662 = vunpack.c.l.b16 %v1534
        %v1663 = vunpack.c.l.b16 %v1535
        %v1664 = vunpack.c.l.b16 %v1536
        %v1665 = vunpack.c.l.b16 %v1537
        %v1666 = vunpack.c.l.b16 %v1538
        %v1667 = vunpack.c.l.b16 %v1539
        %v1668 = vunpack.c.l.b16 %v1540
        %v1669 = vunpack.c.l.b16 %v1541
        %v1670 = vunpack.c.l.b16 %v1542
        %v1671 = vunpack.c.l.b16 %v1543
        %v1672 = vunpack.c.l.b16 %v1544
        %v1673 = vunpack.c.l.b16 %v1545
        %v1674 = vunpack.c.l.b16 %v1546
        %v1675 = vunpack.c.l.b16 %v1547
        %v1676 = vunpack.c.l.b16 %v1548
        %v1677 = vunpack.c.l.b16 %v1549
        %v1678 = vunpack.c.l.b16 %v1550
        %v1679 = vunpack.c.l.b16 %v1551
        %v1680 = vunpack.c.l.b16 %v1552
        %v1681 = vunpack.c.l.b16 %v1553
        %v1682 = vunpack.c.l.b16 %v1554
        %v1683 = vunpack.c.l.b16 %v1555
        %v1684 = vunpack.c.l.b16 %v1556
        %v1685 = vunpack.c.l.b16 %v1557
        %v1686 = vunpack.c.l.b16 %v1558
        %v1687 = vunpack.c.l.b16 %v1559
        %v1688 = vunpack.c.l.b16 %v1560
        %v1689 = vunpack.c.l.b16 %v1561
        %v1690 = vpack.c.b16 %v1627, %v1626
        %v1691 = vpack.c.b16 %v1629, %v1628
        %v1692 = vpack.c.b16 %v1631, %v1630
        %v1693 = vpack.c.b16 %v1633, %v1632
        %v1694 = vpack.c.b16 %v1635, %v1634
        %v1695 = vpack.c.b16 %v1637, %v1636
        %v1696 = vpack.c.b16 %v1639, %v1638
        %v1697 = vpack.c.b16 %v1641, %v1640
        %v1698 = vpack.c.b16 %v1643, %v1642
        %v1699 = vpack.c.b16 %v1645, %v1644
        %v1700 = vpack.c.b16 %v1647, %v1646
        %v1701 = vpack.c.b16 %v1649, %v1648
        %v1702 = vpack.c.b16 %v1651, %v1650
        %v1703 = vpack.c.b16 %v1653, %v1652
        %v1704 = vpack.c.b16 %v1655, %v1654
        %v1705 = vpack.c.b16 %v1657, %v1656
        %v1706 = vpack.c.b16 %v1659, %v1658
        %v1707 = vpack.c.b16 %v1661, %v1660
        %v1708 = vpack.c.b16 %v1663, %v1662
        %v1709 = vpack.c.b16 %v1665, %v1664
        %v1710 = vpack.c.b16 %v1667, %v1666
        %v1711 = vpack.c.b16 %v1669, %v1668
        %v1712 = vpack.c.b16 %v1671, %v1670
        %v1713 = vpack.c.b16 %v1673, %v1672
        %v1714 = vpack.c.b16 %v1675, %v1674
        %v1715 = vpack.c.b16 %v1677, %v1676
        %v1716 = vpack.c.b16 %v1679, %v1678
        %v1717 = vpack.c.b16 %v1681, %v1680
        %v1718 = vpack.c.b16 %v1683, %v1682
        %v1719 = vpack.c.b16 %v1685, %v1684
        %v1720 = vpack.c.b16 %v1687, %v1686
        %v1721 = vpack.c.b16 %v1689, %v1688
        %1754 = vmatprep.subr.bf16.mxu0 0
        %1755 = vmatpush1.bf16.msra.mxu0 %v1690
        %1756 = vmatprep.subr.bf16.mxu0 0
        %1757 = vmatpush1.bf16.msra.mxu0 %v1691
        %1758 = vmatprep.subr.bf16.mxu0 0
        %1759 = vmatpush1.bf16.msra.mxu0 %v1692
        %1760 = vmatprep.subr.bf16.mxu0 0
        %1761 = vmatpush1.bf16.msra.mxu0 %v1693
        %1762 = vmatprep.subr.bf16.mxu0 0
        %1763 = vmatpush1.bf16.msra.mxu0 %v1694
        %1764 = vmatprep.subr.bf16.mxu0 0
        %1765 = vmatpush1.bf16.msra.mxu0 %v1695
        %1766 = vmatprep.subr.bf16.mxu0 0
        %1767 = vmatpush1.bf16.msra.mxu0 %v1696
        %1768 = vmatprep.subr.bf16.mxu0 0
        %1769 = vmatpush1.bf16.msra.mxu0 %v1697
        %1770 = vmatprep.subr.bf16.mxu0 0
        %1771 = vmatpush1.bf16.msra.mxu0 %v1698
        %1772 = vmatprep.subr.bf16.mxu0 0
        %1773 = vmatpush1.bf16.msra.mxu0 %v1699
        %1774 = vmatprep.subr.bf16.mxu0 0
        %1775 = vmatpush1.bf16.msra.mxu0 %v1700
        %1776 = vmatprep.subr.bf16.mxu0 0
        %1777 = vmatpush1.bf16.msra.mxu0 %v1701
        %1778 = vmatprep.subr.bf16.mxu0 0
        %1779 = vmatpush1.bf16.msra.mxu0 %v1702
        %1780 = vmatprep.subr.bf16.mxu0 0
        %1781 = vmatpush1.bf16.msra.mxu0 %v1703
        %1782 = vmatprep.subr.bf16.mxu0 0
        %1783 = vmatpush1.bf16.msra.mxu0 %v1704
        %1784 = vmatprep.subr.bf16.mxu0 0
        %1785 = vmatpush1.bf16.msra.mxu0 %v1705
        %1786 = vmatprep.mubr.bf16.mxu0 %v1491
        %1787 = vmatmul.mubr.bf16.gmra.mrb[0].mxu0 %v1490
        %v1788 = vpop.f32.mrb[0].mxu0
        %v1789 = vadd.f32 0.0, %v1788
        %v1790 = vpop.f32.mrb[0].mxu0
        %v1791 = vpop.f32.mrb[0].mxu0
        %v1792 = vadd.f32 0.0, %v1791
        %v1793 = vpop.f32.mrb[0].mxu0
        %1794 = vmatprep.mubr.bf16.mxu0 %v1495
        %1795 = vmatmul.mubr.bf16.gmra.mrb[0].mxu0 %v1494
        %v1796 = vpop.f32.mrb[0].mxu0
        %v1797 = vadd.f32 0.0, %v1796
        %v1798 = vpop.f32.mrb[0].mxu0
        %v1799 = vpop.f32.mrb[0].mxu0
        %v1800 = vadd.f32 0.0, %v1799
        %v1801 = vpop.f32.mrb[0].mxu0
        %1802 = vdwg.mxu0
        %1803 = vmatprep.subr.bf16.mxu0 0
        %1804 = vmatpush1.bf16.msra.mxu0 %v1706
        %1805 = vmatprep.subr.bf16.mxu0 0
        %1806 = vmatpush1.bf16.msra.mxu0 %v1707
        %1807 = vmatprep.subr.bf16.mxu0 0
        %1808 = vmatpush1.bf16.msra.mxu0 %v1708
        %1809 = vmatprep.subr.bf16.mxu0 0
        %1810 = vmatpush1.bf16.msra.mxu0 %v1709
        %1811 = vmatprep.subr.bf16.mxu0 0
        %1812 = vmatpush1.bf16.msra.mxu0 %v1710
        %1813 = vmatprep.subr.bf16.mxu0 0
        %1814 = vmatpush1.bf16.msra.mxu0 %v1711
        %1815 = vmatprep.subr.bf16.mxu0 0
        %1816 = vmatpush1.bf16.msra.mxu0 %v1712
        %1817 = vmatprep.subr.bf16.mxu0 0
        %1818 = vmatpush1.bf16.msra.mxu0 %v1713
        %1819 = vmatprep.subr.bf16.mxu0 0
        %1820 = vmatpush1.bf16.msra.mxu0 %v1714
        %1821 = vmatprep.subr.bf16.mxu0 0
        %1822 = vmatpush1.bf16.msra.mxu0 %v1715
        %1823 = vmatprep.subr.bf16.mxu0 0
        %1824 = vmatpush1.bf16.msra.mxu0 %v1716
        %1825 = vmatprep.subr.bf16.mxu0 0
        %1826 = vmatpush1.bf16.msra.mxu0 %v1717
        %1827 = vmatprep.subr.bf16.mxu0 0
        %1828 = vmatpush1.bf16.msra.mxu0 %v1718
        %1829 = vmatprep.subr.bf16.mxu0 0
        %1830 = vmatpush1.bf16.msra.mxu0 %v1719
        %1831 = vmatprep.subr.bf16.mxu0 0
        %1832 = vmatpush1.bf16.msra.mxu0 %v1720
        %1833 = vmatprep.subr.bf16.mxu0 0
        %1834 = vmatpush1.bf16.msra.mxu0 %v1721
        %1835 = vmatprep.mubr.bf16.mxu0 %v1493
        %1836 = vmatmul.mubr.bf16.gmra.mrb[0].mxu0 %v1492
        %v1837 = vpop.f32.mrb[0].mxu0
        %v1838 = vadd.f32 %v1789, %v1837
        %v1839 = vpop.f32.mrb[0].mxu0
        %v1840 = vpop.f32.mrb[0].mxu0
        %v1841 = vadd.f32 %v1792, %v1840
        %v1842 = vpop.f32.mrb[0].mxu0
        %1843 = vmatprep.mubr.bf16.mxu0 %v1497
        %1844 = vmatmul.mubr.bf16.gmra.mrb[0].mxu0 %v1496
        %v1845 = vpop.f32.mrb[0].mxu0
        %v1846 = vadd.f32 %v1797, %v1845
        %v1847 = vpop.f32.mrb[0].mxu0
        %v1848 = vpop.f32.mrb[0].mxu0
        %v1849 = vadd.f32 %v1800, %v1848
        %v1850 = vpop.f32.mrb[0].mxu0
        %1851 = vdwg.mxu0
        %v1852 = vld [vmem:[%s7] sm:$0x1]
        %v1854 = vlaneseq
        %v1855 = vshrl.u32 %v1854, 7
        %v1856 = vsub.s32 0, %v1855
        %v1857 = vrot.slane %v1852, %v1856
        %v1859 = vadd.f32 %v1838, %v1857
        %v1860 = vadd.f32 %v1841, %v1857
        %v1861 = vadd.f32 %v1846, %v1857
        %v1862 = vadd.f32 %v1849, %v1857
        %1863 = vst [vmem:[%s404] sm:$0xff] %v1859
        %1864 = vst [vmem:[%s404 + $0x8] sm:$0xff] %v1860
        %1865 = vst [vmem:[%s404 + $0x10] sm:$0xff] %v1861
        %1866 = vst [vmem:[%s404 + $0x18] sm:$0xff] %v1862
        %s1867 = sand.u32 %s218, 1
        %s1868 = scalar_lea.sflag [#allocation4], %s1867
        %s1869 = sand.u32 %s218, 1
        %s1870 = smul.addr %s1869, 32
        %s1871 = scalar_lea.vmem [#allocation10], %s1870
        // Predicated region
        $region69: #{tpu_custom_call.1} parent=51 // pred_check
          %p1872 = pneg %p228
        $region70: #{tpu_custom_call.1} parent=51 // pred_check_branch
          %1874 = sbr.rel (%p1872) target = $region72
        $region71: #{tpu_custom_call.1} parent=51 // pred_region
          %s1875 = smul.u32 2, %s27
          %s1877 = ssub.s32 512, 512
          %1878 = vsyncadd %s1868, %s1877
          %s1879 = smul.addr %s1875, 2
          %s1880 = smul.addr %s1879, 128
          %s1881 = scalar_lea.hbm %s8, %s1880
          %s1882 = sshll.u32 %s1871, 4
          %s1883 = int_to_ptr.vmem [resolvable:$true] %s1882
          %1888 = dma.vmem_to_hbm [thread:$0]  %s1883, 512, %s1881, %s1868, 128, 128, 8
        $region72: #{tpu_custom_call.1} parent=51 // pred_fallthru
          _
      $region52: #{tpu_custom_call.1} parent=5 // pred_fallthru
        _
      %p1889 = scmp.le.s32.totalorder 2, %s22
      // Predicated region
      $region73: #{tpu_custom_call.1} parent=5 // pred_check
        %p1890 = pneg %p1889
      $region74: #{tpu_custom_call.1} parent=5 // pred_check_branch
        %1892 = sbr.rel (%p1890) target = $region76
      $region75: #{tpu_custom_call.1} parent=5 // pred_region
        %s1893 = ssub.s32 %s22, 2
        // Predicated region
        $region77: #{tpu_custom_call.1} parent=75 // pred_check
          %p1894 = pneg %p234
        $region78: #{tpu_custom_call.1} parent=75 // pred_check_branch
          %1896 = sbr.rel (%p1894) target = $region80
        $region79: #{tpu_custom_call.1} parent=75 // pred_region
          %s1897 = sand.u32 %s219, 1
          %s1898 = scalar_lea.sflag [#allocation4], %s1897
          %s1899 = sand.u32 %s219, 1
          %s1900 = smul.addr %s1899, 32
          %s1901 = scalar_lea.vmem [#allocation10], %s1900
          %1902 = dma.done %s1898, 512
        $region80: #{tpu_custom_call.1} parent=75 // pred_fallthru
          _
      $region76: #{tpu_custom_call.1} parent=5 // pred_fallthru
        _
    $region6: #{tpu_custom_call.1} parent=1 // loop_footer
      %s26 = sadd.s32 1, %s22
    $region7: #{tpu_custom_call.1} parent=1 // loop_footer_branch
      %21 = sbr.rel target = $region3
    $region8: #{tpu_custom_call.1} parent=1 // loop_exit
      _
    %1903 = vsyncpa [#allocation3], 1
    %s1904 = scalar_lea.sflag [#allocation3], 1
    %1905 = vsyncpa %s1904, 1
    %1906 = vsyncpa [#allocation6], 1
    %1907 = vsyncpa [#allocation9], 1
    %1908 = vsyncpa [#allocation4], 1
    %s1909 = scalar_lea.sflag [#allocation4], 1
    %1910 = vsyncpa %s1909, 1

// kernel: tpu_custom_call.1
$region0: #{tpu_custom_call.1}
  #allocation0 [shape = 'u32[]', space=smem, size = 0x4, offset = 0x4, fixed_abs, tag = 'smem constant byte address 0x4 - core index']
  #allocation1 [shape = 'u32[144,128]{1,0:T(1,128)}', space=vmem, size = 0x12000, scoped, tag = 'internal scratch']
  %s0 = inlined_call_operand.vmem [shape: s32[4,24,1], index: 0, kind: input, shape index: {}]
  %s1 = inlined_call_operand.vmem [shape: s32[4,24,1], index: 1, kind: input, shape index: {}]
  %s2 = inlined_call_operand.hbm [shape: bf16[4,128,128], index: 2, kind: input, shape index: {}]
  %s3 = inlined_call_operand.hbm [shape: bf16[128,512], index: 3, kind: input, shape index: {}]
  %s4 = inlined_call_operand.hbm [shape: bf16[128,512], index: 4, kind: input, shape index: {}]
  %s5 = inlined_call_operand.vmem [shape: f32[1,512], index: 5, kind: input, shape index: {}]
  %s6 = inlined_call_operand.hbm [shape: bf16[512,128], index: 6, kind: input, shape index: {}]
  %s7 = inlined_call_operand.vmem [shape: f32[1,128], index: 7, kind: input, shape index: {}]
  %s8 = inlined_call_operand.hbm [shape: f32[4,16,128], index: 8, kind: output, shape index: {}]
  %s9 = sld [smem:[#allocation0]]
  $region81: #{tpu_custom_call.1} parent=0
    _
  %s11 = ssub.s32 1, %s9
  %s12 = scalar_select 0, %s11, %s9
  $region1: #{tpu_custom_call.1} parent=0
    #allocation2 [shape = 'u8[131072]{0}', space=vmem, size = 0x20000, scoped, tag = 'input window, operand 2']
    #allocation3 [shape = 's32[2]{0}', space=sflag, size = 0x8, scoped, tag = 'scoped memory for tpu_custom_call.1']
    #allocation4 [shape = 's32[2]{0}', space=sflag, size = 0x8, scoped, tag = 'scoped memory for tpu_custom_call.1']
    #allocation5 [shape = 'u8[131072]{0}', space=vmem, size = 0x20000, scoped, tag = 'input window, operand 3, single buffered']
    #allocation6 [shape = 's32[1]{0}', space=sflag, size = 0x4, scoped, tag = 'scoped memory for tpu_custom_call.1']
    #allocation7 [shape = 'u8[131072]{0}', space=vmem, size = 0x20000, scoped, tag = 'input window, operand 4, single buffered']
    #allocation8 [shape = 'u8[131072]{0}', space=vmem, size = 0x20000, scoped, tag = 'input window, operand 6, single buffered']
    #allocation9 [shape = 's32[1]{0}', space=sflag, size = 0x4, scoped, tag = 'scoped memory for tpu_custom_call.1']
    #allocation10 [shape = 'u8[32768]{0}', space=vmem, size = 0x8000, scoped, tag = 'output window, operand 0']
    %13 = vsyncpa [#allocation3], 0
    %s14 = scalar_lea.sflag [#allocation3], 1
    %15 = vsyncpa %s14, 0
    %16 = vsyncpa [#allocation6], 0
    %17 = vsyncpa [#allocation9], 0
    %18 = vsyncpa [#allocation4], 0
    %s19 = scalar_lea.sflag [#allocation4], 1
    %20 = vsyncpa %s19, 0
    loop: start=0, step=1, limit=4
    $region2: #{tpu_custom_call.1} parent=1 // loop_pre_header
      _
    $region3: #{tpu_custom_call.1} parent=1 // loop_header
      %s22 = sphi 0, %s26
      %p23 = scmp.ge.s32.totalorder %s22, 4
      %s32 = sphi 0, %s34
      %s35 = sphi 0, %s32
      %s36 = sphi 0, %s35
      %s52 = sphi 0, %s36
      %s58 = sphi 0, %s60
      %s61 = sphi 0, %s58
      %s62 = sphi 0, %s61
      %s78 = sphi 0, %s62
      %s84 = sphi 0, %s86
      %s87 = sphi 0, %s84
      %s88 = sphi 0, %s87
      %s104 = sphi 0, %s88
      %s108 = sphi 0, %s108
      %s110 = sphi 0, %s108
      %s111 = sphi 0, %s110
      %s125 = sphi 0, %s111
      %s129 = sphi 0, %s129
      %s131 = sphi 0, %s129
      %s132 = sphi 0, %s131
      %s146 = sphi 0, %s132
      %s150 = sphi 0, %s150
      %s152 = sphi 0, %s150
      %s153 = sphi 0, %s152
      %s167 = sphi 0, %s153
      %s171 = sphi 0, %s171
      %s173 = sphi 0, %s171
      %s174 = sphi 0, %s173
      %s188 = sphi 0, %s174
      %s192 = sphi 0, %s192
      %s194 = sphi 0, %s192
      %s195 = sphi 0, %s194
      %s209 = sphi 0, %s195
      %s215 = sphi 0, %s217
      %s218 = sphi 0, %s215
      %s219 = sphi 0, %s218
      %s235 = sphi 0, %s219
    $region4: #{tpu_custom_call.1} parent=1 // loop_header_branch
      %25 = sbr.rel (%p23) target = $region8
    $region5: #{tpu_custom_call.1} parent=1 // loop_body
      %s27 = ssub.s32 %s22, 1
      %s28 = ssub.s32 %s22, 2
      %s29 = sadd.s32 %s22, 1
      %s30 = ssub.s32 %s22, %s29
      %p31 = scmp.eq.s32.totalorder %s30, 0
      %s33 = sadd.s32 %s32, 1
      %s34 = scalar_select %p31, %s32, %s33
      %p37 = pneg %p31
      %p38 = scmp.eq.s32.totalorder %s22, 1
      %p39 = por %p37, %p38
      %p40 = scmp.ne.s32.totalorder %s32, %s35
      %p41 = scmp.eq.s32.totalorder %s22, 0
      %p42 = por %p40, %p41
      %p43 = scmp.ne.s32.totalorder %s32, %s35
      %p44 = scmp.eq.s32.totalorder %s27, 1
      %p45 = por %p43, %p44
      %p46 = scmp.ne.s32.totalorder %s35, %s36
      %p47 = scmp.eq.s32.totalorder %s27, 0
      %p48 = por %p46, %p47
      %p49 = scmp.ne.s32.totalorder %s35, %s36
      %p50 = scmp.eq.s32.totalorder %s28, 1
      %p51 = por %p49, %p50
      %p53 = scmp.ne.s32.totalorder %s36, %s52
      %p54 = scmp.eq.s32.totalorder %s28, 0
      %p55 = por %p53, %p54
      %s56 = ssub.s32 %s22, %s29
      %p57 = scmp.eq.s32.totalorder %s56, 0
      %s59 = sadd.s32 %s58, 1
      %s60 = scalar_select %p57, %s58, %s59
      %p63 = pneg %p57
      %p64 = scmp.eq.s32.totalorder %s22, 1
      %p65 = por %p63, %p64
      %p66 = scmp.ne.s32.totalorder %s58, %s61
      %p67 = scmp.eq.s32.totalorder %s22, 0
      %p68 = por %p66, %p67
      %p69 = scmp.ne.s32.totalorder %s58, %s61
      %p70 = scmp.eq.s32.totalorder %s27, 1
      %p71 = por %p69, %p70
      %p72 = scmp.ne.s32.totalorder %s61, %s62
      %p73 = scmp.eq.s32.totalorder %s27, 0
      %p74 = por %p72, %p73
      %p75 = scmp.ne.s32.totalorder %s61, %s62
      %p76 = scmp.eq.s32.totalorder %s28, 1
      %p77 = por %p75, %p76
      %p79 = scmp.ne.s32.totalorder %s62, %s78
      %p80 = scmp.eq.s32.totalorder %s28, 0
      %p81 = por %p79, %p80
      %s82 = ssub.s32 %s22, %s29
      %p83 = scmp.eq.s32.totalorder %s82, 0
      %s85 = sadd.s32 %s84, 1
      %s86 = scalar_select %p83, %s84, %s85
      %p89 = pneg %p83
      %p90 = scmp.eq.s32.totalorder %s22, 1
      %p91 = por %p89, %p90
      %p92 = scmp.ne.s32.totalorder %s84, %s87
      %p93 = scmp.eq.s32.totalorder %s22, 0
      %p94 = por %p92, %p93
      %p95 = scmp.ne.s32.totalorder %s84, %s87
      %p96 = scmp.eq.s32.totalorder %s27, 1
      %p97 = por %p95, %p96
      %p98 = scmp.ne.s32.totalorder %s87, %s88
      %p99 = scmp.eq.s32.totalorder %s27, 0
      %p100 = por %p98, %p99
      %p101 = scmp.ne.s32.totalorder %s87, %s88
      %p102 = scmp.eq.s32.totalorder %s28, 1
      %p103 = por %p101, %p102
      %p105 = scmp.ne.s32.totalorder %s88, %s104
      %p106 = scmp.eq.s32.totalorder %s28, 0
      %p107 = por %p105, %p106
      %s109 = sadd.s32 %s108, 1
      %p112 = scmp.eq.s32.totalorder %s22, 1
      %p113 = scmp.ne.s32.totalorder %s108, %s110
      %p114 = scmp.eq.s32.totalorder %s22, 0
      %p115 = por %p113, %p114
      %p116 = scmp.ne.s32.totalorder %s108, %s110
      %p117 = scmp.eq.s32.totalorder %s27, 1
      %p118 = por %p116, %p117
      %p119 = scmp.ne.s32.totalorder %s110, %s111
      %p120 = scmp.eq.s32.totalorder %s27, 0
      %p121 = por %p119, %p120
      %p122 = scmp.ne.s32.totalorder %s110, %s111
      %p123 = scmp.eq.s32.totalorder %s28, 1
      %p124 = por %p122, %p123
      %p126 = scmp.ne.s32.totalorder %s111, %s125
      %p127 = scmp.eq.s32.totalorder %s28, 0
      %p128 = por %p126, %p127
      %s130 = sadd.s32 %s129, 1
      %p133 = scmp.eq.s32.totalorder %s22, 1
      %p134 = scmp.ne.s32.totalorder %s129, %s131
      %p135 = scmp.eq.s32.totalorder %s22, 0
      %p136 = por %p134, %p135
      %p137 = scmp.ne.s32.totalorder %s129, %s131
      %p138 = scmp.eq.s32.totalorder %s27, 1
      %p139 = por %p137, %p138
      %p140 = scmp.ne.s32.totalorder %s131, %s132
      %p141 = scmp.eq.s32.totalorder %s27, 0
      %p142 = por %p140, %p141
      %p143 = scmp.ne.s32.totalorder %s131, %s132
      %p144 = scmp.eq.s32.totalorder %s28, 1
      %p145 = por %p143, %p144
      %p147 = scmp.ne.s32.totalorder %s132, %s146
      %p148 = scmp.eq.s32.totalorder %s28, 0
      %p149 = por %p147, %p148
      %s151 = sadd.s32 %s150, 1
      %p154 = scmp.eq.s32.totalorder %s22, 1
      %p155 = scmp.ne.s32.totalorder %s150, %s152
      %p156 = scmp.eq.s32.totalorder %s22, 0
      %p157 = por %p155, %p156
      %p158 = scmp.ne.s32.totalorder %s150, %s152
      %p159 = scmp.eq.s32.totalorder %s27, 1
      %p160 = por %p158, %p159
      %p161 = scmp.ne.s32.totalorder %s152, %s153
      %p162 = scmp.eq.s32.totalorder %s27, 0
      %p163 = por %p161, %p162
      %p164 = scmp.ne.s32.totalorder %s152, %s153
      %p165 = scmp.eq.s32.totalorder %s28, 1
      %p166 = por %p164, %p165
      %p168 = scmp.ne.s32.totalorder %s153, %s167
      %p169 = scmp.eq.s32.totalorder %s28, 0
      %p170 = por %p168, %p169
      %s172 = sadd.s32 %s171, 1
      %p175 = scmp.eq.s32.totalorder %s22, 1
      %p176 = scmp.ne.s32.totalorder %s171, %s173
      %p177 = scmp.eq.s32.totalorder %s22, 0
      %p178 = por %p176, %p177
      %p179 = scmp.ne.s32.totalorder %s171, %s173
      %p180 = scmp.eq.s32.totalorder %s27, 1
      %p181 = por %p179, %p180
      %p182 = scmp.ne.s32.totalorder %s173, %s174
      %p183 = scmp.eq.s32.totalorder %s27, 0
      %p184 = por %p182, %p183
      %p185 = scmp.ne.s32.totalorder %s173, %s174
      %p186 = scmp.eq.s32.totalorder %s28, 1
      %p187 = por %p185, %p186
      %p189 = scmp.ne.s32.totalorder %s174, %s188
      %p190 = scmp.eq.s32.totalorder %s28, 0
      %p191 = por %p189, %p190
      %s193 = sadd.s32 %s192, 1
      %p196 = scmp.eq.s32.totalorder %s22, 1
      %p197 = scmp.ne.s32.totalorder %s192, %s194
      %p198 = scmp.eq.s32.totalorder %s22, 0
      %p199 = por %p197, %p198
      %p200 = scmp.ne.s32.totalorder %s192, %s194
      %p201 = scmp.eq.s32.totalorder %s27, 1
      %p202 = por %p200, %p201
      %p203 = scmp.ne.s32.totalorder %s194, %s195
      %p204 = scmp.eq.s32.totalorder %s27, 0
      %p205 = por %p203, %p204
      %p206 = scmp.ne.s32.totalorder %s194, %s195
      %p207 = scmp.eq.s32.totalorder %s28, 1
      %p208 = por %p206, %p207
      %p210 = scmp.ne.s32.totalorder %s195, %s209
      %p211 = scmp.eq.s32.totalorder %s28, 0
      %p212 = por %p210, %p211
      %s213 = ssub.s32 %s22, %s29
      %p214 = scmp.eq.s32.totalorder %s213, 0
      %s216 = sadd.s32 %s215, 1
      %s217 = scalar_select %p214, %s215, %s216
      %p220 = pneg %p214
      %p221 = scmp.eq.s32.totalorder %s22, 1
      %p222 = por %p220, %p221
      %p223 = scmp.ne.s32.totalorder %s215, %s218
      %p224 = scmp.eq.s32.totalorder %s22, 0
      %p225 = por %p223, %p224
      %p226 = scmp.ne.s32.totalorder %s215, %s218
      %p227 = scmp.eq.s32.totalorder %s27, 1
      %p228 = por %p226, %p227
      %p229 = scmp.ne.s32.totalorder %s218, %s219
      %p230 = scmp.eq.s32.totalorder %s27, 0
      %p231 = por %p229, %p230
      %p232 = scmp.ne.s32.totalorder %s218, %s219
      %p233 = scmp.eq.s32.totalorder %s28, 1
      %p234 = por %p232, %p233
      %p236 = scmp.ne.s32.totalorder %s219, %s235
      %p237 = scmp.eq.s32.totalorder %s28, 0
      %p238 = por %p236, %p237
      %p239 = scmp.le.s32.totalorder 1, %s22
      %p240 = scmp.lt.s32.totalorder %s22, 3
      %p241 = pnand %p239, %p240
      %p242 = pneg %p241
      // Predicated region
      $region9: #{tpu_custom_call.1} parent=5 // pred_check
        _
      $region10: #{tpu_custom_call.1} parent=5 // pred_check_branch
        %244 = sbr.rel (%p241) target = $region12
      $region11: #{tpu_custom_call.1} parent=5 // pred_region
        %s245 = ssub.s32 %s22, 1
        // Predicated region
        $region13: #{tpu_custom_call.1} parent=11 // pred_check
          %p246 = pneg %p121
        $region14: #{tpu_custom_call.1} parent=11 // pred_check_branch
          %248 = sbr.rel (%p246) target = $region16
        $region15: #{tpu_custom_call.1} parent=11 // pred_region
          %s250 = ssub.s32 4096, 4096
          %251 = vsyncadd [#allocation6], %s250
          %s252 = sshll.u32 [#allocation5], 4
          %s253 = int_to_ptr.vmem [resolvable:$true] %s252
          %258 = dma.hbm_to_vmem [thread:$0]  %s3, 4096, %s253, [#allocation6], 256, 256, 16
        $region16: #{tpu_custom_call.1} parent=11 // pred_fallthru
          _
        // Predicated region
        $region17: #{tpu_custom_call.1} parent=11 // pred_check
          %p259 = pneg %p142
        $region18: #{tpu_custom_call.1} parent=11 // pred_check_branch
          %261 = sbr.rel (%p259) target = $region20
        $region19: #{tpu_custom_call.1} parent=11 // pred_region
          %s263 = ssub.s32 4096, 4096
          %264 = vsyncadd [#allocation6], %s263
          %s265 = sshll.u32 [#allocation7], 4
          %s266 = int_to_ptr.vmem [resolvable:$true] %s265
          %271 = dma.hbm_to_vmem [thread:$0]  %s4, 4096, %s266, [#allocation6], 256, 256, 16
        $region20: #{tpu_custom_call.1} parent=11 // pred_fallthru
          _
        // Predicated region
        $region21: #{tpu_custom_call.1} parent=11 // pred_check
          %p272 = pneg %p163
        $region22: #{tpu_custom_call.1} parent=11 // pred_check_branch
          %274 = sbr.rel (%p272) target = $region24
        $region23: #{tpu_custom_call.1} parent=11 // pred_region
          _
        $region24: #{tpu_custom_call.1} parent=11 // pred_fallthru
          _
        // Predicated region
        $region25: #{tpu_custom_call.1} parent=11 // pred_check
          %p275 = pneg %p184
        $region26: #{tpu_custom_call.1} parent=11 // pred_check_branch
          %277 = sbr.rel (%p275) target = $region28
        $region27: #{tpu_custom_call.1} parent=11 // pred_region
          %s279 = ssub.s32 4096, 4096
          %280 = vsyncadd [#allocation9], %s279
          %s281 = sshll.u32 [#allocation8], 4
          %s282 = int_to_ptr.vmem [resolvable:$true] %s281
          %287 = dma.hbm_to_vmem [thread:$0]  %s6, 4096, %s282, [#allocation9], 64, 64, 4
        $region28: #{tpu_custom_call.1} parent=11 // pred_fallthru
          _
        // Predicated region
        $region29: #{tpu_custom_call.1} parent=11 // pred_check
          %p288 = pneg %p205
        $region30: #{tpu_custom_call.1} parent=11 // pred_check_branch
          %290 = sbr.rel (%p288) target = $region32
        $region31: #{tpu_custom_call.1} parent=11 // pred_region
          _
        $region32: #{tpu_custom_call.1} parent=11 // pred_fallthru
          _
      $region12: #{tpu_custom_call.1} parent=5 // pred_fallthru
        _
      %p291 = scmp.lt.s32.totalorder %s22, 2
      // Predicated region
      $region33: #{tpu_custom_call.1} parent=5 // pred_check
        %p292 = pneg %p291
      $region34: #{tpu_custom_call.1} parent=5 // pred_check_branch
        %294 = sbr.rel (%p292) target = $region36
      $region35: #{tpu_custom_call.1} parent=5 // pred_region
        // Predicated region
        $region37: #{tpu_custom_call.1} parent=35 // pred_check
          %p295 = pneg %p42
        $region38: #{tpu_custom_call.1} parent=35 // pred_check_branch
          %297 = sbr.rel (%p295) target = $region40
        $region39: #{tpu_custom_call.1} parent=35 // pred_region
          %s298 = smul.u32 2, %s22
          %p299 = scmp.lt.s32.totalorder %s298, 3
          %s300 = scalar_select %p299, %s298, 3
          %s301 = smul.addr %s300, 3
          %s302 = smul.addr %s301, 8
          %s303 = scalar_lea.vmem %s0, %s302
          %s304 = smul.u32 2, %s22
        $region40: #{tpu_custom_call.1} parent=35 // pred_fallthru
          _
        // Predicated region
        $region41: #{tpu_custom_call.1} parent=35 // pred_check
          %p305 = pneg %p68
        $region42: #{tpu_custom_call.1} parent=35 // pred_check_branch
          %307 = sbr.rel (%p305) target = $region44
        $region43: #{tpu_custom_call.1} parent=35 // pred_region
          %s308 = smul.u32 2, %s22
          %p309 = scmp.lt.s32.totalorder %s308, 3
          %s310 = scalar_select %p309, %s308, 3
          %s311 = smul.addr %s310, 3
          %s312 = smul.addr %s311, 8
          %s313 = scalar_lea.vmem %s1, %s312
          %s314 = smul.u32 2, %s22
        $region44: #{tpu_custom_call.1} parent=35 // pred_fallthru
          _
        // Predicated region
        $region45: #{tpu_custom_call.1} parent=35 // pred_check
          %p315 = pneg %p94
        $region46: #{tpu_custom_call.1} parent=35 // pred_check_branch
          %317 = sbr.rel (%p315) target = $region48
        $region47: #{tpu_custom_call.1} parent=35 // pred_region
          %s318 = sand.u32 %s84, 1
          %s319 = scalar_lea.sflag [#allocation3], %s318
          %s320 = sand.u32 %s84, 1
          %s321 = smul.addr %s320, 128
          %s322 = scalar_lea.vmem [#allocation2], %s321
          %s323 = smul.u32 2, %s22
          %s325 = ssub.s32 2048, 2048
          %326 = vsyncadd %s319, %s325
          %s327 = smul.addr %s323, 16
          %s328 = smul.addr %s327, 64
          %s329 = scalar_lea.hbm %s2, %s328
          %s330 = sshll.u32 %s322, 4
          %s331 = int_to_ptr.vmem [resolvable:$true] %s330
          %336 = dma.hbm_to_vmem [thread:$0]  %s329, 2048, %s331, %s319, 64, 64, 4
        $region48: #{tpu_custom_call.1} parent=35 // pred_fallthru
          _
      $region36: #{tpu_custom_call.1} parent=5 // pred_fallthru
        _
      %p337 = scmp.le.s32.totalorder 1, %s22
      %p338 = scmp.lt.s32.totalorder %s22, 3
      %p339 = pnand %p337, %p338
      %p340 = pneg %p339
      // Predicated region
      $region49: #{tpu_custom_call.1} parent=5 // pred_check
        _
      $region50: #{tpu_custom_call.1} parent=5 // pred_check_branch
        %342 = sbr.rel (%p339) target = $region52
      $region51: #{tpu_custom_call.1} parent=5 // pred_region
        %s343 = ssub.s32 %s22, 1
        %s344 = sand.u32 %s87, 1
        %s345 = scalar_lea.sflag [#allocation3], %s344
        %s346 = sand.u32 %s87, 1
        %s347 = smul.addr %s346, 128
        %s348 = scalar_lea.vmem [#allocation2], %s347
        // Predicated region
        $region53: #{tpu_custom_call.1} parent=51 // pred_check
          %p349 = pneg %p100
        $region54: #{tpu_custom_call.1} parent=51 // pred_check_branch
          %351 = sbr.rel (%p349) target = $region56
        $region55: #{tpu_custom_call.1} parent=51 // pred_region
          %352 = dma.done %s345, 2048
        $region56: #{tpu_custom_call.1} parent=51 // pred_fallthru
          _
        // Predicated region
        $region57: #{tpu_custom_call.1} parent=51 // pred_check
          %p353 = pneg %p121
        $region58: #{tpu_custom_call.1} parent=51 // pred_check_branch
          %355 = sbr.rel (%p353) target = $region60
        $region59: #{tpu_custom_call.1} parent=51 // pred_region
          %356 = dma.done [#allocation6], 4096
        $region60: #{tpu_custom_call.1} parent=51 // pred_fallthru
          _
        // Predicated region
        $region61: #{tpu_custom_call.1} parent=51 // pred_check
          %p357 = pneg %p142
        $region62: #{tpu_custom_call.1} parent=51 // pred_check_branch
          %359 = sbr.rel (%p357) target = $region64
        $region63: #{tpu_custom_call.1} parent=51 // pred_region
          %360 = dma.done [#allocation6], 4096
        $region64: #{tpu_custom_call.1} parent=51 // pred_fallthru
          _
        // Predicated region
        $region65: #{tpu_custom_call.1} parent=51 // pred_check
          %p361 = pneg %p184
        $region66: #{tpu_custom_call.1} parent=51 // pred_check_branch
          %363 = sbr.rel (%p361) target = $region68
        $region67: #{tpu_custom_call.1} parent=51 // pred_region
          %364 = dma.done [#allocation9], 4096
        $region68: #{tpu_custom_call.1} parent=51 // pred_fallthru
          _
        %s365 = smul.u32 2, %s27
        %p366 = scmp.lt.s32.totalorder %s365, 3
        %s367 = scalar_select %p366, %s365, 3
        %s368 = smul.addr %s367, 3
        %s369 = smul.addr %s368, 8
        %s370 = scalar_lea.vmem %s0, %s369
        %p371 = pneg %p48
        %p372 = pneg %p45
        %s373 = smul.u32 2, %s27
        %p374 = scmp.lt.s32.totalorder %s373, 3
        %s375 = scalar_select %p374, %s373, 3
        %s376 = smul.addr %s375, 3
        %s377 = smul.addr %s376, 8
        %s378 = scalar_lea.vmem %s1, %s377
        %p379 = pneg %p74
        %p380 = pneg %p71
        %s381 = sand.u32 %s87, 1
        %s382 = scalar_lea.sflag [#allocation3], %s381
        %s383 = sand.u32 %s87, 1
        %s384 = smul.addr %s383, 128
        %s385 = scalar_lea.vmem [#allocation2], %s384
        %p386 = pneg %p100
        %p387 = pneg %p97
        %p388 = pneg %p121
        %p389 = pneg %p118
        %p390 = pneg %p142
        %p391 = pneg %p139
        %p392 = pneg %p163
        %p393 = pneg %p160
        %p394 = pneg %p184
        %p395 = pneg %p181
        %p396 = pneg %p205
        %p397 = pneg %p202
        %p398 = pneg %p231
        %p399 = pneg %p228
        %s400 = sand.u32 %s218, 1
        %s401 = scalar_lea.sflag [#allocation4], %s400
        %s402 = sand.u32 %s218, 1
        %s403 = smul.addr %s402, 32
        %s404 = scalar_lea.vmem [#allocation10], %s403
        %s405 = smul.u32 2, %s27
        %p406 = scmp.lt.s32.totalorder %s405, 3
        %s407 = scalar_select %p406, %s405, 3
        %s408 = smul.addr %s407, 3
        %s409 = smul.addr %s408, 8
        %s410 = scalar_lea.vmem %s0, %s409
        %s411 = smul.u32 2, %s27
        %s412 = smul.u32 2, %s27
        %p413 = scmp.lt.s32.totalorder %s412, 3
        %s414 = scalar_select %p413, %s412, 3
        %s415 = smul.addr %s414, 3
        %s416 = smul.addr %s415, 8
        %s417 = scalar_lea.vmem %s1, %s416
        %s418 = smul.u32 2, %s27
        %s419 = smul.u32 2, %s27
        %s420 = smul.u32 2, %s27
        %v422 = vld [vmem:[%s410] sm:$0xff]
        %v423 = vld [vmem:[%s410 + $0x8] sm:$0xff]
        %v424 = vld [vmem:[%s410 + $0x10] sm:$0xff]
        %v425 = vld [vmem:[%s410 + $0x18] sm:$0xff]
        %v426 = vld [vmem:[%s410 + $0x20] sm:$0xff]
        %v427 = vld [vmem:[%s410 + $0x28] sm:$0xff]
        %v428 = vld [vmem:[%s417] sm:$0xff]
        %v429 = vld [vmem:[%s417 + $0x8] sm:$0xff]
        %v430 = vld [vmem:[%s417 + $0x10] sm:$0xff]
        %v431 = vld [vmem:[%s417 + $0x18] sm:$0xff]
        %v432 = vld [vmem:[%s417 + $0x20] sm:$0xff]
        %v433 = vld [vmem:[%s417 + $0x28] sm:$0xff]
        %v434 = vlaneseq
        %v435 = vand.u32 %v434, 127
        %436 = vset.pattern.permute.xlu0 0
        %437 = vperm.xlu0 %436, %v422
        %v438 = vpop.permute.xlu0 %437
        %439 = vset.pattern.permute.xlu0 0
        %440 = vperm.xlu0 %439, %v423
        %v441 = vpop.permute.xlu0 %440
        %442 = vset.pattern.permute.xlu0 0
        %443 = vperm.xlu0 %442, %v424
        %v444 = vpop.permute.xlu0 %443
        %445 = vset.pattern.permute.xlu0 0
        %446 = vperm.xlu0 %445, %v425
        %v447 = vpop.permute.xlu0 %446
        %448 = vset.pattern.permute.xlu0 0
        %449 = vperm.xlu0 %448, %v426
        %v450 = vpop.permute.xlu0 %449
        %451 = vset.pattern.permute.xlu0 0
        %452 = vperm.xlu0 %451, %v427
        %v453 = vpop.permute.xlu0 %452
        %vm454 = vcmp.ge.s32.totalorder %v435, %v438
        %vm455 = vcmp.ge.s32.totalorder %v435, %v441
        %vm456 = vcmp.ge.s32.totalorder %v435, %v444
        %vm457 = vcmp.ge.s32.totalorder %v435, %v447
        %vm458 = vcmp.ge.s32.totalorder %v435, %v450
        %vm459 = vcmp.ge.s32.totalorder %v435, %v453
        %460 = vset.pattern.permute.xlu0 0
        %461 = vperm.xlu0 %460, %v428
        %v462 = vpop.permute.xlu0 %461
        %463 = vset.pattern.permute.xlu0 0
        %464 = vperm.xlu0 %463, %v429
        %v465 = vpop.permute.xlu0 %464
        %466 = vset.pattern.permute.xlu0 0
        %467 = vperm.xlu0 %466, %v430
        %v468 = vpop.permute.xlu0 %467
        %469 = vset.pattern.permute.xlu0 0
        %470 = vperm.xlu0 %469, %v431
        %v471 = vpop.permute.xlu0 %470
        %472 = vset.pattern.permute.xlu0 0
        %473 = vperm.xlu0 %472, %v432
        %v474 = vpop.permute.xlu0 %473
        %475 = vset.pattern.permute.xlu0 0
        %476 = vperm.xlu0 %475, %v433
        %v477 = vpop.permute.xlu0 %476
        %vm478 = vcmp.lt.s32.totalorder %v435, %v462
        %vm479 = vcmp.lt.s32.totalorder %v435, %v465
        %vm480 = vcmp.lt.s32.totalorder %v435, %v468
        %vm481 = vcmp.lt.s32.totalorder %v435, %v471
        %vm482 = vcmp.lt.s32.totalorder %v435, %v474
        %vm483 = vcmp.lt.s32.totalorder %v435, %v477
        %vm484 = vmand %vm454, %vm478
        %vm485 = vmand %vm455, %vm479
        %vm486 = vmand %vm456, %vm480
        %vm487 = vmand %vm457, %vm481
        %vm488 = vmand %vm458, %vm482
        %vm489 = vmand %vm459, %vm483
        %v490 = vsel %vm484, 1, 0
        %v491 = vsel %vm485, 1, 0
        %v492 = vsel %vm486, 1, 0
        %v493 = vsel %vm487, 1, 0
        %v494 = vsel %vm488, 1, 0
        %v495 = vsel %vm489, 1, 0
        %v496 = vcvt.s32.f32 %v490
        %v497 = vcvt.s32.f32 %v491
        %v498 = vcvt.s32.f32 %v492
        %v499 = vcvt.s32.f32 %v493
        %v500 = vcvt.s32.f32 %v494
        %v501 = vcvt.s32.f32 %v495
        %v502 = vpack.c.bf16 %v497, %v496
        %v503 = vpack.c.bf16 %v498, %v498
        %v504 = vpack.c.bf16 %v500, %v499
        %v505 = vpack.c.bf16 %v501, %v501
        %v506 = vsub.s32 %v428, %v422
        %v507 = vsub.s32 %v429, %v423
        %v508 = vsub.s32 %v430, %v424
        %v509 = vsub.s32 %v431, %v425
        %v510 = vsub.s32 %v432, %v426
        %v511 = vsub.s32 %v433, %v427
        %vm512 = vcmp.gt.s32.totalorder %v506, 1
        %v513 = vsel %vm512, %v506, 1
        %vm514 = vcmp.gt.s32.totalorder %v507, 1
        %v515 = vsel %vm514, %v507, 1
        %vm516 = vcmp.gt.s32.totalorder %v508, 1
        %v517 = vsel %vm516, %v508, 1
        %vm518 = vcmp.gt.s32.totalorder %v509, 1
        %v519 = vsel %vm518, %v509, 1
        %vm520 = vcmp.gt.s32.totalorder %v510, 1
        %v521 = vsel %vm520, %v510, 1
        %vm522 = vcmp.gt.s32.totalorder %v511, 1
        %v523 = vsel %vm522, %v511, 1
        %v524 = vcvt.s32.f32 %v513
        %v525 = vcvt.s32.f32 %v515
        %v526 = vcvt.s32.f32 %v517
        %v527 = vcvt.s32.f32 %v519
        %v528 = vcvt.s32.f32 %v521
        %v529 = vcvt.s32.f32 %v523
        %v530 = vrcp.pop %v524
        %v531 = vmul.f32 1.0, %v530
        %v532 = vrcp.pop %v525
        %v533 = vmul.f32 1.0, %v532
        %v534 = vrcp.pop %v526
        %v535 = vmul.f32 1.0, %v534
        %v536 = vrcp.pop %v527
        %v537 = vmul.f32 1.0, %v536
        %v538 = vrcp.pop %v528
        %v539 = vmul.f32 1.0, %v538
        %v540 = vrcp.pop %v529
        %v541 = vmul.f32 1.0, %v540
        %v542 = vld [vmem:[%s348] sm:$0xf]
        %v543 = vld [vmem:[%s348 + $0x4] sm:$0xf]
        %v544 = vld [vmem:[%s348 + $0x8] sm:$0xf]
        %v545 = vld [vmem:[%s348 + $0xc] sm:$0xf]
        %v546 = vld [vmem:[%s348 + $0x10] sm:$0xf]
        %v547 = vld [vmem:[%s348 + $0x14] sm:$0xf]
        %v548 = vld [vmem:[%s348 + $0x18] sm:$0xf]
        %v549 = vld [vmem:[%s348 + $0x1c] sm:$0xf]
        %v550 = vld [vmem:[%s348 + $0x20] sm:$0xf]
        %v551 = vld [vmem:[%s348 + $0x24] sm:$0xf]
        %v552 = vld [vmem:[%s348 + $0x28] sm:$0xf]
        %v553 = vld [vmem:[%s348 + $0x2c] sm:$0xf]
        %v554 = vld [vmem:[%s348 + $0x30] sm:$0xf]
        %v555 = vld [vmem:[%s348 + $0x34] sm:$0xf]
        %v556 = vld [vmem:[%s348 + $0x38] sm:$0xf]
        %v557 = vld [vmem:[%s348 + $0x3c] sm:$0xf]
        %v558 = vld [vmem:[%s348 + $0x40] sm:$0xf]
        %v559 = vld [vmem:[%s348 + $0x44] sm:$0xf]
        %v560 = vld [vmem:[%s348 + $0x48] sm:$0xf]
        %v561 = vld [vmem:[%s348 + $0x4c] sm:$0xf]
        %v562 = vld [vmem:[%s348 + $0x50] sm:$0xf]
        %v563 = vld [vmem:[%s348 + $0x54] sm:$0xf]
        %v564 = vld [vmem:[%s348 + $0x58] sm:$0xf]
        %v565 = vld [vmem:[%s348 + $0x5c] sm:$0xf]
        %v566 = vld [vmem:[%s348 + $0x60] sm:$0xf]
        %v567 = vld [vmem:[%s348 + $0x64] sm:$0xf]
        %v568 = vld [vmem:[%s348 + $0x68] sm:$0xf]
        %v569 = vld [vmem:[%s348 + $0x6c] sm:$0xf]
        %v570 = vld [vmem:[%s348 + $0x70] sm:$0xf]
        %v571 = vld [vmem:[%s348 + $0x74] sm:$0xf]
        %v572 = vld [vmem:[%s348 + $0x78] sm:$0xf]
        %v573 = vld [vmem:[%s348 + $0x7c] sm:$0xf]
        %v590 = vunpack.c.l.b16 %v542
        %v591 = vunpack.c.l.b16 %v543
        %v592 = vunpack.c.l.b16 %v544
        %v593 = vunpack.c.l.b16 %v545
        %v594 = vunpack.c.l.b16 %v546
        %v595 = vunpack.c.l.b16 %v547
        %v596 = vunpack.c.l.b16 %v548
        %v597 = vunpack.c.l.b16 %v549
        %v598 = vunpack.c.l.b16 %v550
        %v599 = vunpack.c.l.b16 %v551
        %v600 = vunpack.c.l.b16 %v552
        %v601 = vunpack.c.l.b16 %v553
        %v602 = vunpack.c.l.b16 %v554
        %v603 = vunpack.c.l.b16 %v555
        %v604 = vunpack.c.l.b16 %v556
        %v605 = vunpack.c.l.b16 %v557
        %v606 = vpack.c.b16 %v591, %v590
        %v607 = vpack.c.b16 %v593, %v592
        %v608 = vpack.c.b16 %v595, %v594
        %v609 = vpack.c.b16 %v597, %v596
        %v610 = vpack.c.b16 %v599, %v598
        %v611 = vpack.c.b16 %v601, %v600
        %v612 = vpack.c.b16 %v603, %v602
        %v613 = vpack.c.b16 %v605, %v604
        %622 = vmatprep.subr.bf16.mxu0 0
        %623 = vmatpush1.bf16.msra.mxu0 %v606
        %624 = vmatprep.subr.bf16.mxu0 0
        %625 = vmatpush1.bf16.msra.mxu0 %v607
        %626 = vmatprep.subr.bf16.mxu0 0
        %627 = vmatpush1.bf16.msra.mxu0 %v608
        %628 = vmatprep.subr.bf16.mxu0 0
        %629 = vmatpush1.bf16.msra.mxu0 %v609
        %630 = vmatprep.subr.bf16.mxu0 0
        %631 = vmatpush1.bf16.msra.mxu0 %v610
        %632 = vmatprep.subr.bf16.mxu0 0
        %633 = vmatpush1.bf16.msra.mxu0 %v611
        %634 = vmatprep.subr.bf16.mxu0 0
        %635 = vmatpush1.bf16.msra.mxu0 %v612
        %636 = vmatprep.subr.bf16.mxu0 0
        %637 = vmatpush1.bf16.msra.mxu0 %v613
        %638 = vmatprep.subr.bf16.mxu0 0
        %639 = vmatpush1.bf16.msra.mxu0 0
        %640 = vmatprep.subr.bf16.mxu0 0
        %641 = vmatpush1.bf16.msra.mxu0 0
        %642 = vmatprep.subr.bf16.mxu0 0
        %643 = vmatpush1.bf16.msra.mxu0 0
        %644 = vmatprep.subr.bf16.mxu0 0
        %645 = vmatpush1.bf16.msra.mxu0 0
        %646 = vmatprep.subr.bf16.mxu0 0
        %647 = vmatpush1.bf16.msra.mxu0 0
        %648 = vmatprep.subr.bf16.mxu0 0
        %649 = vmatpush1.bf16.msra.mxu0 0
        %650 = vmatprep.subr.bf16.mxu0 0
        %651 = vmatpush1.bf16.msra.mxu0 0
        %652 = vmatprep.subr.bf16.mxu0 0
        %653 = vmatpush1.bf16.msra.mxu0 0
        %654 = vmatprep.mubr.bf16.mxu0 0
        %655 = vmatmul.mubr.bf16.gmra.mrb[0].mxu0 %v502
        %v656 = vpop.f32.mrb[0].mxu0
        %v657 = vadd.f32 0.0, %v656
        %v658 = vpop.f32.mrb[0].mxu0
        %v659 = vpop.f32.mrb[0].mxu0
        %v660 = vadd.f32 0.0, %v659
        %v661 = vpop.f32.mrb[0].mxu0
        %662 = vmatprep.mubr.bf16.mxu0 0
        %663 = vmatmul.mubr.bf16.gmra.mrb[0].mxu0 %v503
        %v664 = vpop.f32.mrb[0].mxu0
        %v665 = vadd.f32 0.0, %v664
        %v666 = vpop.f32.mrb[0].mxu0
        %v667 = vpop.f32.mrb[0].mxu0
        %v668 = vpop.f32.mrb[0].mxu0
        %669 = vdwg.mxu0
        %v686 = vunpack.c.l.b16 %v558
        %v687 = vunpack.c.l.b16 %v559
        %v688 = vunpack.c.l.b16 %v560
        %v689 = vunpack.c.l.b16 %v561
        %v690 = vunpack.c.l.b16 %v562
        %v691 = vunpack.c.l.b16 %v563
        %v692 = vunpack.c.l.b16 %v564
        %v693 = vunpack.c.l.b16 %v565
        %v694 = vunpack.c.l.b16 %v566
        %v695 = vunpack.c.l.b16 %v567
        %v696 = vunpack.c.l.b16 %v568
        %v697 = vunpack.c.l.b16 %v569
        %v698 = vunpack.c.l.b16 %v570
        %v699 = vunpack.c.l.b16 %v571
        %v700 = vunpack.c.l.b16 %v572
        %v701 = vunpack.c.l.b16 %v573
        %v702 = vpack.c.b16 %v687, %v686
        %v703 = vpack.c.b16 %v689, %v688
        %v704 = vpack.c.b16 %v691, %v690
        %v705 = vpack.c.b16 %v693, %v692
        %v706 = vpack.c.b16 %v695, %v694
        %v707 = vpack.c.b16 %v697, %v696
        %v708 = vpack.c.b16 %v699, %v698
        %v709 = vpack.c.b16 %v701, %v700
        %718 = vmatprep.subr.bf16.mxu0 0
        %719 = vmatpush1.bf16.msra.mxu0 %v702
        %720 = vmatprep.subr.bf16.mxu0 0
        %721 = vmatpush1.bf16.msra.mxu0 %v703
        %722 = vmatprep.subr.bf16.mxu0 0
        %723 = vmatpush1.bf16.msra.mxu0 %v704
        %724 = vmatprep.subr.bf16.mxu0 0
        %725 = vmatpush1.bf16.msra.mxu0 %v705
        %726 = vmatprep.subr.bf16.mxu0 0
        %727 = vmatpush1.bf16.msra.mxu0 %v706
        %728 = vmatprep.subr.bf16.mxu0 0
        %729 = vmatpush1.bf16.msra.mxu0 %v707
        %730 = vmatprep.subr.bf16.mxu0 0
        %731 = vmatpush1.bf16.msra.mxu0 %v708
        %732 = vmatprep.subr.bf16.mxu0 0
        %733 = vmatpush1.bf16.msra.mxu0 %v709
        %734 = vmatprep.subr.bf16.mxu0 0
        %735 = vmatpush1.bf16.msra.mxu0 0
        %736 = vmatprep.subr.bf16.mxu0 0
        %737 = vmatpush1.bf16.msra.mxu0 0
        %738 = vmatprep.subr.bf16.mxu0 0
        %739 = vmatpush1.bf16.msra.mxu0 0
        %740 = vmatprep.subr.bf16.mxu0 0
        %741 = vmatpush1.bf16.msra.mxu0 0
        %742 = vmatprep.subr.bf16.mxu0 0
        %743 = vmatpush1.bf16.msra.mxu0 0
        %744 = vmatprep.subr.bf16.mxu0 0
        %745 = vmatpush1.bf16.msra.mxu0 0
        %746 = vmatprep.subr.bf16.mxu0 0
        %747 = vmatpush1.bf16.msra.mxu0 0
        %748 = vmatprep.subr.bf16.mxu0 0
        %749 = vmatpush1.bf16.msra.mxu0 0
        %750 = vmatprep.mubr.bf16.mxu0 0
        %751 = vmatmul.mubr.bf16.gmra.mrb[0].mxu0 %v504
        %v752 = vpop.f32.mrb[0].mxu0
        %v753 = vadd.f32 0.0, %v752
        %v754 = vpop.f32.mrb[0].mxu0
        %v755 = vpop.f32.mrb[0].mxu0
        %v756 = vadd.f32 0.0, %v755
        %v757 = vpop.f32.mrb[0].mxu0
        %758 = vmatprep.mubr.bf16.mxu0 0
        %759 = vmatmul.mubr.bf16.gmra.mrb[0].mxu0 %v505
        %v760 = vpop.f32.mrb[0].mxu0
        %v761 = vadd.f32 0.0, %v760
        %v762 = vpop.f32.mrb[0].mxu0
        %v763 = vpop.f32.mrb[0].mxu0
        %v764 = vpop.f32.mrb[0].mxu0
        %765 = vdwg.mxu0
        %767 = vset.pattern.permute.xlu0 0
        %768 = vperm.xlu0 %767, %v531
        %v769 = vpop.permute.xlu0 %768
        %772 = vset.pattern.permute.xlu0 0
        %773 = vperm.xlu0 %772, %v533
        %v774 = vpop.permute.xlu0 %773
        %777 = vset.pattern.permute.xlu0 0
        %778 = vperm.xlu0 %777, %v535
        %v779 = vpop.permute.xlu0 %778
        %782 = vset.pattern.permute.xlu0 0
        %783 = vperm.xlu0 %782, %v537
        %v784 = vpop.permute.xlu0 %783
        %787 = vset.pattern.permute.xlu0 0
        %788 = vperm.xlu0 %787, %v539
        %v789 = vpop.permute.xlu0 %788
        %792 = vset.pattern.permute.xlu0 0
        %793 = vperm.xlu0 %792, %v541
        %v794 = vpop.permute.xlu0 %793
        %v796 = vmul.f32 %v657, %v769
        %v797 = vmul.f32 %v660, %v774
        %v798 = vmul.f32 %v665, %v779
        %v799 = vmul.f32 %v753, %v784
        %v800 = vmul.f32 %v756, %v789
        %v801 = vmul.f32 %v761, %v794
        %v802 = vpack.c.bf16 %v797, %v796
        %v803 = vpack.c.bf16 %v800, %v799
        %v804 = vpack.c.bf16 %v798, %v798
        %v805 = vpack.c.bf16 %v801, %v801
        %v806 = vld [vmem:[#allocation5] sm:$0xff]
        %v807 = vld [vmem:[#allocation5 + $0x8] sm:$0xff]
        %v808 = vld [vmem:[#allocation5 + $0x10] sm:$0xff]
        %v809 = vld [vmem:[#allocation5 + $0x18] sm:$0xff]
        %v810 = vld [vmem:[#allocation5 + $0x20] sm:$0xff]
        %v811 = vld [vmem:[#allocation5 + $0x28] sm:$0xff]
        %v812 = vld [vmem:[#allocation5 + $0x30] sm:$0xff]
        %v813 = vld [vmem:[#allocation5 + $0x38] sm:$0xff]
        %v814 = vld [vmem:[#allocation5 + $0x40] sm:$0xff]
        %v815 = vld [vmem:[#allocation5 + $0x48] sm:$0xff]
        %v816 = vld [vmem:[#allocation5 + $0x50] sm:$0xff]
        %v817 = vld [vmem:[#allocation5 + $0x58] sm:$0xff]
        %v818 = vld [vmem:[#allocation5 + $0x60] sm:$0xff]
        %v819 = vld [vmem:[#allocation5 + $0x68] sm:$0xff]
        %v820 = vld [vmem:[#allocation5 + $0x70] sm:$0xff]
        %v821 = vld [vmem:[#allocation5 + $0x78] sm:$0xff]
        %v822 = vld [vmem:[#allocation5 + $0x80] sm:$0xff]
        %v823 = vld [vmem:[#allocation5 + $0x88] sm:$0xff]
        %v824 = vld [vmem:[#allocation5 + $0x90] sm:$0xff]
        %v825 = vld [vmem:[#allocation5 + $0x98] sm:$0xff]
        %v826 = vld [vmem:[#allocation5 + $0xa0] sm:$0xff]
        %v827 = vld [vmem:[#allocation5 + $0xa8] sm:$0xff]
        %v828 = vld [vmem:[#allocation5 + $0xb0] sm:$0xff]
        %v829 = vld [vmem:[#allocation5 + $0xb8] sm:$0xff]
        %v830 = vld [vmem:[#allocation5 + $0xc0] sm:$0xff]
        %v831 = vld [vmem:[#allocation5 + $0xc8] sm:$0xff]
        %v832 = vld [vmem:[#allocation5 + $0xd0] sm:$0xff]
        %v833 = vld [vmem:[#allocation5 + $0xd8] sm:$0xff]
        %v834 = vld [vmem:[#allocation5 + $0xe0] sm:$0xff]
        %v835 = vld [vmem:[#allocation5 + $0xe8] sm:$0xff]
        %v836 = vld [vmem:[#allocation5 + $0xf0] sm:$0xff]
        %v837 = vld [vmem:[#allocation5 + $0xf8] sm:$0xff]
        %v870 = vunpack.c.l.b16 %v806
        %v871 = vunpack.c.h.b16 %v806
        %v872 = vunpack.c.l.b16 %v807
        %v873 = vunpack.c.h.b16 %v807
        %v874 = vunpack.c.l.b16 %v808
        %v875 = vunpack.c.h.b16 %v808
        %v876 = vunpack.c.l.b16 %v809
        %v877 = vunpack.c.h.b16 %v809
        %v878 = vunpack.c.l.b16 %v810
        %v879 = vunpack.c.h.b16 %v810
        %v880 = vunpack.c.l.b16 %v811
        %v881 = vunpack.c.h.b16 %v811
        %v882 = vunpack.c.l.b16 %v812
        %v883 = vunpack.c.h.b16 %v812
        %v884 = vunpack.c.l.b16 %v813
        %v885 = vunpack.c.h.b16 %v813
        %v886 = vunpack.c.l.b16 %v814
        %v887 = vunpack.c.h.b16 %v814
        %v888 = vunpack.c.l.b16 %v815
        %v889 = vunpack.c.h.b16 %v815
        %v890 = vunpack.c.l.b16 %v816
        %v891 = vunpack.c.h.b16 %v816
        %v892 = vunpack.c.l.b16 %v817
        %v893 = vunpack.c.h.b16 %v817
        %v894 = vunpack.c.l.b16 %v818
        %v895 = vunpack.c.h.b16 %v818
        %v896 = vunpack.c.l.b16 %v819
        %v897 = vunpack.c.h.b16 %v819
        %v898 = vunpack.c.l.b16 %v820
        %v899 = vunpack.c.h.b16 %v820
        %v900 = vunpack.c.l.b16 %v821
        %v901 = vunpack.c.h.b16 %v821
        %v902 = vunpack.c.l.b16 %v822
        %v903 = vunpack.c.h.b16 %v822
        %v904 = vunpack.c.l.b16 %v823
        %v905 = vunpack.c.h.b16 %v823
        %v906 = vunpack.c.l.b16 %v824
        %v907 = vunpack.c.h.b16 %v824
        %v908 = vunpack.c.l.b16 %v825
        %v909 = vunpack.c.h.b16 %v825
        %v910 = vunpack.c.l.b16 %v826
        %v911 = vunpack.c.h.b16 %v826
        %v912 = vunpack.c.l.b16 %v827
        %v913 = vunpack.c.h.b16 %v827
        %v914 = vunpack.c.l.b16 %v828
        %v915 = vunpack.c.h.b16 %v828
        %v916 = vunpack.c.l.b16 %v829
        %v917 = vunpack.c.h.b16 %v829
        %v918 = vunpack.c.l.b16 %v830
        %v919 = vunpack.c.h.b16 %v830
        %v920 = vunpack.c.l.b16 %v831
        %v921 = vunpack.c.h.b16 %v831
        %v922 = vunpack.c.l.b16 %v832
        %v923 = vunpack.c.h.b16 %v832
        %v924 = vunpack.c.l.b16 %v833
        %v925 = vunpack.c.h.b16 %v833
        %v926 = vunpack.c.l.b16 %v834
        %v927 = vunpack.c.h.b16 %v834
        %v928 = vunpack.c.l.b16 %v835
        %v929 = vunpack.c.h.b16 %v835
        %v930 = vunpack.c.l.b16 %v836
        %v931 = vunpack.c.h.b16 %v836
        %v932 = vunpack.c.l.b16 %v837
        %v933 = vunpack.c.h.b16 %v837
        %v934 = vpack.c.b16 %v874, %v870
        %v935 = vpack.c.b16 %v875, %v871
        %v936 = vpack.c.b16 %v876, %v872
        %v937 = vpack.c.b16 %v877, %v873
        %v938 = vpack.c.b16 %v882, %v878
        %v939 = vpack.c.b16 %v883, %v879
        %v940 = vpack.c.b16 %v884, %v880
        %v941 = vpack.c.b16 %v885, %v881
        %v942 = vpack.c.b16 %v890, %v886
        %v943 = vpack.c.b16 %v891, %v887
        %v944 = vpack.c.b16 %v892, %v888
        %v945 = vpack.c.b16 %v893, %v889
        %v946 = vpack.c.b16 %v898, %v894
        %v947 = vpack.c.b16 %v899, %v895
        %v948 = vpack.c.b16 %v900, %v896
        %v949 = vpack.c.b16 %v901, %v897
        %v950 = vpack.c.b16 %v906, %v902
        %v951 = vpack.c.b16 %v907, %v903
        %v952 = vpack.c.b16 %v908, %v904
        %v953 = vpack.c.b16 %v909, %v905
        %v954 = vpack.c.b16 %v914, %v910
        %v955 = vpack.c.b16 %v915, %v911
        %v956 = vpack.c.b16 %v916, %v912
        %v957 = vpack.c.b16 %v917, %v913
        %v958 = vpack.c.b16 %v922, %v918
        %v959 = vpack.c.b16 %v923, %v919
        %v960 = vpack.c.b16 %v924, %v920
        %v961 = vpack.c.b16 %v925, %v921
        %v962 = vpack.c.b16 %v930, %v926
        %v963 = vpack.c.b16 %v931, %v927
        %v964 = vpack.c.b16 %v932, %v928
        %v965 = vpack.c.b16 %v933, %v929
        %998 = vmatprep.subr.bf16.mxu0 %v935
        %999 = vmatpush1.bf16.msra.mxu0 %v934
        %1000 = vmatprep.subr.bf16.mxu0 %v939
        %1001 = vmatpush1.bf16.msra.mxu0 %v938
        %1002 = vmatprep.subr.bf16.mxu0 %v943
        %1003 = vmatpush1.bf16.msra.mxu0 %v942
        %1004 = vmatprep.subr.bf16.mxu0 %v947
        %1005 = vmatpush1.bf16.msra.mxu0 %v946
        %1006 = vmatprep.subr.bf16.mxu0 %v951
        %1007 = vmatpush1.bf16.msra.mxu0 %v950
        %1008 = vmatprep.subr.bf16.mxu0 %v955
        %1009 = vmatpush1.bf16.msra.mxu0 %v954
        %1010 = vmatprep.subr.bf16.mxu0 %v959
        %1011 = vmatpush1.bf16.msra.mxu0 %v958
        %1012 = vmatprep.subr.bf16.mxu0 %v963
        %1013 = vmatpush1.bf16.msra.mxu0 %v962
        %1014 = vmatprep.subr.bf16.mxu0 0
        %1015 = vmatpush1.bf16.msra.mxu0 0
        %1016 = vmatprep.subr.bf16.mxu0 0
        %1017 = vmatpush1.bf16.msra.mxu0 0
        %1018 = vmatprep.subr.bf16.mxu0 0
        %1019 = vmatpush1.bf16.msra.mxu0 0
        %1020 = vmatprep.subr.bf16.mxu0 0
        %1021 = vmatpush1.bf16.msra.mxu0 0
        %1022 = vmatprep.subr.bf16.mxu0 0
        %1023 = vmatpush1.bf16.msra.mxu0 0
        %1024 = vmatprep.subr.bf16.mxu0 0
        %1025 = vmatpush1.bf16.msra.mxu0 0
        %1026 = vmatprep.subr.bf16.mxu0 0
        %1027 = vmatpush1.bf16.msra.mxu0 0
        %1028 = vmatprep.subr.bf16.mxu0 0
        %1029 = vmatpush1.bf16.msra.mxu0 0
        %1030 = vmatprep.mubr.bf16.mxu0 0
        %1031 = vmatmul.mubr.bf16.gmra.mrb[0].mxu0 %v802
        %v1032 = vpop.f32.mrb[0].mxu0
        %v1033 = vadd.f32 0.0, %v1032
        %v1034 = vpop.f32.mrb[0].mxu0
        %v1035 = vadd.f32 0.0, %v1034
        %v1036 = vpop.f32.mrb[0].mxu0
        %v1037 = vadd.f32 0.0, %v1036
        %v1038 = vpop.f32.mrb[0].mxu0
        %v1039 = vadd.f32 0.0, %v1038
        %1040 = vmatprep.mubr.bf16.mxu0 0
        %1041 = vmatmul.mubr.bf16.gmra.mrb[0].mxu0 %v803
        %v1042 = vpop.f32.mrb[0].mxu0
        %v1043 = vadd.f32 0.0, %v1042
        %v1044 = vpop.f32.mrb[0].mxu0
        %v1045 = vadd.f32 0.0, %v1044
        %v1046 = vpop.f32.mrb[0].mxu0
        %v1047 = vadd.f32 0.0, %v1046
        %v1048 = vpop.f32.mrb[0].mxu0
        %v1049 = vadd.f32 0.0, %v1048
        %1050 = vdwg.mxu0
        %1051 = vmatprep.subr.bf16.mxu0 %v937
        %1052 = vmatpush1.bf16.msra.mxu0 %v936
        %1053 = vmatprep.subr.bf16.mxu0 %v941
        %1054 = vmatpush1.bf16.msra.mxu0 %v940
        %1055 = vmatprep.subr.bf16.mxu0 %v945
        %1056 = vmatpush1.bf16.msra.mxu0 %v944
        %1057 = vmatprep.subr.bf16.mxu0 %v949
        %1058 = vmatpush1.bf16.msra.mxu0 %v948
        %1059 = vmatprep.subr.bf16.mxu0 %v953
        %1060 = vmatpush1.bf16.msra.mxu0 %v952
        %1061 = vmatprep.subr.bf16.mxu0 %v957
        %1062 = vmatpush1.bf16.msra.mxu0 %v956
        %1063 = vmatprep.subr.bf16.mxu0 %v961
        %1064 = vmatpush1.bf16.msra.mxu0 %v960
        %1065 = vmatprep.subr.bf16.mxu0 %v965
        %1066 = vmatpush1.bf16.msra.mxu0 %v964
        %1067 = vmatprep.subr.bf16.mxu0 0
        %1068 = vmatpush1.bf16.msra.mxu0 0
        %1069 = vmatprep.subr.bf16.mxu0 0
        %1070 = vmatpush1.bf16.msra.mxu0 0
        %1071 = vmatprep.subr.bf16.mxu0 0
        %1072 = vmatpush1.bf16.msra.mxu0 0
        %1073 = vmatprep.subr.bf16.mxu0 0
        %1074 = vmatpush1.bf16.msra.mxu0 0
        %1075 = vmatprep.subr.bf16.mxu0 0
        %1076 = vmatpush1.bf16.msra.mxu0 0
        %1077 = vmatprep.subr.bf16.mxu0 0
        %1078 = vmatpush1.bf16.msra.mxu0 0
        %1079 = vmatprep.subr.bf16.mxu0 0
        %1080 = vmatpush1.bf16.msra.mxu0 0
        %1081 = vmatprep.subr.bf16.mxu0 0
        %1082 = vmatpush1.bf16.msra.mxu0 0
        %1083 = vmatprep.mubr.bf16.mxu0 0
        %1084 = vmatmul.mubr.bf16.gmra.mrb[0].mxu0 %v802
        %v1085 = vpop.f32.mrb[0].mxu0
        %v1086 = vadd.f32 0.0, %v1085
        %v1087 = vpop.f32.mrb[0].mxu0
        %v1088 = vadd.f32 0.0, %v1087
        %v1089 = vpop.f32.mrb[0].mxu0
        %v1090 = vadd.f32 0.0, %v1089
        %v1091 = vpop.f32.mrb[0].mxu0
        %v1092 = vadd.f32 0.0, %v1091
        %1093 = vmatprep.mubr.bf16.mxu0 0
        %1094 = vmatmul.mubr.bf16.gmra.mrb[0].mxu0 %v803
        %v1095 = vpop.f32.mrb[0].mxu0
        %v1096 = vadd.f32 0.0, %v1095
        %v1097 = vpop.f32.mrb[0].mxu0
        %v1098 = vadd.f32 0.0, %v1097
        %v1099 = vpop.f32.mrb[0].mxu0
        %v1100 = vadd.f32 0.0, %v1099
        %v1101 = vpop.f32.mrb[0].mxu0
        %v1102 = vadd.f32 0.0, %v1101
        %1103 = vdwg.mxu0
        %v1104 = vld [vmem:[#allocation7] sm:$0xff]
        %v1105 = vld [vmem:[#allocation7 + $0x8] sm:$0xff]
        %v1106 = vld [vmem:[#allocation7 + $0x10] sm:$0xff]
        %v1107 = vld [vmem:[#allocation7 + $0x18] sm:$0xff]
        %v1108 = vld [vmem:[#allocation7 + $0x20] sm:$0xff]
        %v1109 = vld [vmem:[#allocation7 + $0x28] sm:$0xff]
        %v1110 = vld [vmem:[#allocation7 + $0x30] sm:$0xff]
        %v1111 = vld [vmem:[#allocation7 + $0x38] sm:$0xff]
        %v1112 = vld [vmem:[#allocation7 + $0x40] sm:$0xff]
        %v1113 = vld [vmem:[#allocation7 + $0x48] sm:$0xff]
        %v1114 = vld [vmem:[#allocation7 + $0x50] sm:$0xff]
        %v1115 = vld [vmem:[#allocation7 + $0x58] sm:$0xff]
        %v1116 = vld [vmem:[#allocation7 + $0x60] sm:$0xff]
        %v1117 = vld [vmem:[#allocation7 + $0x68] sm:$0xff]
        %v1118 = vld [vmem:[#allocation7 + $0x70] sm:$0xff]
        %v1119 = vld [vmem:[#allocation7 + $0x78] sm:$0xff]
        %v1120 = vld [vmem:[#allocation7 + $0x80] sm:$0xff]
        %v1121 = vld [vmem:[#allocation7 + $0x88] sm:$0xff]
        %v1122 = vld [vmem:[#allocation7 + $0x90] sm:$0xff]
        %v1123 = vld [vmem:[#allocation7 + $0x98] sm:$0xff]
        %v1124 = vld [vmem:[#allocation7 + $0xa0] sm:$0xff]
        %v1125 = vld [vmem:[#allocation7 + $0xa8] sm:$0xff]
        %v1126 = vld [vmem:[#allocation7 + $0xb0] sm:$0xff]
        %v1127 = vld [vmem:[#allocation7 + $0xb8] sm:$0xff]
        %v1128 = vld [vmem:[#allocation7 + $0xc0] sm:$0xff]
        %v1129 = vld [vmem:[#allocation7 + $0xc8] sm:$0xff]
        %v1130 = vld [vmem:[#allocation7 + $0xd0] sm:$0xff]
        %v1131 = vld [vmem:[#allocation7 + $0xd8] sm:$0xff]
        %v1132 = vld [vmem:[#allocation7 + $0xe0] sm:$0xff]
        %v1133 = vld [vmem:[#allocation7 + $0xe8] sm:$0xff]
        %v1134 = vld [vmem:[#allocation7 + $0xf0] sm:$0xff]
        %v1135 = vld [vmem:[#allocation7 + $0xf8] sm:$0xff]
        %v1138 = vunpack.c.l.b16 %v804
        %v1139 = vunpack.c.l.b16 %v805
        %v1140 = vpack.c.b16 %v1139, %v1138
        %v1174 = vunpack.c.l.b16 %v1104
        %v1175 = vunpack.c.h.b16 %v1104
        %v1176 = vunpack.c.l.b16 %v1105
        %v1177 = vunpack.c.h.b16 %v1105
        %v1178 = vunpack.c.l.b16 %v1106
        %v1179 = vunpack.c.h.b16 %v1106
        %v1180 = vunpack.c.l.b16 %v1107
        %v1181 = vunpack.c.h.b16 %v1107
        %v1182 = vunpack.c.l.b16 %v1108
        %v1183 = vunpack.c.h.b16 %v1108
        %v1184 = vunpack.c.l.b16 %v1109
        %v1185 = vunpack.c.h.b16 %v1109
        %v1186 = vunpack.c.l.b16 %v1110
        %v1187 = vunpack.c.h.b16 %v1110
        %v1188 = vunpack.c.l.b16 %v1111
        %v1189 = vunpack.c.h.b16 %v1111
        %v1190 = vunpack.c.l.b16 %v1112
        %v1191 = vunpack.c.h.b16 %v1112
        %v1192 = vunpack.c.l.b16 %v1113
        %v1193 = vunpack.c.h.b16 %v1113
        %v1194 = vunpack.c.l.b16 %v1114
        %v1195 = vunpack.c.h.b16 %v1114
        %v1196 = vunpack.c.l.b16 %v1115
        %v1197 = vunpack.c.h.b16 %v1115
        %v1198 = vunpack.c.l.b16 %v1116
        %v1199 = vunpack.c.h.b16 %v1116
        %v1200 = vunpack.c.l.b16 %v1117
        %v1201 = vunpack.c.h.b16 %v1117
        %v1202 = vunpack.c.l.b16 %v1118
        %v1203 = vunpack.c.h.b16 %v1118
        %v1204 = vunpack.c.l.b16 %v1119
        %v1205 = vunpack.c.h.b16 %v1119
        %v1206 = vunpack.c.l.b16 %v1120
        %v1207 = vunpack.c.h.b16 %v1120
        %v1208 = vunpack.c.l.b16 %v1121
        %v1209 = vunpack.c.h.b16 %v1121
        %v1210 = vunpack.c.l.b16 %v1122
        %v1211 = vunpack.c.h.b16 %v1122
        %v1212 = vunpack.c.l.b16 %v1123
        %v1213 = vunpack.c.h.b16 %v1123
        %v1214 = vunpack.c.l.b16 %v1124
        %v1215 = vunpack.c.h.b16 %v1124
        %v1216 = vunpack.c.l.b16 %v1125
        %v1217 = vunpack.c.h.b16 %v1125
        %v1218 = vunpack.c.l.b16 %v1126
        %v1219 = vunpack.c.h.b16 %v1126
        %v1220 = vunpack.c.l.b16 %v1127
        %v1221 = vunpack.c.h.b16 %v1127
        %v1222 = vunpack.c.l.b16 %v1128
        %v1223 = vunpack.c.h.b16 %v1128
        %v1224 = vunpack.c.l.b16 %v1129
        %v1225 = vunpack.c.h.b16 %v1129
        %v1226 = vunpack.c.l.b16 %v1130
        %v1227 = vunpack.c.h.b16 %v1130
        %v1228 = vunpack.c.l.b16 %v1131
        %v1229 = vunpack.c.h.b16 %v1131
        %v1230 = vunpack.c.l.b16 %v1132
        %v1231 = vunpack.c.h.b16 %v1132
        %v1232 = vunpack.c.l.b16 %v1133
        %v1233 = vunpack.c.h.b16 %v1133
        %v1234 = vunpack.c.l.b16 %v1134
        %v1235 = vunpack.c.h.b16 %v1134
        %v1236 = vunpack.c.l.b16 %v1135
        %v1237 = vunpack.c.h.b16 %v1135
        %v1238 = vpack.c.b16 %v1178, %v1174
        %v1239 = vpack.c.b16 %v1179, %v1175
        %v1240 = vpack.c.b16 %v1180, %v1176
        %v1241 = vpack.c.b16 %v1181, %v1177
        %v1242 = vpack.c.b16 %v1186, %v1182
        %v1243 = vpack.c.b16 %v1187, %v1183
        %v1244 = vpack.c.b16 %v1188, %v1184
        %v1245 = vpack.c.b16 %v1189, %v1185
        %v1246 = vpack.c.b16 %v1194, %v1190
        %v1247 = vpack.c.b16 %v1195, %v1191
        %v1248 = vpack.c.b16 %v1196, %v1192
        %v1249 = vpack.c.b16 %v1197, %v1193
        %v1250 = vpack.c.b16 %v1202, %v1198
        %v1251 = vpack.c.b16 %v1203, %v1199
        %v1252 = vpack.c.b16 %v1204, %v1200
        %v1253 = vpack.c.b16 %v1205, %v1201
        %v1254 = vpack.c.b16 %v1210, %v1206
        %v1255 = vpack.c.b16 %v1211, %v1207
        %v1256 = vpack.c.b16 %v1212, %v1208
        %v1257 = vpack.c.b16 %v1213, %v1209
        %v1258 = vpack.c.b16 %v1218, %v1214
        %v1259 = vpack.c.b16 %v1219, %v1215
        %v1260 = vpack.c.b16 %v1220, %v1216
        %v1261 = vpack.c.b16 %v1221, %v1217
        %v1262 = vpack.c.b16 %v1226, %v1222
        %v1263 = vpack.c.b16 %v1227, %v1223
        %v1264 = vpack.c.b16 %v1228, %v1224
        %v1265 = vpack.c.b16 %v1229, %v1225
        %v1266 = vpack.c.b16 %v1234, %v1230
        %v1267 = vpack.c.b16 %v1235, %v1231
        %v1268 = vpack.c.b16 %v1236, %v1232
        %v1269 = vpack.c.b16 %v1237, %v1233
        %1302 = vmatprep.subr.bf16.mxu0 %v1239
        %1303 = vmatpush1.bf16.msra.mxu0 %v1238
        %1304 = vmatprep.subr.bf16.mxu0 %v1243
        %1305 = vmatpush1.bf16.msra.mxu0 %v1242
        %1306 = vmatprep.subr.bf16.mxu0 %v1247
        %1307 = vmatpush1.bf16.msra.mxu0 %v1246
        %1308 = vmatprep.subr.bf16.mxu0 %v1251
        %1309 = vmatpush1.bf16.msra.mxu0 %v1250
        %1310 = vmatprep.subr.bf16.mxu0 %v1255
        %1311 = vmatpush1.bf16.msra.mxu0 %v1254
        %1312 = vmatprep.subr.bf16.mxu0 %v1259
        %1313 = vmatpush1.bf16.msra.mxu0 %v1258
        %1314 = vmatprep.subr.bf16.mxu0 %v1263
        %1315 = vmatpush1.bf16.msra.mxu0 %v1262
        %1316 = vmatprep.subr.bf16.mxu0 %v1267
        %1317 = vmatpush1.bf16.msra.mxu0 %v1266
        %1318 = vmatprep.subr.bf16.mxu0 0
        %1319 = vmatpush1.bf16.msra.mxu0 0
        %1320 = vmatprep.subr.bf16.mxu0 0
        %1321 = vmatpush1.bf16.msra.mxu0 0
        %1322 = vmatprep.subr.bf16.mxu0 0
        %1323 = vmatpush1.bf16.msra.mxu0 0
        %1324 = vmatprep.subr.bf16.mxu0 0
        %1325 = vmatpush1.bf16.msra.mxu0 0
        %1326 = vmatprep.subr.bf16.mxu0 0
        %1327 = vmatpush1.bf16.msra.mxu0 0
        %1328 = vmatprep.subr.bf16.mxu0 0
        %1329 = vmatpush1.bf16.msra.mxu0 0
        %1330 = vmatprep.subr.bf16.mxu0 0
        %1331 = vmatpush1.bf16.msra.mxu0 0
        %1332 = vmatprep.subr.bf16.mxu0 0
        %1333 = vmatpush1.bf16.msra.mxu0 0
        %1334 = vmatprep.mubr.bf16.mxu0 0
        %1335 = vmatmul.mubr.bf16.gmra.mrb[0].mxu0 %v1140
        %v1336 = vpop.f32.mrb[0].mxu0
        %v1337 = vadd.f32 0.0, %v1336
        %v1338 = vpop.f32.mrb[0].mxu0
        %v1339 = vadd.f32 0.0, %v1338
        %v1340 = vpop.f32.mrb[0].mxu0
        %v1341 = vadd.f32 0.0, %v1340
        %v1342 = vpop.f32.mrb[0].mxu0
        %v1343 = vadd.f32 0.0, %v1342
        %1344 = vdwg.mxu0
        %1345 = vmatprep.subr.bf16.mxu0 %v1241
        %1346 = vmatpush1.bf16.msra.mxu0 %v1240
        %1347 = vmatprep.subr.bf16.mxu0 %v1245
        %1348 = vmatpush1.bf16.msra.mxu0 %v1244
        %1349 = vmatprep.subr.bf16.mxu0 %v1249
        %1350 = vmatpush1.bf16.msra.mxu0 %v1248
        %1351 = vmatprep.subr.bf16.mxu0 %v1253
        %1352 = vmatpush1.bf16.msra.mxu0 %v1252
        %1353 = vmatprep.subr.bf16.mxu0 %v1257
        %1354 = vmatpush1.bf16.msra.mxu0 %v1256
        %1355 = vmatprep.subr.bf16.mxu0 %v1261
        %1356 = vmatpush1.bf16.msra.mxu0 %v1260
        %1357 = vmatprep.subr.bf16.mxu0 %v1265
        %1358 = vmatpush1.bf16.msra.mxu0 %v1264
        %1359 = vmatprep.subr.bf16.mxu0 %v1269
        %1360 = vmatpush1.bf16.msra.mxu0 %v1268
        %1361 = vmatprep.subr.bf16.mxu0 0
        %1362 = vmatpush1.bf16.msra.mxu0 0
        %1363 = vmatprep.subr.bf16.mxu0 0
        %1364 = vmatpush1.bf16.msra.mxu0 0
        %1365 = vmatprep.subr.bf16.mxu0 0
        %1366 = vmatpush1.bf16.msra.mxu0 0
        %1367 = vmatprep.subr.bf16.mxu0 0
        %1368 = vmatpush1.bf16.msra.mxu0 0
        %1369 = vmatprep.subr.bf16.mxu0 0
        %1370 = vmatpush1.bf16.msra.mxu0 0
        %1371 = vmatprep.subr.bf16.mxu0 0
        %1372 = vmatpush1.bf16.msra.mxu0 0
        %1373 = vmatprep.subr.bf16.mxu0 0
        %1374 = vmatpush1.bf16.msra.mxu0 0
        %1375 = vmatprep.subr.bf16.mxu0 0
        %1376 = vmatpush1.bf16.msra.mxu0 0
        %1377 = vmatprep.mubr.bf16.mxu0 0
        %1378 = vmatmul.mubr.bf16.gmra.mrb[0].mxu0 %v1140
        %v1379 = vpop.f32.mrb[0].mxu0
        %v1380 = vadd.f32 0.0, %v1379
        %v1381 = vpop.f32.mrb[0].mxu0
        %v1382 = vadd.f32 0.0, %v1381
        %v1383 = vpop.f32.mrb[0].mxu0
        %v1384 = vadd.f32 0.0, %v1383
        %v1385 = vpop.f32.mrb[0].mxu0
        %v1386 = vadd.f32 0.0, %v1385
        %1387 = vdwg.mxu0
        %v1388 = vlaneseq
        %v1389 = vshrl.u32 %v1388, 7
        %v1390 = vsub.s32 0, %v1389
        %v1391 = vrot.slane %v1337, %v1390
        %v1392 = vlaneseq
        %v1393 = vshrl.u32 %v1392, 7
        %v1394 = vsub.s32 0, %v1393
        %v1395 = vrot.slane %v1339, %v1394
        %v1396 = vlaneseq
        %v1397 = vshrl.u32 %v1396, 7
        %v1398 = vsub.s32 0, %v1397
        %v1399 = vrot.slane %v1380, %v1398
        %v1400 = vlaneseq
        %v1401 = vshrl.u32 %v1400, 7
        %v1402 = vsub.s32 0, %v1401
        %v1403 = vrot.slane %v1382, %v1402
        %v1404 = vlaneseq
        %v1405 = vshrl.u32 %v1404, 7
        %v1406 = vsub.s32 0, %v1405
        %v1407 = vrot.slane %v1341, %v1406
        %v1408 = vlaneseq
        %v1409 = vshrl.u32 %v1408, 7
        %v1410 = vsub.s32 0, %v1409
        %v1411 = vrot.slane %v1343, %v1410
        %v1412 = vlaneseq
        %v1413 = vshrl.u32 %v1412, 7
        %v1414 = vsub.s32 0, %v1413
        %v1415 = vrot.slane %v1384, %v1414
        %v1416 = vlaneseq
        %v1417 = vshrl.u32 %v1416, 7
        %v1418 = vsub.s32 0, %v1417
        %v1419 = vrot.slane %v1386, %v1418
        %v1420 = vadd.f32 %v1033, %v1391
        %v1421 = vadd.f32 %v1035, %v1395
        %v1422 = vadd.f32 %v1086, %v1399
        %v1423 = vadd.f32 %v1088, %v1403
        %v1424 = vadd.f32 %v1037, %v1391
        %v1425 = vadd.f32 %v1039, %v1395
        %v1426 = vadd.f32 %v1090, %v1399
        %v1427 = vadd.f32 %v1092, %v1403
        %v1428 = vadd.f32 %v1043, %v1407
        %v1429 = vadd.f32 %v1045, %v1411
        %v1430 = vadd.f32 %v1096, %v1415
        %v1431 = vadd.f32 %v1098, %v1419
        %v1432 = vadd.f32 %v1047, %v1407
        %v1433 = vadd.f32 %v1049, %v1411
        %v1434 = vadd.f32 %v1100, %v1415
        %v1435 = vadd.f32 %v1102, %v1419
        %v1436 = vld [vmem:[%s5] sm:$0xf]
        %v1438 = vlaneseq
        %v1439 = vshrl.u32 %v1438, 7
        %v1440 = vsub.s32 0, %v1439
        %v1441 = vrot.slane %v1436, %v1440
        %v1442 = vlaneseq
        %v1443 = vshrl.u32 %v1442, 7
        %v1444 = vsub.s32 1, %v1443
        %v1445 = vrot.slane %v1436, %v1444
        %v1446 = vlaneseq
        %v1447 = vshrl.u32 %v1446, 7
        %v1448 = vsub.s32 2, %v1447
        %v1449 = vrot.slane %v1436, %v1448
        %v1450 = vlaneseq
        %v1451 = vshrl.u32 %v1450, 7
        %v1452 = vsub.s32 3, %v1451
        %v1453 = vrot.slane %v1436, %v1452
        %v1458 = vadd.f32 %v1420, %v1441
        %v1459 = vadd.f32 %v1421, %v1445
        %v1460 = vadd.f32 %v1422, %v1449
        %v1461 = vadd.f32 %v1423, %v1453
        %v1462 = vadd.f32 %v1424, %v1441
        %v1463 = vadd.f32 %v1425, %v1445
        %v1464 = vadd.f32 %v1426, %v1449
        %v1465 = vadd.f32 %v1427, %v1453
        %v1466 = vadd.f32 %v1428, %v1441
        %v1467 = vadd.f32 %v1429, %v1445
        %v1468 = vadd.f32 %v1430, %v1449
        %v1469 = vadd.f32 %v1431, %v1453
        %v1470 = vadd.f32 %v1432, %v1441
        %v1471 = vadd.f32 %v1433, %v1445
        %v1472 = vadd.f32 %v1434, %v1449
        %v1473 = vadd.f32 %v1435, %v1453
        %v1474 = vmax.f32 %v1458, 0.0
        %v1475 = vmax.f32 %v1459, 0.0
        %v1476 = vmax.f32 %v1460, 0.0
        %v1477 = vmax.f32 %v1461, 0.0
        %v1478 = vmax.f32 %v1462, 0.0
        %v1479 = vmax.f32 %v1463, 0.0
        %v1480 = vmax.f32 %v1464, 0.0
        %v1481 = vmax.f32 %v1465, 0.0
        %v1482 = vmax.f32 %v1466, 0.0
        %v1483 = vmax.f32 %v1467, 0.0
        %v1484 = vmax.f32 %v1468, 0.0
        %v1485 = vmax.f32 %v1469, 0.0
        %v1486 = vmax.f32 %v1470, 0.0
        %v1487 = vmax.f32 %v1471, 0.0
        %v1488 = vmax.f32 %v1472, 0.0
        %v1489 = vmax.f32 %v1473, 0.0
        %v1490 = vpack.c.bf16 %v1478, %v1474
        %v1491 = vpack.c.bf16 %v1479, %v1475
        %v1492 = vpack.c.bf16 %v1480, %v1476
        %v1493 = vpack.c.bf16 %v1481, %v1477
        %v1494 = vpack.c.bf16 %v1486, %v1482
        %v1495 = vpack.c.bf16 %v1487, %v1483
        %v1496 = vpack.c.bf16 %v1488, %v1484
        %v1497 = vpack.c.bf16 %v1489, %v1485
        %v1498 = vld [vmem:[#allocation8] sm:$0xf]
        %v1499 = vld [vmem:[#allocation8 + $0x4] sm:$0xf]
        %v1500 = vld [vmem:[#allocation8 + $0x8] sm:$0xf]
        %v1501 = vld [vmem:[#allocation8 + $0xc] sm:$0xf]
        %v1502 = vld [vmem:[#allocation8 + $0x10] sm:$0xf]
        %v1503 = vld [vmem:[#allocation8 + $0x14] sm:$0xf]
        %v1504 = vld [vmem:[#allocation8 + $0x18] sm:$0xf]
        %v1505 = vld [vmem:[#allocation8 + $0x1c] sm:$0xf]
        %v1506 = vld [vmem:[#allocation8 + $0x20] sm:$0xf]
        %v1507 = vld [vmem:[#allocation8 + $0x24] sm:$0xf]
        %v1508 = vld [vmem:[#allocation8 + $0x28] sm:$0xf]
        %v1509 = vld [vmem:[#allocation8 + $0x2c] sm:$0xf]
        %v1510 = vld [vmem:[#allocation8 + $0x30] sm:$0xf]
        %v1511 = vld [vmem:[#allocation8 + $0x34] sm:$0xf]
        %v1512 = vld [vmem:[#allocation8 + $0x38] sm:$0xf]
        %v1513 = vld [vmem:[#allocation8 + $0x3c] sm:$0xf]
        %v1514 = vld [vmem:[#allocation8 + $0x40] sm:$0xf]
        %v1515 = vld [vmem:[#allocation8 + $0x44] sm:$0xf]
        %v1516 = vld [vmem:[#allocation8 + $0x48] sm:$0xf]
        %v1517 = vld [vmem:[#allocation8 + $0x4c] sm:$0xf]
        %v1518 = vld [vmem:[#allocation8 + $0x50] sm:$0xf]
        %v1519 = vld [vmem:[#allocation8 + $0x54] sm:$0xf]
        %v1520 = vld [vmem:[#allocation8 + $0x58] sm:$0xf]
        %v1521 = vld [vmem:[#allocation8 + $0x5c] sm:$0xf]
        %v1522 = vld [vmem:[#allocation8 + $0x60] sm:$0xf]
        %v1523 = vld [vmem:[#allocation8 + $0x64] sm:$0xf]
        %v1524 = vld [vmem:[#allocation8 + $0x68] sm:$0xf]
        %v1525 = vld [vmem:[#allocation8 + $0x6c] sm:$0xf]
        %v1526 = vld [vmem:[#allocation8 + $0x70] sm:$0xf]
        %v1527 = vld [vmem:[#allocation8 + $0x74] sm:$0xf]
        %v1528 = vld [vmem:[#allocation8 + $0x78] sm:$0xf]
        %v1529 = vld [vmem:[#allocation8 + $0x7c] sm:$0xf]
        %v1530 = vld [vmem:[#allocation8 + $0x80] sm:$0xf]
        %v1531 = vld [vmem:[#allocation8 + $0x84] sm:$0xf]
        %v1532 = vld [vmem:[#allocation8 + $0x88] sm:$0xf]
        %v1533 = vld [vmem:[#allocation8 + $0x8c] sm:$0xf]
        %v1534 = vld [vmem:[#allocation8 + $0x90] sm:$0xf]
        %v1535 = vld [vmem:[#allocation8 + $0x94] sm:$0xf]
        %v1536 = vld [vmem:[#allocation8 + $0x98] sm:$0xf]
        %v1537 = vld [vmem:[#allocation8 + $0x9c] sm:$0xf]
        %v1538 = vld [vmem:[#allocation8 + $0xa0] sm:$0xf]
        %v1539 = vld [vmem:[#allocation8 + $0xa4] sm:$0xf]
        %v1540 = vld [vmem:[#allocation8 + $0xa8] sm:$0xf]
        %v1541 = vld [vmem:[#allocation8 + $0xac] sm:$0xf]
        %v1542 = vld [vmem:[#allocation8 + $0xb0] sm:$0xf]
        %v1543 = vld [vmem:[#allocation8 + $0xb4] sm:$0xf]
        %v1544 = vld [vmem:[#allocation8 + $0xb8] sm:$0xf]
        %v1545 = vld [vmem:[#allocation8 + $0xbc] sm:$0xf]
        %v1546 = vld [vmem:[#allocation8 + $0xc0] sm:$0xf]
        %v1547 = vld [vmem:[#allocation8 + $0xc4] sm:$0xf]
        %v1548 = vld [vmem:[#allocation8 + $0xc8] sm:$0xf]
        %v1549 = vld [vmem:[#allocation8 + $0xcc] sm:$0xf]
        %v1550 = vld [vmem:[#allocation8 + $0xd0] sm:$0xf]
        %v1551 = vld [vmem:[#allocation8 + $0xd4] sm:$0xf]
        %v1552 = vld [vmem:[#allocation8 + $0xd8] sm:$0xf]
        %v1553 = vld [vmem:[#allocation8 + $0xdc] sm:$0xf]
        %v1554 = vld [vmem:[#allocation8 + $0xe0] sm:$0xf]
        %v1555 = vld [vmem:[#allocation8 + $0xe4] sm:$0xf]
        %v1556 = vld [vmem:[#allocation8 + $0xe8] sm:$0xf]
        %v1557 = vld [vmem:[#allocation8 + $0xec] sm:$0xf]
        %v1558 = vld [vmem:[#allocation8 + $0xf0] sm:$0xf]
        %v1559 = vld [vmem:[#allocation8 + $0xf4] sm:$0xf]
        %v1560 = vld [vmem:[#allocation8 + $0xf8] sm:$0xf]
        %v1561 = vld [vmem:[#allocation8 + $0xfc] sm:$0xf]
        %v1626 = vunpack.c.l.b16 %v1498
        %v1627 = vunpack.c.l.b16 %v1499
        %v1628 = vunpack.c.l.b16 %v1500
        %v1629 = vunpack.c.l.b16 %v1501
        %v1630 = vunpack.c.l.b16 %v1502
        %v1631 = vunpack.c.l.b16 %v1503
        %v1632 = vunpack.c.l.b16 %v1504
        %v1633 = vunpack.c.l.b16 %v1505
        %v1634 = vunpack.c.l.b16 %v1506
        %v1635 = vunpack.c.l.b16 %v1507
        %v1636 = vunpack.c.l.b16 %v1508
        %v1637 = vunpack.c.l.b16 %v1509
        %v1638 = vunpack.c.l.b16 %v1510
        %v1639 = vunpack.c.l.b16 %v1511
        %v1640 = vunpack.c.l.b16 %v1512
        %v1641 = vunpack.c.l.b16 %v1513
        %v1642 = vunpack.c.l.b16 %v1514
        %v1643 = vunpack.c.l.b16 %v1515
        %v1644 = vunpack.c.l.b16 %v1516
        %v1645 = vunpack.c.l.b16 %v1517
        %v1646 = vunpack.c.l.b16 %v1518
        %v1647 = vunpack.c.l.b16 %v1519
        %v1648 = vunpack.c.l.b16 %v1520
        %v1649 = vunpack.c.l.b16 %v1521
        %v1650 = vunpack.c.l.b16 %v1522
        %v1651 = vunpack.c.l.b16 %v1523
        %v1652 = vunpack.c.l.b16 %v1524
        %v1653 = vunpack.c.l.b16 %v1525
        %v1654 = vunpack.c.l.b16 %v1526
        %v1655 = vunpack.c.l.b16 %v1527
        %v1656 = vunpack.c.l.b16 %v1528
        %v1657 = vunpack.c.l.b16 %v1529
        %v1658 = vunpack.c.l.b16 %v1530
        %v1659 = vunpack.c.l.b16 %v1531
        %v1660 = vunpack.c.l.b16 %v1532
        %v1661 = vunpack.c.l.b16 %v1533
        %v1662 = vunpack.c.l.b16 %v1534
        %v1663 = vunpack.c.l.b16 %v1535
        %v1664 = vunpack.c.l.b16 %v1536
        %v1665 = vunpack.c.l.b16 %v1537
        %v1666 = vunpack.c.l.b16 %v1538
        %v1667 = vunpack.c.l.b16 %v1539
        %v1668 = vunpack.c.l.b16 %v1540
        %v1669 = vunpack.c.l.b16 %v1541
        %v1670 = vunpack.c.l.b16 %v1542
        %v1671 = vunpack.c.l.b16 %v1543
        %v1672 = vunpack.c.l.b16 %v1544
        %v1673 = vunpack.c.l.b16 %v1545
        %v1674 = vunpack.c.l.b16 %v1546
        %v1675 = vunpack.c.l.b16 %v1547
        %v1676 = vunpack.c.l.b16 %v1548
        %v1677 = vunpack.c.l.b16 %v1549
        %v1678 = vunpack.c.l.b16 %v1550
        %v1679 = vunpack.c.l.b16 %v1551
        %v1680 = vunpack.c.l.b16 %v1552
        %v1681 = vunpack.c.l.b16 %v1553
        %v1682 = vunpack.c.l.b16 %v1554
        %v1683 = vunpack.c.l.b16 %v1555
        %v1684 = vunpack.c.l.b16 %v1556
        %v1685 = vunpack.c.l.b16 %v1557
        %v1686 = vunpack.c.l.b16 %v1558
        %v1687 = vunpack.c.l.b16 %v1559
        %v1688 = vunpack.c.l.b16 %v1560
        %v1689 = vunpack.c.l.b16 %v1561
        %v1690 = vpack.c.b16 %v1627, %v1626
        %v1691 = vpack.c.b16 %v1629, %v1628
        %v1692 = vpack.c.b16 %v1631, %v1630
        %v1693 = vpack.c.b16 %v1633, %v1632
        %v1694 = vpack.c.b16 %v1635, %v1634
        %v1695 = vpack.c.b16 %v1637, %v1636
        %v1696 = vpack.c.b16 %v1639, %v1638
        %v1697 = vpack.c.b16 %v1641, %v1640
        %v1698 = vpack.c.b16 %v1643, %v1642
        %v1699 = vpack.c.b16 %v1645, %v1644
        %v1700 = vpack.c.b16 %v1647, %v1646
        %v1701 = vpack.c.b16 %v1649, %v1648
        %v1702 = vpack.c.b16 %v1651, %v1650
        %v1703 = vpack.c.b16 %v1653, %v1652
        %v1704 = vpack.c.b16 %v1655, %v1654
        %v1705 = vpack.c.b16 %v1657, %v1656
        %v1706 = vpack.c.b16 %v1659, %v1658
        %v1707 = vpack.c.b16 %v1661, %v1660
        %v1708 = vpack.c.b16 %v1663, %v1662
        %v1709 = vpack.c.b16 %v1665, %v1664
        %v1710 = vpack.c.b16 %v1667, %v1666
        %v1711 = vpack.c.b16 %v1669, %v1668
        %v1712 = vpack.c.b16 %v1671, %v1670
        %v1713 = vpack.c.b16 %v1673, %v1672
        %v1714 = vpack.c.b16 %v1675, %v1674
        %v1715 = vpack.c.b16 %v1677, %v1676
        %v1716 = vpack.c.b16 %v1679, %v1678
        %v1717 = vpack.c.b16 %v1681, %v1680
        %v1718 = vpack.c.b16 %v1683, %v1682
        %v1719 = vpack.c.b16 %v1685, %v1684
        %v1720 = vpack.c.b16 %v1687, %v1686
        %v1721 = vpack.c.b16 %v1689, %v1688
        %1754 = vmatprep.subr.bf16.mxu0 0
        %1755 = vmatpush1.bf16.msra.mxu0 %v1690
        %1756 = vmatprep.subr.bf16.mxu0 0
        %1757 = vmatpush1.bf16.msra.mxu0 %v1691
        %1758 = vmatprep.subr.bf16.mxu0 0
        %1759 = vmatpush1.bf16.msra.mxu0 %v1692
        %1760 = vmatprep.subr.bf16.mxu0 0
        %1761 = vmatpush1.bf16.msra.mxu0 %v1693
        %1762 = vmatprep.subr.bf16.mxu0 0
        %1763 = vmatpush1.bf16.msra.mxu0 %v1694
        %1764 = vmatprep.subr.bf16.mxu0 0
        %1765 = vmatpush1.bf16.msra.mxu0 %v1695
        %1766 = vmatprep.subr.bf16.mxu0 0
        %1767 = vmatpush1.bf16.msra.mxu0 %v1696
        %1768 = vmatprep.subr.bf16.mxu0 0
        %1769 = vmatpush1.bf16.msra.mxu0 %v1697
        %1770 = vmatprep.subr.bf16.mxu0 0
        %1771 = vmatpush1.bf16.msra.mxu0 %v1698
        %1772 = vmatprep.subr.bf16.mxu0 0
        %1773 = vmatpush1.bf16.msra.mxu0 %v1699
        %1774 = vmatprep.subr.bf16.mxu0 0
        %1775 = vmatpush1.bf16.msra.mxu0 %v1700
        %1776 = vmatprep.subr.bf16.mxu0 0
        %1777 = vmatpush1.bf16.msra.mxu0 %v1701
        %1778 = vmatprep.subr.bf16.mxu0 0
        %1779 = vmatpush1.bf16.msra.mxu0 %v1702
        %1780 = vmatprep.subr.bf16.mxu0 0
        %1781 = vmatpush1.bf16.msra.mxu0 %v1703
        %1782 = vmatprep.subr.bf16.mxu0 0
        %1783 = vmatpush1.bf16.msra.mxu0 %v1704
        %1784 = vmatprep.subr.bf16.mxu0 0
        %1785 = vmatpush1.bf16.msra.mxu0 %v1705
        %1786 = vmatprep.mubr.bf16.mxu0 %v1491
        %1787 = vmatmul.mubr.bf16.gmra.mrb[0].mxu0 %v1490
        %v1788 = vpop.f32.mrb[0].mxu0
        %v1789 = vadd.f32 0.0, %v1788
        %v1790 = vpop.f32.mrb[0].mxu0
        %v1791 = vpop.f32.mrb[0].mxu0
        %v1792 = vadd.f32 0.0, %v1791
        %v1793 = vpop.f32.mrb[0].mxu0
        %1794 = vmatprep.mubr.bf16.mxu0 %v1495
        %1795 = vmatmul.mubr.bf16.gmra.mrb[0].mxu0 %v1494
        %v1796 = vpop.f32.mrb[0].mxu0
        %v1797 = vadd.f32 0.0, %v1796
        %v1798 = vpop.f32.mrb[0].mxu0
        %v1799 = vpop.f32.mrb[0].mxu0
        %v1800 = vadd.f32 0.0, %v1799
        %v1801 = vpop.f32.mrb[0].mxu0
        %1802 = vdwg.mxu0
        %1803 = vmatprep.subr.bf16.mxu0 0
        %1804 = vmatpush1.bf16.msra.mxu0 %v1706
        %1805 = vmatprep.subr.bf16.mxu0 0
        %1806 = vmatpush1.bf16.msra.mxu0 %v1707
        %1807 = vmatprep.subr.bf16.mxu0 0
        %1808 = vmatpush1.bf16.msra.mxu0 %v1708
        %1809 = vmatprep.subr.bf16.mxu0 0
        %1810 = vmatpush1.bf16.msra.mxu0 %v1709
        %1811 = vmatprep.subr.bf16.mxu0 0
        %1812 = vmatpush1.bf16.msra.mxu0 %v1710
        %1813 = vmatprep.subr.bf16.mxu0 0
        %1814 = vmatpush1.bf16.msra.mxu0 %v1711
        %1815 = vmatprep.subr.bf16.mxu0 0
        %1816 = vmatpush1.bf16.msra.mxu0 %v1712
        %1817 = vmatprep.subr.bf16.mxu0 0
        %1818 = vmatpush1.bf16.msra.mxu0 %v1713
        %1819 = vmatprep.subr.bf16.mxu0 0
        %1820 = vmatpush1.bf16.msra.mxu0 %v1714
        %1821 = vmatprep.subr.bf16.mxu0 0
        %1822 = vmatpush1.bf16.msra.mxu0 %v1715
        %1823 = vmatprep.subr.bf16.mxu0 0
        %1824 = vmatpush1.bf16.msra.mxu0 %v1716
        %1825 = vmatprep.subr.bf16.mxu0 0
        %1826 = vmatpush1.bf16.msra.mxu0 %v1717
        %1827 = vmatprep.subr.bf16.mxu0 0
        %1828 = vmatpush1.bf16.msra.mxu0 %v1718
        %1829 = vmatprep.subr.bf16.mxu0 0
        %1830 = vmatpush1.bf16.msra.mxu0 %v1719
        %1831 = vmatprep.subr.bf16.mxu0 0
        %1832 = vmatpush1.bf16.msra.mxu0 %v1720
        %1833 = vmatprep.subr.bf16.mxu0 0
        %1834 = vmatpush1.bf16.msra.mxu0 %v1721
        %1835 = vmatprep.mubr.bf16.mxu0 %v1493
        %1836 = vmatmul.mubr.bf16.gmra.mrb[0].mxu0 %v1492
        %v1837 = vpop.f32.mrb[0].mxu0
        %v1838 = vadd.f32 %v1789, %v1837
        %v1839 = vpop.f32.mrb[0].mxu0
        %v1840 = vpop.f32.mrb[0].mxu0
        %v1841 = vadd.f32 %v1792, %v1840
        %v1842 = vpop.f32.mrb[0].mxu0
        %1843 = vmatprep.mubr.bf16.mxu0 %v1497
        %1844 = vmatmul.mubr.bf16.gmra.mrb[0].mxu0 %v1496
        %v1845 = vpop.f32.mrb[0].mxu0
        %v1846 = vadd.f32 %v1797, %v1845
        %v1847 = vpop.f32.mrb[0].mxu0
        %v1848 = vpop.f32.mrb[0].mxu0
        %v1849 = vadd.f32 %v1800, %v1848
        %v1850 = vpop.f32.mrb[0].mxu0
        %1851 = vdwg.mxu0
        %v1852 = vld [vmem:[%s7] sm:$0x1]
        %v1854 = vlaneseq
        %v1855 = vshrl.u32 %v1854, 7
        %v1856 = vsub.s32 0, %v1855
        %v1857 = vrot.slane %v1852, %v1856
        %v1859 = vadd.f32 %v1838, %v1857
        %v1860 = vadd.f32 %v1841, %v1857
        %v1861 = vadd.f32 %v1846, %v1857
        %v1862 = vadd.f32 %v1849, %v1857
        %1863 = vst [vmem:[%s404] sm:$0xff] %v1859
        %1864 = vst [vmem:[%s404 + $0x8] sm:$0xff] %v1860
        %1865 = vst [vmem:[%s404 + $0x10] sm:$0xff] %v1861
        %1866 = vst [vmem:[%s404 + $0x18] sm:$0xff] %v1862
        %s1867 = sand.u32 %s218, 1
        %s1868 = scalar_lea.sflag [#allocation4], %s1867
        %s1869 = sand.u32 %s218, 1
        %s1870 = smul.addr %s1869, 32
        %s1871 = scalar_lea.vmem [#allocation10], %s1870
        // Predicated region
        $region69: #{tpu_custom_call.1} parent=51 // pred_check
          %p1872 = pneg %p228
        $region70: #{tpu_custom_call.1} parent=51 // pred_check_branch
          %1874 = sbr.rel (%p1872) target = $region72
        $region71: #{tpu_custom_call.1} parent=51 // pred_region
          %s1875 = smul.u32 2, %s27
          %s1877 = ssub.s32 512, 512
          %1878 = vsyncadd %s1868, %s1877
          %s1879 = smul.addr %s1875, 2
          %s1880 = smul.addr %s1879, 128
          %s1881 = scalar_lea.hbm %s8, %s1880
          %s1882 = sshll.u32 %s1871, 4
          %s1883 = int_to_ptr.vmem [resolvable:$true] %s1882
          %1888 = dma.vmem_to_hbm [thread:$0]  %s1883, 512, %s1881, %s1868, 128, 128, 8
        $region72: #{tpu_custom_call.1} parent=51 // pred_fallthru
          _
      $region52: #{tpu_custom_call.1} parent=5 // pred_fallthru
        _
      %p1889 = scmp.le.s32.totalorder 2, %s22
      // Predicated region
      $region73: #{tpu_custom_call.1} parent=5 // pred_check
        %p1890 = pneg %p1889
      $region74: #{tpu_custom_call.1} parent=5 // pred_check_branch
        %1892 = sbr.rel (%p1890) target = $region76
      $region75: #{tpu_custom_call.1} parent=5 // pred_region
        %s1893 = ssub.s32 %s22, 2
        // Predicated region
        $region77: #{tpu_custom_call.1} parent=75 // pred_check
          %p1894 = pneg %p234
        $region78: #{tpu_custom_call.1} parent=75 // pred_check_branch
          %1896 = sbr.rel (%p1894) target = $region80
        $region79: #{tpu_custom_call.1} parent=75 // pred_region
          %s1897 = sand.u32 %s219, 1
          %s1898 = scalar_lea.sflag [#allocation4], %s1897
          %s1899 = sand.u32 %s219, 1
          %s1900 = smul.addr %s1899, 32
          %s1901 = scalar_lea.vmem [#allocation10], %s1900
          %1902 = dma.done %s1898, 512
        $region80: #{tpu_custom_call.1} parent=75 // pred_fallthru
          _
      $region76: #{tpu_custom_call.1} parent=5 // pred_fallthru
        _
    $region6: #{tpu_custom_call.1} parent=1 // loop_footer
      %s26 = sadd.s32 1, %s22
    $region7: #{tpu_custom_call.1} parent=1 // loop_footer_branch
      %21 = sbr.rel target = $region3
    $region8: #{tpu_custom_call.1} parent=1 // loop_exit
      _
    %1903 = vsyncpa [#allocation3], 1
    %s1904 = scalar_lea.sflag [#allocation3], 1
    %1905 = vsyncpa %s1904, 1
    %1906 = vsyncpa [#allocation6], 1
    %1907 = vsyncpa [#allocation9], 1
    %1908 = vsyncpa [#allocation4], 1
    %s1909 = scalar_lea.sflag [#allocation4], 1
    %1910 = vsyncpa %s1909, 1

</llo_original>
